<compile_context>
chip_gen: v7x
topology: tpu7x:2x2x1
jax: 0.10.0
libtpu: 0.0.40
codegen_flags: <defaults>
</compile_context>

<pallas_src>
import math
from functools import partial

import jax
import jax.numpy as jnp
from jax.experimental import pallas as pl
from jax.experimental.pallas import tpu as pltpu

_VMEM_LIMIT = 48 * 1024 * 1024  # fits v7x's 64 MiB physical VMEM with headroom


def _cdiv(a, b):
    return -(-a // b)


def _round_up(x, m):
    return ((x + m - 1) // m) * m


# ----------------------------------------------------------------------------
# Shared activation epilogue
# ----------------------------------------------------------------------------
def _apply_act(acc, act, alpha_ref):
    if act == "prelu":
        alpha = alpha_ref[0, 0]
        return jnp.where(acc >= 0.0, acc, alpha * acc)
    if act == "sigmoid":
        return 1.0 / (1.0 + jnp.exp(-acc))
    if act == "clip01":
        return jnp.clip(acc, 0.0, 1.0)
    return acc


# ----------------------------------------------------------------------------
# Pallas kernel 1: fused (bf16 x bf16 -> f32) matmul + bias (+add) + activation
# Used for stride-2 3x3 convs (JAX im2col) and 1x1 convs.
# ----------------------------------------------------------------------------
def _mm_bias_act_kernel(alpha_ref, *refs, act, has_add):
    if has_add:
        a_ref, w_ref, b_ref, add_ref, o_ref = refs
    else:
        a_ref, w_ref, b_ref, o_ref = refs
    acc = jnp.dot(a_ref[...], w_ref[...], preferred_element_type=jnp.float32)
    acc = acc + b_ref[...]
    if has_add:
        acc = acc + add_ref[...].astype(jnp.float32)
    acc = _apply_act(acc, act, alpha_ref)
    o_ref[...] = acc.astype(o_ref.dtype)


def _choose_tm(M):
    if M >= 1024:
        return 512
    if M >= 16:                       # keep >=2 grid steps (v7x 2 TensorCores)
        return _round_up(_cdiv(M, 2), 8)
    return M


def matmul_bias_act(a, w, b, *, alpha=None, act="none", add=None,
                    out_dtype=jnp.bfloat16):
    """a: (M, K), w: (K, N) bf16, b: (N,) f32 -> (M, N) out_dtype."""
    M, K = a.shape
    N = w.shape[1]
    tm = _choose_tm(M)
    grid_m = _cdiv(M, tm)

    a_b = a.astype(jnp.bfloat16)
    b_p = b.reshape(1, N).astype(jnp.float32)
    alpha_p = jnp.asarray(0.0 if alpha is None else alpha,
                          jnp.float32).reshape(1, 1)

    in_specs = [
        pl.BlockSpec((1, 1), lambda i: (0, 0),
                     memory_space=pltpu.MemorySpace.SMEM),
        pl.BlockSpec((tm, K), lambda i: (i, 0)),
        pl.BlockSpec((K, N), lambda i: (0, 0)),
        pl.BlockSpec((1, N), lambda i: (0, 0)),
    ]
    args = [alpha_p, a_b, w.astype(jnp.bfloat16), b_p]
    if add is not None:
        in_specs.append(pl.BlockSpec((tm, N), lambda i: (i, 0)))
        args.append(add)

    out = pl.pallas_call(
        partial(_mm_bias_act_kernel, act=act, has_add=add is not None),
        out_shape=jax.ShapeDtypeStruct((M, N), out_dtype),
        grid_spec=pltpu.PrefetchScalarGridSpec(
            num_scalar_prefetch=0,
            grid=(grid_m,),
            in_specs=in_specs,
            out_specs=pl.BlockSpec((tm, N), lambda i: (i, 0)),
        ),
        compiler_params=pltpu.CompilerParams(
            dimension_semantics=("parallel",),
            vmem_limit_bytes=_VMEM_LIMIT),
    )(*args)
    return out


# ----------------------------------------------------------------------------
# Pallas kernel 2: fused 3x3 stride-1 conv (in-kernel im2col, multi-input).
# Inputs are pre-padded (halo=1) and row-tiled in JAX; the kernel does
# 3 tap matmuls per input (K = 3*Cin) accumulating in f32, then bias + act.
# ----------------------------------------------------------------------------
def _conv3x3_kernel(alpha_ref, *refs, n_in, act, tr, wo, n_out):
    x_refs = refs[:n_in]
    w_refs = refs[n_in:2 * n_in]
    b_ref = refs[2 * n_in]
    o_ref = refs[2 * n_in + 1]

    acc = jnp.zeros((tr * wo, n_out), jnp.float32)
    for idx in range(n_in):
        x_ref = x_refs[idx]                      # (tr+2, wo+2, Ci) bf16
        ci = x_ref.shape[-1]
        for di in range(3):
            # build (tr, wo, 3*Ci) slab for kernel row di from shifted windows
            taps = [x_ref[pl.ds(di, tr), pl.ds(dj, wo), :] for dj in range(3)]
            a = jnp.concatenate(taps, axis=-1)
            acc = acc + jnp.dot(a.reshape(tr * wo, 3 * ci),
                                w_refs[idx][di],
                                preferred_element_type=jnp.float32)
    acc = acc + b_ref[...]
    acc = _apply_act(acc, act, alpha_ref)
    o_ref[...] = acc.reshape(tr, wo, n_out).astype(o_ref.dtype)


def _conv_tiling(H, W, target_rows=512):
    Wpad = _round_up(W, 8)                 # lane/sublane friendly width
    tr0 = max(1, min(H, target_rows // max(Wpad, 1)))
    nt = _cdiv(H, tr0)
    tr = _cdiv(H, nt)
    return tr, nt, Wpad


def _prep_conv_input(x, tr, nt, Wpad):
    """(B,H,W,C) -> bf16 (B, nt, tr+2, Wpad+2, C) row-window stack with halo."""
    B, H, W, C = x.shape
    Hpad = nt * tr
    xp = jnp.pad(x.astype(jnp.bfloat16),
                 ((0, 0), (1, 1 + Hpad - H), (1, 1 + Wpad - W), (0, 0)))
    if nt == 1:
        return xp[:, None]
    wins = [xp[:, t * tr: t * tr + tr + 2] for t in range(nt)]
    return jnp.stack(wins, axis=1)


def conv3x3_prepped(xps, ws, b, *, H, W, tr, nt, Wpad, act="none", alpha=None,
                    out_dtype=jnp.bfloat16):
    B = xps[0].shape[0]
    n_in = len(xps)
    N = ws[0].shape[-1]
    Wp = Wpad + 2
    alpha_p = jnp.asarray(0.0 if alpha is None else alpha,
                          jnp.float32).reshape(1, 1)

    in_specs = [pl.BlockSpec((1, 1), lambda bb, tt: (0, 0),
                             memory_space=pltpu.MemorySpace.SMEM)]
    args = [alpha_p]
    for xp in xps:
        ci = xp.shape[-1]
        in_specs.append(pl.BlockSpec((None, None, tr + 2, Wp, ci),
                                     lambda bb, tt: (bb, tt, 0, 0, 0)))
        args.append(xp)
    for w in ws:                                  # (3, 3*Ci, N), resident
        in_specs.append(pl.BlockSpec(w.shape, lambda bb, tt: (0, 0, 0)))
        args.append(w)
    in_specs.append(pl.BlockSpec((1, N), lambda bb, tt: (0, 0)))
    args.append(b.reshape(1, N).astype(jnp.float32))

    out = pl.pallas_call(
        partial(_conv3x3_kernel, n_in=n_in, act=act, tr=tr, wo=Wpad, n_out=N),
        out_shape=jax.ShapeDtypeStruct((B, nt * tr, Wpad, N), out_dtype),
        grid_spec=pltpu.PrefetchScalarGridSpec(
            num_scalar_prefetch=0,
            grid=(B, nt),
            in_specs=in_specs,
            out_specs=pl.BlockSpec((None, tr, Wpad, N),
                                   lambda bb, tt: (bb, tt, 0, 0)),
        ),
        compiler_params=pltpu.CompilerParams(
            dimension_semantics=("parallel", "parallel"),
            vmem_limit_bytes=_VMEM_LIMIT),
    )(*args)
    if nt * tr != H or Wpad != W:
        out = out[:, :H, :W, :]
    return out


def conv3x3(xs, ws, b, *, act="none", alpha=None, out_dtype=jnp.bfloat16):
    """3x3 stride-1 pad-1 conv of concat(xs) with per-input K-split weights."""
    H, W = xs[0].shape[1], xs[0].shape[2]
    tr, nt, Wpad = _conv_tiling(H, W)
    xps = [_prep_conv_input(x, tr, nt, Wpad) for x in xs]
    return conv3x3_prepped(xps, ws, b, H=H, W=W, tr=tr, nt=nt, Wpad=Wpad,
                           act=act, alpha=alpha, out_dtype=out_dtype)


# ----------------------------------------------------------------------------
# stride-2 3x3 conv via bf16 JAX im2col + fused matmul kernel
# ----------------------------------------------------------------------------
def _extract_patches(x, kh, kw, stride, pads):
    (pt, pb), (pl_, pr) = pads
    B, H, W, C = x.shape
    xp = jnp.pad(x, ((0, 0), (pt, pb), (pl_, pr), (0, 0)))
    Ho = (H + pt + pb - kh) // stride + 1
    Wo = (W + pl_ + pr - kw) // stride + 1
    cols = []
    for i in range(kh):
        for j in range(kw):
            cols.append(xp[:, i:i + stride * (Ho - 1) + 1:stride,
                           j:j + stride * (Wo - 1) + 1:stride, :])
    patches = cols[0] if len(cols) == 1 else jnp.concatenate(cols, axis=-1)
    return patches, Ho, Wo


def conv_s2(x, pkc, *, act="none", alpha=None, add=None,
            out_dtype=jnp.bfloat16):
    """3x3 stride-2 pad-1 conv.  pkc: {"w": (9*Cin, N) bf16, "b": (N,) f32}."""
    B = x.shape[0]
    patches, Ho, Wo = _extract_patches(x.astype(jnp.bfloat16), 3, 3, 2,
                                       ((1, 1), (1, 1)))
    a = patches.reshape(B * Ho * Wo, -1)
    add2 = None if add is None else add.reshape(B * Ho * Wo, -1)
    out = matmul_bias_act(a, pkc["w"], pkc["b"], alpha=alpha, act=act,
                          add=add2, out_dtype=out_dtype)
    return out.reshape(B, Ho, Wo, -1)


# ----------------------------------------------------------------------------
# ConvTranspose2d(4, stride=2, padding=1): phase-decomposed -> one 3x3 conv
# ----------------------------------------------------------------------------
def conv_transpose2d(x, pk, out_dtype=jnp.bfloat16):
    B, H, W, _ = x.shape
    cout = pk["b"].shape[0] // 4
    y = conv3x3([x], pk["ws"], pk["b"], act="none", out_dtype=out_dtype)
    y = y.reshape(B, H, W, 2, 2, cout)
    # TODO(synk): interleave the 4 phases with strided stores inside the kernel.
    y = jnp.transpose(y, (0, 1, 3, 2, 4, 5)).reshape(B, 2 * H, 2 * W, cout)
    return y


# ----------------------------------------------------------------------------
# grid_sample bilinear warp (align_corners=False, zeros padding)
# TODO(synk): data-dependent gather kept in plain JAX (no clean Pallas path).
# ----------------------------------------------------------------------------
def warp(image, flow):
    B, H, W, C = image.shape
    image = image.astype(jnp.bfloat16)          # halve the gather traffic
    xx = jnp.arange(W, dtype=jnp.float32).reshape(1, 1, W)
    yy = jnp.arange(H, dtype=jnp.float32).reshape(1, H, 1)
    vx = xx + flow[..., 0].astype(jnp.float32)
    vy = yy + flow[..., 1].astype(jnp.float32)
    gx = 2.0 * vx / max(W - 1, 1) - 1.0
    gy = 2.0 * vy / max(H - 1, 1) - 1.0
    ix = ((gx + 1.0) * W - 1.0) * 0.5
    iy = ((gy + 1.0) * H - 1.0) * 0.5
    x0 = jnp.floor(ix)
    y0 = jnp.floor(iy)
    x1, y1 = x0 + 1.0, y0 + 1.0
    wx1, wy1 = ix - x0, iy - y0
    wx0, wy0 = 1.0 - wx1, 1.0 - wy1
    img_flat = image.reshape(B, H * W, C)

    def sample(xi, yi):
        inb = (xi >= 0) & (xi <= W - 1) & (yi >= 0) & (yi <= H - 1)
        xc = jnp.clip(xi, 0, W - 1).astype(jnp.int32)
        yc = jnp.clip(yi, 0, H - 1).astype(jnp.int32)
        flat = (yc * W + xc).reshape(B, H * W)
        vals = jax.vmap(lambda img, idx: jnp.take(img, idx, axis=0))(
            img_flat, flat).reshape(B, H, W, C)
        return vals * inb[..., None].astype(image.dtype)

    out = (sample(x0, y0) * (wx0 * wy0)[..., None]
           + sample(x1, y0) * (wx1 * wy0)[..., None]
           + sample(x0, y1) * (wx0 * wy1)[..., None]
           + sample(x1, y1) * (wx1 * wy1)[..., None])
    return out.astype(jnp.bfloat16)


# ----------------------------------------------------------------------------
# One-time weight packing (hoisted out of the jitted forward)
# ----------------------------------------------------------------------------
def _fold3(w_t):
    """(3,3,Ci,N) -> (3, 3*Ci, N) bf16 (kw-major, then cin)."""
    return w_t.reshape(3, 3 * w_t.shape[2], w_t.shape[3]).astype(jnp.bfloat16)


def _pack_w3x3(w, split_sizes=None):
    w_t = jnp.transpose(w, (2, 3, 1, 0))        # (3,3,Cin,Cout)
    if split_sizes is None:
        return [_fold3(w_t)]
    chunks, off = [], 0
    for s in split_sizes:
        chunks.append(_fold3(w_t[:, :, off:off + s, :]))
        off += s
    assert off == w_t.shape[2]
    return chunks


def _pack_conv3x3(p, split_sizes=None):
    return {"ws": _pack_w3x3(p["w"], split_sizes),
            "b": p["b"].astype(jnp.float32)}


def _pack_mm_conv(p):
    cout, cin, kh, kw = p["w"].shape
    wf = jnp.transpose(p["w"], (2, 3, 1, 0)).reshape(kh * kw * cin, cout)
    return {"w": wf.astype(jnp.bfloat16), "b": p["b"].astype(jnp.float32)}


def _pack_convT(p, scale=1.0):
    """ConvTranspose2d(4,2,1) -> phase-decomposed 3x3 conv weight."""
    w_t, b = p["w"], p["b"]                     # (Cin, Cout, 4, 4)
    cin, cout = w_t.shape[0], w_t.shape[1]
    zero = jnp.zeros((cin, cout), w_t.dtype)
    rows = []
    for di in range(3):
        cols_dj = []
        for dj in range(3):
            cols = []
            for ph in range(2):
                for qw in range(2):
                    if 0 <= di - ph <= 1 and 0 <= dj - qw <= 1:
                        cols.append(w_t[:, :, 3 + ph - 2 * di, 3 + qw - 2 * dj])
                    else:
                        cols.append(zero)
            cols_dj.append(jnp.concatenate(cols, axis=1))   # (Cin, 4*Cout)
        rows.append(jnp.stack(cols_dj, axis=0))             # (3, Cin, 4*Cout)
    w9 = jnp.stack(rows, axis=0) * scale                     # (3,3,Cin,4*Cout)
    return {"ws": [_fold3(w9)],
            "b": (jnp.tile(b, 4) * scale).astype(jnp.float32)}


# ----------------------------------------------------------------------------
# Parameter initialization (deterministic, raw PyTorch layouts)
# ----------------------------------------------------------------------------
def conv_init(key, cout, cin, k):
    kw_, kb = jax.random.split(key)
    fan = cin * k * k
    return {"w": jax.random.normal(kw_, (cout, cin, k, k), jnp.float32)
            / math.sqrt(fan),
            "b": jax.random.normal(kb, (cout,), jnp.float32) * 0.01}


def convT_init(key, cin, cout, k):
    kw_, kb = jax.random.split(key)
    fan = cout * k * k
    return {"w": jax.random.normal(kw_, (cin, cout, k, k), jnp.float32)
            / math.sqrt(fan),
            "b": jax.random.normal(kb, (cout,), jnp.float32) * 0.01}


def init_flow_warp(key, in_ch, level):
    ic = 2 * in_ch + (2 if level != 4 else 0)
    ks = jax.random.split(key, 8)
    p = {}
    c = ic
    p["cnn_1"] = conv_init(ks[0], 128, c, 3); c += 128
    p["cnn_2"] = conv_init(ks[1], 128, c, 3); c += 128
    p["cnn_3"] = conv_init(ks[2], 96, c, 3);  c += 96
    p["cnn_4"] = conv_init(ks[3], 64, c, 3);  c += 64
    p["cnn_5"] = conv_init(ks[4], 32, c, 3);  c += 32
    p["cnn_out"] = conv_init(ks[5], 2, c, 3)
    p["cnn_upsample"] = convT_init(ks[6], 2, 2, 4)
    return p


def init_attention(key, g_f, x_f, f):
    ks = jax.random.split(key, 4)
    return {"gcnn": conv_init(ks[0], f, g_f, 3),
            "xcnn": conv_init(ks[1], f, x_f, 3),
            "ocnn": conv_init(ks[2], 1, f, 1),
            "upsample": convT_init(ks[3], 1, 1, 4),
            "alpha": jnp.asarray(0.25, jnp.float32)}


def init_fbnet(key, c_in, filters=(32, 48, 64, 64)):
    ks = jax.random.split(key, 32)
    p = {}
    p["cnn_r1_1"] = conv_init(ks[0], filters[0], c_in, 3)
    p["cnn_r1_2"] = conv_init(ks[1], filters[0], filters[0], 3)
    p["cnn_r2_1"] = conv_init(ks[2], filters[1], filters[0], 3)
    p["cnn_r2_2"] = conv_init(ks[3], filters[1], filters[1], 3)
    p["cnn_r3_1"] = conv_init(ks[4], filters[2], filters[1], 3)
    p["cnn_r3_2"] = conv_init(ks[5], filters[2], filters[2], 3)
    p["cnn_r4_1"] = conv_init(ks[6], filters[3], filters[2], 3)
    for name in ["a_r1_1", "a_r1_2", "a_r2_1", "a_r2_2", "a_r3_1", "a_r3_2",
                 "a_r4_1", "a_r3_3", "a_r2_3", "a_r1_3"]:
        p[name] = jnp.asarray(0.25, jnp.float32)
    p["flow_r1"] = init_flow_warp(ks[7], filters[0], 1)
    p["flow_r2"] = init_flow_warp(ks[8], filters[1], 2)
    p["flow_r3"] = init_flow_warp(ks[9], filters[2], 3)
    p["flow_r4"] = init_flow_warp(ks[10], filters[3], 4)
    p["att_r1"] = init_attention(ks[11], filters[1], filters[0], filters[0])
    p["att_r2"] = init_attention(ks[12], filters[2], filters[1], filters[1])
    p["att_r3"] = init_attention(ks[13], filters[3], filters[2], filters[2])
    p["cnn_r4_2"] = convT_init(ks[14], filters[3], filters[2], 4)
    p["cnn_r3_3"] = conv_init(ks[15], filters[2], 2 * filters[2], 3)
    p["cnn_r3_4"] = convT_init(ks[16], filters[2], filters[1], 4)
    p["cnn_r2_3"] = conv_init(ks[17], filters[1], 2 * filters[1], 3)
    p["cnn_r2_4"] = convT_init(ks[18], filters[1], filters[0], 4)
    p["cnn_r1_3"] = conv_init(ks[19], filters[0], 2 * filters[0], 3)
    p["cnn_r1_4"] = conv_init(ks[20], 3, filters[0], 3)
    return p


def pack_fbnet_params(p, filters=(32, 48, 64, 64)):
    pk = {}
    pk["cnn_r1_1"] = _pack_conv3x3(p["cnn_r1_1"])
    pk["cnn_r1_2"] = _pack_mm_conv(p["cnn_r1_2"])
    pk["cnn_r2_1"] = _pack_conv3x3(p["cnn_r2_1"])
    pk["cnn_r2_2"] = _pack_mm_conv(p["cnn_r2_2"])
    pk["cnn_r3_1"] = _pack_conv3x3(p["cnn_r3_1"])
    pk["cnn_r3_2"] = _pack_mm_conv(p["cnn_r3_2"])
    pk["cnn_r4_1"] = _pack_conv3x3(p["cnn_r4_1"])

    fcounts = [128, 128, 96, 64, 32]
    for name, in_ch, lvl in [("flow_r1", filters[0], 1),
                             ("flow_r2", filters[1], 2),
                             ("flow_r3", filters[2], 3),
                             ("flow_r4", filters[3], 4)]:
        fp = p[name]
        split = [in_ch, in_ch] + ([2] if lvl != 4 else [])
        fk = {}
        for idx, cname in enumerate(["cnn_1", "cnn_2", "cnn_3", "cnn_4",
                                     "cnn_5", "cnn_out"]):
            fk[cname] = _pack_conv3x3(fp[cname], split_sizes=list(split))
            if idx < 5:
                split = [fcounts[idx]] + split
        fk["cnn_upsample"] = _pack_convT(fp["cnn_upsample"], scale=2.0)
        pk[name] = fk

    for name in ["att_r1", "att_r2", "att_r3"]:
        ap = p[name]
        pk[name] = {"gcnn": _pack_conv3x3(ap["gcnn"]),
                    "xcnn": _pack_mm_conv(ap["xcnn"]),
                    "ocnn": _pack_mm_conv(ap["ocnn"]),
                    "upsample": _pack_convT(ap["upsample"]),
                    "alpha": ap["alpha"]}

    pk["cnn_r4_2"] = _pack_convT(p["cnn_r4_2"])
    pk["cnn_r3_3"] = _pack_conv3x3(p["cnn_r3_3"], [filters[2], filters[2]])
    pk["cnn_r3_4"] = _pack_convT(p["cnn_r3_4"])
    pk["cnn_r2_3"] = _pack_conv3x3(p["cnn_r2_3"], [filters[1], filters[1]])
    pk["cnn_r2_4"] = _pack_convT(p["cnn_r2_4"])
    pk["cnn_r1_3"] = _pack_conv3x3(p["cnn_r1_3"], [filters[0], filters[0]])
    pk["cnn_r1_4"] = _pack_conv3x3(p["cnn_r1_4"])
    pk["alphas"] = {k: p[k] for k in
                    ["a_r1_1", "a_r1_2", "a_r2_1", "a_r2_2", "a_r3_1",
                     "a_r3_2", "a_r4_1", "a_r3_3", "a_r2_3", "a_r1_3"]}
    return pk


# ----------------------------------------------------------------------------
# Module forward passes (packed params)
# ----------------------------------------------------------------------------
def flow_feature_warp(pk, input_1, input_2, upsampled_flow, level):
    if level != 4:
        xw = warp(input_2, upsampled_flow)
        feats = [input_1, xw, upsampled_flow]
    else:
        feats = [input_1, input_2]
    H, W = input_1.shape[1], input_1.shape[2]
    tr, nt, Wpad = _conv_tiling(H, W)
    prepped = [_prep_conv_input(f, tr, nt, Wpad) for f in feats]
    for name in ["cnn_1", "cnn_2", "cnn_3", "cnn_4", "cnn_5"]:
        c = conv3x3_prepped(prepped, pk[name]["ws"], pk[name]["b"],
                            H=H, W=W, tr=tr, nt=nt, Wpad=Wpad,
                            act="none", out_dtype=jnp.bfloat16)
        prepped = [_prep_conv_input(c, tr, nt, Wpad)] + prepped
    flow = conv3x3_prepped(prepped, pk["cnn_out"]["ws"], pk["cnn_out"]["b"],
                           H=H, W=W, tr=tr, nt=nt, Wpad=Wpad,
                           act="none", out_dtype=jnp.float32)
    input_2_warped = warp(input_2, flow * 0.5)
    # *2 folded into the packed upsample weights/bias
    flow_up = conv_transpose2d(flow, pk["cnn_upsample"], out_dtype=jnp.float32)
    return input_2_warped, flow_up


def attention_gate(pk, g, x):
    gc = conv3x3([g], pk["gcnn"]["ws"], pk["gcnn"]["b"], act="none",
                 out_dtype=jnp.bfloat16)
    # fused: prelu(xcnn(x) + gcnn(g))
    xg = conv_s2(x, pk["xcnn"], act="prelu", alpha=pk["alpha"], add=gc,
                 out_dtype=jnp.bfloat16)
    B, Hg, Wg, F = xg.shape
    s = matmul_bias_act(xg.reshape(B * Hg * Wg, F), pk["ocnn"]["w"],
                        pk["ocnn"]["b"], act="sigmoid",
                        out_dtype=jnp.bfloat16).reshape(B, Hg, Wg, 1)
    up = conv_transpose2d(s, pk["upsample"], out_dtype=jnp.bfloat16)
    return x.astype(jnp.bfloat16) * up


def encoder(pk, x):
    a = pk["alphas"]
    r1_1 = conv3x3([x], pk["cnn_r1_1"]["ws"], pk["cnn_r1_1"]["b"],
                   act="prelu", alpha=a["a_r1_1"])
    r1_2 = conv_s2(r1_1, pk["cnn_r1_2"], act="prelu", alpha=a["a_r1_2"])
    r2_1 = conv3x3([r1_2], pk["cnn_r2_1"]["ws"], pk["cnn_r2_1"]["b"],
                   act="prelu", alpha=a["a_r2_1"])
    r2_2 = conv_s2(r2_1, pk["cnn_r2_2"], act="prelu", alpha=a["a_r2_2"])
    r3_1 = conv3x3([r2_2], pk["cnn_r3_1"]["ws"], pk["cnn_r3_1"]["b"],
                   act="prelu", alpha=a["a_r3_1"])
    r3_2 = conv_s2(r3_1, pk["cnn_r3_2"], act="prelu", alpha=a["a_r3_2"])
    r4_1 = conv3x3([r3_2], pk["cnn_r4_1"]["ws"], pk["cnn_r4_1"]["b"],
                   act="prelu", alpha=a["a_r4_1"])
    return r1_1, r2_1, r3_1, r4_1


def fbnet_forward(pk, left_nchw, right_nchw):
    left = jnp.transpose(left_nchw, (0, 2, 3, 1))
    right = jnp.transpose(right_nchw, (0, 2, 3, 1))
    B = left.shape[0]

    # shared encoder weights: push left & right through each conv together
    lr = jnp.concatenate([left, right], axis=0)
    f1, f2, f3, f4 = encoder(pk, lr)
    l1, r1 = f1[:B], f1[B:]
    l2, r2 = f2[:B], f2[B:]
    l3, r3 = f3[:B], f3[B:]
    l4, r4 = f4[:B], f4[B:]

    warp_r4, flow_r4 = flow_feature_warp(pk["flow_r4"], r4, l4, None, 4)
    warp_r3, flow_r3 = flow_feature_warp(pk["flow_r3"], r3, l3, flow_r4, 3)
    warp_r2, flow_r2 = flow_feature_warp(pk["flow_r2"], r2, l2, flow_r3, 2)
    warp_r1, flow_r1 = flow_feature_warp(pk["flow_r1"], r1, l1, flow_r2, 1)

    a = pk["alphas"]
    up_r4_2 = conv_transpose2d(warp_r4, pk["cnn_r4_2"])
    att_r3 = attention_gate(pk["att_r3"], warp_r4, warp_r3)
    c_r3_3 = conv3x3([att_r3, up_r4_2], pk["cnn_r3_3"]["ws"],
                     pk["cnn_r3_3"]["b"], act="prelu", alpha=a["a_r3_3"])
    c_r3_4 = conv_transpose2d(c_r3_3, pk["cnn_r3_4"])

    att_r2 = attention_gate(pk["att_r2"], c_r3_3, warp_r2)
    c_r2_3 = conv3x3([att_r2, c_r3_4], pk["cnn_r2_3"]["ws"],
                     pk["cnn_r2_3"]["b"], act="prelu", alpha=a["a_r2_3"])
    c_r2_4 = conv_transpose2d(c_r2_3, pk["cnn_r2_4"])

    att_r1 = attention_gate(pk["att_r1"], c_r2_3, warp_r1)
    c_r1_3 = conv3x3([att_r1, c_r2_4], pk["cnn_r1_3"]["ws"],
                     pk["cnn_r1_3"]["b"], act="prelu", alpha=a["a_r1_3"])
    out = conv3x3([c_r1_3], pk["cnn_r1_4"]["ws"], pk["cnn_r1_4"]["b"],
                  act="clip01", out_dtype=jnp.float32)       # TReLU fused
    return jnp.transpose(out, (0, 3, 1, 2))                  # back to NCHW


# ----------------------------------------------------------------------------
# Reference helpers for self-tests (bf16-rounded inputs, f32 accumulation)
# ----------------------------------------------------------------------------
def _r(a):
    return a.astype(jnp.bfloat16).astype(jnp.float32)


def _conv_ref(x, w, b, stride, pad):
    out = jax.lax.conv_general_dilated(
        x, jnp.transpose(w, (2, 3, 1, 0)),
        window_strides=(stride, stride), padding=[(pad, pad), (pad, pad)],
        dimension_numbers=("NHWC", "HWIO", "NHWC"))
    return out + b


def _convT_ref(x, w, b):
    wc = jnp.transpose(jnp.flip(w, (2, 3)), (2, 3, 0, 1))   # HWIO
    out = jax.lax.conv_general_dilated(
        x, wc, window_strides=(1, 1), padding=[(2, 2), (2, 2)],
        lhs_dilation=(2, 2), dimension_numbers=("NHWC", "HWIO", "NHWC"))
    return out + b


# ----------------------------------------------------------------------------
if __name__ == "__main__":
    key = jax.random.PRNGKey(0)
    kp, kl, kr, k1, k2, k3, k4, k5 = jax.random.split(key, 8)

    # --- self-test 1: stride-1 conv3x3 (multi row-tile, W not multiple of 8)
    xt = jax.random.normal(k1, (2, 40, 20, 16), jnp.float32)
    pt = conv_init(k2, 24, 16, 3)
    got = conv3x3([xt], _pack_w3x3(pt["w"]), pt["b"], act="none",
                  out_dtype=jnp.float32)
    ref = _conv_ref(_r(xt), _r(pt["w"]), pt["b"], 1, 1)
    assert float(jnp.max(jnp.abs(got - ref))) < 3e-2

    # --- self-test 2: phase-decomposed ConvTranspose2d(4,2,1)
    xt2 = jax.random.normal(k3, (2, 6, 6, 8), jnp.float32)
    pt2 = convT_init(k4, 8, 4, 4)
    got2 = conv_transpose2d(xt2, _pack_convT(pt2), out_dtype=jnp.float32)
    ref2 = _convT_ref(_r(xt2), _r(pt2["w"]), pt2["b"])
    assert float(jnp.max(jnp.abs(got2 - ref2))) < 3e-2

    # --- self-test 3: stride-2 conv via im2col + fused matmul
    pt3 = conv_init(k5, 8, 16, 3)
    got3 = conv_s2(xt, _pack_mm_conv(pt3), act="none", out_dtype=jnp.float32)
    ref3 = _conv_ref(_r(xt), _r(pt3["w"]), pt3["b"], 2, 1)
    assert float(jnp.max(jnp.abs(got3 - ref3))) < 3e-2

    # --- full FBNet forward
    B, C, H, W = 2, 3, 16, 16
    params = init_fbnet(kp, C)
    packed = pack_fbnet_params(params)          # one-time weight packing
    left = jax.random.normal(kl, (B, C, H, W), jnp.float32)
    right = jax.random.normal(kr, (B, C, H, W), jnp.float32)

    fwd = jax.jit(fbnet_forward)
    out = fwd(packed, left, right)
    out = jax.block_until_ready(out)
    assert out.shape == (B, 3, H, W), out.shape
    assert bool(jnp.all(jnp.isfinite(out)))
    assert float(jnp.min(out)) >= 0.0 and float(jnp.max(out)) <= 1.0
    print("KERNEL_OK")
</pallas_src>

<mosaic_0001>
module attributes {stable_mosaic.version = 11 : i64} {
  func.func @_conv3x3_kernel(%arg0: i32, %arg1: i32, %arg2: memref<1x1xf32, #tpu.memory_space<smem>>, %arg3: memref<1x1x22x26x16xbf16, #tpu.memory_space<vmem>>, %arg4: memref<3x48x24xbf16, #tpu.memory_space<vmem>>, %arg5: memref<1x24xf32, #tpu.memory_space<vmem>>, %arg6: memref<1x20x24x24xf32, #tpu.memory_space<vmem>>) attributes {dimension_semantics = [#tpu.dimension_semantics<parallel>, #tpu.dimension_semantics<parallel>], iteration_bounds = array<i64: 2, 2>, scalar_prefetch = 0 : i64, scratch_operands = 0 : i64, tpu.core_type = #tpu.core_type<tc>, window_params = [{transform_indices = @transform_0, window_bounds = array<i64: 1, 1>}, {transform_indices = @transform_1, window_bounds = array<i64: 1, 1, 22, 26, 16>}, {pipeline_mode = #tpu.pipeline_mode<synchronous>, transform_indices = @transform_2, window_bounds = array<i64: 3, 48, 24>}, {pipeline_mode = #tpu.pipeline_mode<synchronous>, transform_indices = @transform_3, window_bounds = array<i64: 1, 24>}, {transform_indices = @transform_4, window_bounds = array<i64: 1, 20, 24, 24>}]} {
    %cst = arith.constant 0.000000e+00 : f32
    %0 = vector.broadcast %cst : f32 to vector<480x24xf32>
    %c0 = arith.constant 0 : index
    %c0_0 = arith.constant 0 : index
    %c0_1 = arith.constant 0 : index
    %c0_2 = arith.constant 0 : index
    %c0_3 = arith.constant 0 : index
    %1 = vector.load %arg3[%c0, %c0_0, %c0_1, %c0_2, %c0_3] : memref<1x1x22x26x16xbf16, #tpu.memory_space<vmem>>, vector<1x1x20x24x16xbf16>
    %2 = vector.shape_cast %1 : vector<1x1x20x24x16xbf16> to vector<20x24x16xbf16>
    %c0_4 = arith.constant 0 : index
    %c0_5 = arith.constant 0 : index
    %c0_6 = arith.constant 0 : index
    %c1 = arith.constant 1 : index
    %c0_7 = arith.constant 0 : index
    %3 = vector.load %arg3[%c0_4, %c0_5, %c0_6, %c1, %c0_7] : memref<1x1x22x26x16xbf16, #tpu.memory_space<vmem>>, vector<1x1x20x24x16xbf16>
    %4 = vector.shape_cast %3 : vector<1x1x20x24x16xbf16> to vector<20x24x16xbf16>
    %c0_8 = arith.constant 0 : index
    %c0_9 = arith.constant 0 : index
    %c0_10 = arith.constant 0 : index
    %c2 = arith.constant 2 : index
    %c0_11 = arith.constant 0 : index
    %5 = vector.load %arg3[%c0_8, %c0_9, %c0_10, %c2, %c0_11] : memref<1x1x22x26x16xbf16, #tpu.memory_space<vmem>>, vector<1x1x20x24x16xbf16>
    %6 = vector.shape_cast %5 : vector<1x1x20x24x16xbf16> to vector<20x24x16xbf16>
    %7 = tpu.concatenate %2, %4, %6 in 2 : vector<20x24x16xbf16>, vector<20x24x16xbf16>, vector<20x24x16xbf16> -> vector<20x24x48xbf16>
    %8 = vector.shape_cast %7 : vector<20x24x48xbf16> to vector<480x48xbf16>
    %c0_12 = arith.constant 0 : index
    %c0_13 = arith.constant 0 : index
    %c0_14 = arith.constant 0 : index
    %9 = vector.load %arg4[%c0_12, %c0_13, %c0_14] : memref<3x48x24xbf16, #tpu.memory_space<vmem>>, vector<1x48x24xbf16>
    %10 = vector.shape_cast %9 : vector<1x48x24xbf16> to vector<48x24xbf16>
    %cst_15 = arith.constant dense<0.000000e+00> : vector<480x24xf32>
    %11 = tpu.matmul %8, %10, %cst_15 {dimension_numbers = #tpu.dot_dimension_numbers<[1], [0], [0], [1], [0, 0, 1, 1], [], []>} : vector<480x48xbf16>, vector<48x24xbf16>, vector<480x24xf32> -> vector<480x24xf32>
    %12 = arith.addf %0, %11 : vector<480x24xf32>
    %c0_16 = arith.constant 0 : index
    %c0_17 = arith.constant 0 : index
    %c1_18 = arith.constant 1 : index
    %c0_19 = arith.constant 0 : index
    %c0_20 = arith.constant 0 : index
    %13 = vector.load %arg3[%c0_16, %c0_17, %c1_18, %c0_19, %c0_20] : memref<1x1x22x26x16xbf16, #tpu.memory_space<vmem>>, vector<1x1x20x24x16xbf16>
    %14 = vector.shape_cast %13 : vector<1x1x20x24x16xbf16> to vector<20x24x16xbf16>
    %c0_21 = arith.constant 0 : index
    %c0_22 = arith.constant 0 : index
    %c1_23 = arith.constant 1 : index
    %c1_24 = arith.constant 1 : index
    %c0_25 = arith.constant 0 : index
    %15 = vector.load %arg3[%c0_21, %c0_22, %c1_23, %c1_24, %c0_25] : memref<1x1x22x26x16xbf16, #tpu.memory_space<vmem>>, vector<1x1x20x24x16xbf16>
    %16 = vector.shape_cast %15 : vector<1x1x20x24x16xbf16> to vector<20x24x16xbf16>
    %c0_26 = arith.constant 0 : index
    %c0_27 = arith.constant 0 : index
    %c1_28 = arith.constant 1 : index
    %c2_29 = arith.constant 2 : index
    %c0_30 = arith.constant 0 : index
    %17 = vector.load %arg3[%c0_26, %c0_27, %c1_28, %c2_29, %c0_30] : memref<1x1x22x26x16xbf16, #tpu.memory_space<vmem>>, vector<1x1x20x24x16xbf16>
    %18 = vector.shape_cast %17 : vector<1x1x20x24x16xbf16> to vector<20x24x16xbf16>
    %19 = tpu.concatenate %14, %16, %18 in 2 : vector<20x24x16xbf16>, vector<20x24x16xbf16>, vector<20x24x16xbf16> -> vector<20x24x48xbf16>
    %20 = vector.shape_cast %19 : vector<20x24x48xbf16> to vector<480x48xbf16>
    %c1_31 = arith.constant 1 : index
    %c0_32 = arith.constant 0 : index
    %c0_33 = arith.constant 0 : index
    %21 = vector.load %arg4[%c1_31, %c0_32, %c0_33] : memref<3x48x24xbf16, #tpu.memory_space<vmem>>, vector<1x48x24xbf16>
    %22 = vector.shape_cast %21 : vector<1x48x24xbf16> to vector<48x24xbf16>
    %cst_34 = arith.constant dense<0.000000e+00> : vector<480x24xf32>
    %23 = tpu.matmul %20, %22, %cst_34 {dimension_numbers = #tpu.dot_dimension_numbers<[1], [0], [0], [1], [0, 0, 1, 1], [], []>} : vector<480x48xbf16>, vector<48x24xbf16>, vector<480x24xf32> -> vector<480x24xf32>
    %24 = arith.addf %12, %23 : vector<480x24xf32>
    %c0_35 = arith.constant 0 : index
    %c0_36 = arith.constant 0 : index
    %c2_37 = arith.constant 2 : index
    %c0_38 = arith.constant 0 : index
    %c0_39 = arith.constant 0 : index
    %25 = vector.load %arg3[%c0_35, %c0_36, %c2_37, %c0_38, %c0_39] : memref<1x1x22x26x16xbf16, #tpu.memory_space<vmem>>, vector<1x1x20x24x16xbf16>
    %26 = vector.shape_cast %25 : vector<1x1x20x24x16xbf16> to vector<20x24x16xbf16>
    %c0_40 = arith.constant 0 : index
    %c0_41 = arith.constant 0 : index
    %c2_42 = arith.constant 2 : index
    %c1_43 = arith.constant 1 : index
    %c0_44 = arith.constant 0 : index
    %27 = vector.load %arg3[%c0_40, %c0_41, %c2_42, %c1_43, %c0_44] : memref<1x1x22x26x16xbf16, #tpu.memory_space<vmem>>, vector<1x1x20x24x16xbf16>
    %28 = vector.shape_cast %27 : vector<1x1x20x24x16xbf16> to vector<20x24x16xbf16>
    %c0_45 = arith.constant 0 : index
    %c0_46 = arith.constant 0 : index
    %c2_47 = arith.constant 2 : index
    %c2_48 = arith.constant 2 : index
    %c0_49 = arith.constant 0 : index
    %29 = vector.load %arg3[%c0_45, %c0_46, %c2_47, %c2_48, %c0_49] : memref<1x1x22x26x16xbf16, #tpu.memory_space<vmem>>, vector<1x1x20x24x16xbf16>
    %30 = vector.shape_cast %29 : vector<1x1x20x24x16xbf16> to vector<20x24x16xbf16>
    %31 = tpu.concatenate %26, %28, %30 in 2 : vector<20x24x16xbf16>, vector<20x24x16xbf16>, vector<20x24x16xbf16> -> vector<20x24x48xbf16>
    %32 = vector.shape_cast %31 : vector<20x24x48xbf16> to vector<480x48xbf16>
    %c2_50 = arith.constant 2 : index
    %c0_51 = arith.constant 0 : index
    %c0_52 = arith.constant 0 : index
    %33 = vector.load %arg4[%c2_50, %c0_51, %c0_52] : memref<3x48x24xbf16, #tpu.memory_space<vmem>>, vector<1x48x24xbf16>
    %34 = vector.shape_cast %33 : vector<1x48x24xbf16> to vector<48x24xbf16>
    %cst_53 = arith.constant dense<0.000000e+00> : vector<480x24xf32>
    %35 = tpu.matmul %32, %34, %cst_53 {dimension_numbers = #tpu.dot_dimension_numbers<[1], [0], [0], [1], [0, 0, 1, 1], [], []>} : vector<480x48xbf16>, vector<48x24xbf16>, vector<480x24xf32> -> vector<480x24xf32>
    %36 = arith.addf %24, %35 : vector<480x24xf32>
    %c0_54 = arith.constant 0 : index
    %c0_55 = arith.constant 0 : index
    %37 = vector.load %arg5[%c0_54, %c0_55] : memref<1x24xf32, #tpu.memory_space<vmem>>, vector<1x24xf32>
    %38 = vector.broadcast %37 : vector<1x24xf32> to vector<480x24xf32>
    %39 = arith.addf %36, %38 : vector<480x24xf32>
    %40 = vector.shape_cast %39 : vector<480x24xf32> to vector<20x24x24xf32>
    %c0_56 = arith.constant 0 : index
    %c0_57 = arith.constant 0 : index
    %c0_58 = arith.constant 0 : index
    %c0_59 = arith.constant 0 : index
    %41 = vector.load %arg6[%c0_56, %c0_57, %c0_58, %c0_59] : memref<1x20x24x24xf32, #tpu.memory_space<vmem>>, vector<1x20x24x24xf32>
    %42 = vector.shape_cast %41 : vector<1x20x24x24xf32> to vector<20x24x24xf32>
    %43 = vector.shape_cast %40 : vector<20x24x24xf32> to vector<1x20x24x24xf32>
    tpu.vector_store %arg6[%c0_56, %c0_57, %c0_58, %c0_59], %43 {strides = array<i32>} : memref<1x20x24x24xf32, #tpu.memory_space<vmem>>, vector<1x20x24x24xf32>,
    return
  }
  func.func @transform_0(%arg0: i32, %arg1: i32) -> (i32, i32) {
    %c0_i32 = arith.constant 0 : i32
    %c0_i32_0 = arith.constant 0 : i32
    %c0_i32_1 = arith.constant 0 : i32
    return %c0_i32, %c0_i32_0 : i32, i32
  }
  func.func @transform_1(%arg0: i32, %arg1: i32) -> (i32, i32, i32, i32, i32) {
    %c0_i32 = arith.constant 0 : i32
    %c0_i32_0 = arith.constant 0 : i32
    %c0_i32_1 = arith.constant 0 : i32
    %c0_i32_2 = arith.constant 0 : i32
    return %arg0, %arg1, %c0_i32, %c0_i32_0, %c0_i32_1 : i32, i32, i32, i32, i32
  }
  func.func @transform_2(%arg0: i32, %arg1: i32) -> (i32, i32, i32) {
    %c0_i32 = arith.constant 0 : i32
    %c0_i32_0 = arith.constant 0 : i32
    %c0_i32_1 = arith.constant 0 : i32
    %c0_i32_2 = arith.constant 0 : i32
    return %c0_i32, %c0_i32_0, %c0_i32_1 : i32, i32, i32
  }
  func.func @transform_3(%arg0: i32, %arg1: i32) -> (i32, i32) {
    %c0_i32 = arith.constant 0 : i32
    %c0_i32_0 = arith.constant 0 : i32
    %c0_i32_1 = arith.constant 0 : i32
    return %c0_i32, %c0_i32_0 : i32, i32
  }
  func.func @transform_4(%arg0: i32, %arg1: i32) -> (i32, i32, i32, i32) {
    %c0_i32 = arith.constant 0 : i32
    %c0_i32_0 = arith.constant 0 : i32
    %c0_i32_1 = arith.constant 0 : i32
    return %arg0, %arg1, %c0_i32, %c0_i32_0 : i32, i32, i32, i32
  }
}

</mosaic_0001>

<llo_original>
// kernel: tpu_custom_call.1
$region0: #{tpu_custom_call.1}
  #allocation0 [shape = 'u32[]', space=smem, size = 0x4, offset = 0x4, fixed_abs, tag = 'smem constant byte address 0x4 - core index']
  #allocation1 [shape = 'u32[144,128]{1,0:T(1,128)}', space=vmem, size = 0x12000, scoped, tag = 'internal scratch']
  #allocation2 [shape = 'f32[1,1]{1,0:T(1,128)S(6)}', space=smem, size = 0x200, scoped, tag = 'scoped memory for tpu_custom_call.1']
  %s0 = inlined_call_operand.<no memory space> [shape: f32[1,1], index: 0, kind: input, shape index: {}]
  %s1 = inlined_call_operand.vmem [shape: bf16[2,2,22,26,16], index: 1, kind: input, shape index: {}]
  %s2 = inlined_call_operand.vmem [shape: bf16[3,48,24], index: 2, kind: input, shape index: {}]
  %s3 = inlined_call_operand.vmem [shape: f32[1,24], index: 3, kind: input, shape index: {}]
  %s4 = inlined_call_operand.vmem [shape: f32[2,40,24,24], index: 4, kind: output, shape index: {}]
  %s5 = sld [smem:[#allocation0]]
  $region49: #{tpu_custom_call.1} parent=0
    _
  %s7 = ssub.s32 1, %s5
  %s8 = scalar_select 0, %s7, %s5
  %9 = sst [smem:[#allocation2]] %s0
  loop: start=0, step=1, limit=6
  $region2: #{tpu_custom_call.1} parent=0 // loop_pre_header
    _
  $region3: #{tpu_custom_call.1} parent=0 // loop_header
    %s11 = sphi 0, %s15
    %p12 = scmp.ge.s32.totalorder %s11, 6
    %s18 = sphi 0, %s30
    %s19 = sphi 0, %s26
    %s20 = sphi 0, %s18
    %s21 = sphi 0, %s19
    %s22 = sphi 0, %s20
    %s23 = sphi 0, %s21
    %s31 = sphi 0, %s31
    %s33 = sphi 0, %s31
    %s34 = sphi 0, %s33
    %s48 = sphi 0, %s34
    %s56 = sphi 0, %s58
    %s59 = sphi 0, %s56
    %s60 = sphi 0, %s59
    %s76 = sphi 0, %s60
    %s80 = sphi 0, %s80
    %s82 = sphi 0, %s80
    %s83 = sphi 0, %s82
    %s97 = sphi 0, %s83
    %s101 = sphi 0, %s101
    %s103 = sphi 0, %s101
    %s104 = sphi 0, %s103
    %s118 = sphi 0, %s104
    %s126 = sphi 0, %s128
    %s129 = sphi 0, %s126
    %s130 = sphi 0, %s129
    %s146 = sphi 0, %s130
  $region4: #{tpu_custom_call.1} parent=0 // loop_header_branch
    %14 = sbr.rel (%p12) target = $region8
  $region5: #{tpu_custom_call.1} parent=0 // loop_body
    %s16 = ssub.s32 %s11, 1
    %s17 = ssub.s32 %s11, 2
    %s24 = sadd.s32 1, %s19
    %p25 = scmp.ge.s32.totalorder %s24, 2
    %s26 = scalar_select %p25, 0, %s24
    %s27 = sadd.s32 1, %s18
    %s28 = scalar_select %p25, %s27, %s18
    %p29 = scmp.ge.s32.totalorder %s28, 2
    %s30 = scalar_select %p29, 0, %s28
    %s32 = sadd.s32 %s31, 1
    %p35 = scmp.eq.s32.totalorder %s11, 3
    %p36 = scmp.ne.s32.totalorder %s31, %s33
    %p37 = scmp.eq.s32.totalorder %s11, 0
    %p38 = por %p36, %p37
    %p39 = scmp.ne.s32.totalorder %s31, %s33
    %p40 = scmp.eq.s32.totalorder %s16, 3
    %p41 = por %p39, %p40
    %p42 = scmp.ne.s32.totalorder %s33, %s34
    %p43 = scmp.eq.s32.totalorder %s16, 0
    %p44 = por %p42, %p43
    %p45 = scmp.ne.s32.totalorder %s33, %s34
    %p46 = scmp.eq.s32.totalorder %s17, 3
    %p47 = por %p45, %p46
    %p49 = scmp.ne.s32.totalorder %s34, %s48
    %p50 = scmp.eq.s32.totalorder %s17, 0
    %p51 = por %p49, %p50
    %s52 = ssub.s32 %s18, %s30
    %s53 = ssub.s32 %s19, %s26
    %s54 = sor.u32 %s52, %s53
    %p55 = scmp.eq.s32.totalorder %s54, 0
    %s57 = sadd.s32 %s56, 1
    %s58 = scalar_select %p55, %s56, %s57
    %p61 = pneg %p55
    %p62 = scmp.eq.s32.totalorder %s11, 3
    %p63 = por %p61, %p62
    %p64 = scmp.ne.s32.totalorder %s56, %s59
    %p65 = scmp.eq.s32.totalorder %s11, 0
    %p66 = por %p64, %p65
    %p67 = scmp.ne.s32.totalorder %s56, %s59
    %p68 = scmp.eq.s32.totalorder %s16, 3
    %p69 = por %p67, %p68
    %p70 = scmp.ne.s32.totalorder %s59, %s60
    %p71 = scmp.eq.s32.totalorder %s16, 0
    %p72 = por %p70, %p71
    %p73 = scmp.ne.s32.totalorder %s59, %s60
    %p74 = scmp.eq.s32.totalorder %s17, 3
    %p75 = por %p73, %p74
    %p77 = scmp.ne.s32.totalorder %s60, %s76
    %p78 = scmp.eq.s32.totalorder %s17, 0
    %p79 = por %p77, %p78
    %s81 = sadd.s32 %s80, 1
    %p84 = scmp.eq.s32.totalorder %s11, 3
    %p85 = scmp.ne.s32.totalorder %s80, %s82
    %p86 = scmp.eq.s32.totalorder %s11, 0
    %p87 = por %p85, %p86
    %p88 = scmp.ne.s32.totalorder %s80, %s82
    %p89 = scmp.eq.s32.totalorder %s16, 3
    %p90 = por %p88, %p89
    %p91 = scmp.ne.s32.totalorder %s82, %s83
    %p92 = scmp.eq.s32.totalorder %s16, 0
    %p93 = por %p91, %p92
    %p94 = scmp.ne.s32.totalorder %s82, %s83
    %p95 = scmp.eq.s32.totalorder %s17, 3
    %p96 = por %p94, %p95
    %p98 = scmp.ne.s32.totalorder %s83, %s97
    %p99 = scmp.eq.s32.totalorder %s17, 0
    %p100 = por %p98, %p99
    %s102 = sadd.s32 %s101, 1
    %p105 = scmp.eq.s32.totalorder %s11, 3
    %p106 = scmp.ne.s32.totalorder %s101, %s103
    %p107 = scmp.eq.s32.totalorder %s11, 0
    %p108 = por %p106, %p107
    %p109 = scmp.ne.s32.totalorder %s101, %s103
    %p110 = scmp.eq.s32.totalorder %s16, 3
    %p111 = por %p109, %p110
    %p112 = scmp.ne.s32.totalorder %s103, %s104
    %p113 = scmp.eq.s32.totalorder %s16, 0
    %p114 = por %p112, %p113
    %p115 = scmp.ne.s32.totalorder %s103, %s104
    %p116 = scmp.eq.s32.totalorder %s17, 3
    %p117 = por %p115, %p116
    %p119 = scmp.ne.s32.totalorder %s104, %s118
    %p120 = scmp.eq.s32.totalorder %s17, 0
    %p121 = por %p119, %p120
    %s122 = ssub.s32 %s18, %s30
    %s123 = ssub.s32 %s19, %s26
    %s124 = sor.u32 %s122, %s123
    %p125 = scmp.eq.s32.totalorder %s124, 0
    %s127 = sadd.s32 %s126, 1
    %s128 = scalar_select %p125, %s126, %s127
    %p131 = pneg %p125
    %p132 = scmp.eq.s32.totalorder %s11, 3
    %p133 = por %p131, %p132
    %p134 = scmp.ne.s32.totalorder %s126, %s129
    %p135 = scmp.eq.s32.totalorder %s11, 0
    %p136 = por %p134, %p135
    %p137 = scmp.ne.s32.totalorder %s126, %s129
    %p138 = scmp.eq.s32.totalorder %s16, 3
    %p139 = por %p137, %p138
    %p140 = scmp.ne.s32.totalorder %s129, %s130
    %p141 = scmp.eq.s32.totalorder %s16, 0
    %p142 = por %p140, %p141
    %p143 = scmp.ne.s32.totalorder %s129, %s130
    %p144 = scmp.eq.s32.totalorder %s17, 3
    %p145 = por %p143, %p144
    %p147 = scmp.ne.s32.totalorder %s130, %s146
    %p148 = scmp.eq.s32.totalorder %s17, 0
    %p149 = por %p147, %p148
    %p150 = scmp.le.s32.totalorder 1, %s11
    %p151 = scmp.lt.s32.totalorder %s11, 5
    %p152 = pnand %p150, %p151
    %p153 = pneg %p152
    // Predicated region
    $region9: #{tpu_custom_call.1} parent=5 // pred_check
      _
    $region10: #{tpu_custom_call.1} parent=5 // pred_check_branch
      %155 = sbr.rel (%p152) target = $region12
    $region11: #{tpu_custom_call.1} parent=5 // pred_region
      %s156 = ssub.s32 %s11, 1
      // Predicated region
      $region13: #{tpu_custom_call.1} parent=11 // pred_check
        %p157 = pneg %p44
      $region14: #{tpu_custom_call.1} parent=11 // pred_check_branch
        %159 = sbr.rel (%p157) target = $region16
      $region15: #{tpu_custom_call.1} parent=11 // pred_region
        _
      $region16: #{tpu_custom_call.1} parent=11 // pred_fallthru
        _
      // Predicated region
      $region17: #{tpu_custom_call.1} parent=11 // pred_check
        %p160 = pneg %p93
      $region18: #{tpu_custom_call.1} parent=11 // pred_check_branch
        %162 = sbr.rel (%p160) target = $region20
      $region19: #{tpu_custom_call.1} parent=11 // pred_region
        _
      $region20: #{tpu_custom_call.1} parent=11 // pred_fallthru
        _
      // Predicated region
      $region21: #{tpu_custom_call.1} parent=11 // pred_check
        %p163 = pneg %p114
      $region22: #{tpu_custom_call.1} parent=11 // pred_check_branch
        %165 = sbr.rel (%p163) target = $region24
      $region23: #{tpu_custom_call.1} parent=11 // pred_region
        _
      $region24: #{tpu_custom_call.1} parent=11 // pred_fallthru
        _
    $region12: #{tpu_custom_call.1} parent=5 // pred_fallthru
      _
    %p166 = scmp.lt.s32.totalorder %s11, 4
    // Predicated region
    $region25: #{tpu_custom_call.1} parent=5 // pred_check
      %p167 = pneg %p166
    $region26: #{tpu_custom_call.1} parent=5 // pred_check_branch
      %169 = sbr.rel (%p167) target = $region28
    $region27: #{tpu_custom_call.1} parent=5 // pred_region
      // Predicated region
      $region29: #{tpu_custom_call.1} parent=27 // pred_check
        %p170 = pneg %p66
      $region30: #{tpu_custom_call.1} parent=27 // pred_check_branch
        %172 = sbr.rel (%p170) target = $region32
      $region31: #{tpu_custom_call.1} parent=27 // pred_region
        %p173 = scmp.lt.s32.totalorder %s18, 1
        %s174 = scalar_select %p173, %s18, 1
        %p175 = scmp.lt.s32.totalorder %s19, 1
        %s176 = scalar_select %p175, %s19, 1
        %s177 = smul.addr %s176, 88
        %s178 = smul.addr %s174, 176
        %s179 = sadd.s32 %s177, %s178
        %s180 = smul.addr %s179, 4
        %s181 = scalar_lea.vmem %s1, %s180
      $region32: #{tpu_custom_call.1} parent=27 // pred_fallthru
        _
    $region28: #{tpu_custom_call.1} parent=5 // pred_fallthru
      _
    %p182 = scmp.le.s32.totalorder 1, %s11
    %p183 = scmp.lt.s32.totalorder %s11, 5
    %p184 = pnand %p182, %p183
    %p185 = pneg %p184
    // Predicated region
    $region33: #{tpu_custom_call.1} parent=5 // pred_check
      _
    $region34: #{tpu_custom_call.1} parent=5 // pred_check_branch
      %187 = sbr.rel (%p184) target = $region36
    $region35: #{tpu_custom_call.1} parent=5 // pred_region
      %s188 = ssub.s32 %s11, 1
      %p189 = pneg %p44
      %p190 = pneg %p41
      %p191 = scmp.lt.s32.totalorder %s20, 1
      %s192 = scalar_select %p191, %s20, 1
      %p193 = scmp.lt.s32.totalorder %s21, 1
      %s194 = scalar_select %p193, %s21, 1
      %s195 = smul.addr %s194, 88
      %s196 = smul.addr %s192, 176
      %s197 = sadd.s32 %s195, %s196
      %s198 = smul.addr %s197, 4
      %s199 = scalar_lea.vmem %s1, %s198
      %p200 = pneg %p72
      %p201 = pneg %p69
      %p202 = pneg %p93
      %p203 = pneg %p90
      %p204 = pneg %p114
      %p205 = pneg %p111
      %p206 = pneg %p142
      %p207 = pneg %p139
      %s208 = smul.u32 20, %s21
      %p209 = scmp.lt.s32.totalorder %s20, 1
      %s210 = scalar_select %p209, %s20, 1
      %p211 = scmp.lt.s32.totalorder %s208, 39
      %s212 = scalar_select %p211, %s208, 39
      %s213 = smul.addr %s212, 3
      %s214 = smul.addr %s210, 120
      %s215 = sadd.s32 %s213, %s214
      %s216 = smul.addr %s215, 8
      %s217 = scalar_lea.vmem %s4, %s216
      %p218 = scmp.lt.s32.totalorder %s20, 1
      %s219 = scalar_select %p218, %s20, 1
      %p220 = scmp.lt.s32.totalorder %s21, 1
      %s221 = scalar_select %p220, %s21, 1
      %s222 = smul.addr %s221, 88
      %s223 = smul.addr %s219, 176
      %s224 = sadd.s32 %s222, %s223
      %s225 = smul.addr %s224, 4
      %s226 = scalar_lea.vmem %s1, %s225
      %s227 = smul.u32 20, %s21
      %p228 = scmp.lt.s32.totalorder %s20, 1
      %s229 = scalar_select %p228, %s20, 1
      %p230 = scmp.lt.s32.totalorder %s227, 39
      %s231 = scalar_select %p230, %s227, 39
      %s232 = smul.addr %s231, 3
      %s233 = smul.addr %s229, 120
      %s234 = sadd.s32 %s232, %s233
      %s235 = smul.addr %s234, 8
      %s236 = scalar_lea.vmem %s4, %s235
      %s237 = smul.u32 20, %s21
      %v239 = vld [vmem:[%s226] sm:$0xf]
      %v240 = vld [vmem:[%s226 + $0x4] sm:$0xf]
      %v241 = vld [vmem:[%s226 + $0x8] sm:$0xf]
      %v242 = vld [vmem:[%s226 + $0x10] sm:$0xf]
      %v243 = vld [vmem:[%s226 + $0x14] sm:$0xf]
      %v244 = vld [vmem:[%s226 + $0x18] sm:$0xf]
      %v245 = vld [vmem:[%s226 + $0x20] sm:$0xf]
      %v246 = vld [vmem:[%s226 + $0x24] sm:$0xf]
      %v247 = vld [vmem:[%s226 + $0x28] sm:$0xf]
      %v248 = vld [vmem:[%s226 + $0x30] sm:$0xf]
      %v249 = vld [vmem:[%s226 + $0x34] sm:$0xf]
      %v250 = vld [vmem:[%s226 + $0x38] sm:$0xf]
      %v251 = vld [vmem:[%s226 + $0x40] sm:$0xf]
      %v252 = vld [vmem:[%s226 + $0x44] sm:$0xf]
      %v253 = vld [vmem:[%s226 + $0x48] sm:$0xf]
      %v254 = vld [vmem:[%s226 + $0x50] sm:$0xf]
      %v255 = vld [vmem:[%s226 + $0x54] sm:$0xf]
      %v256 = vld [vmem:[%s226 + $0x58] sm:$0xf]
      %v257 = vld [vmem:[%s226 + $0x60] sm:$0xf]
      %v258 = vld [vmem:[%s226 + $0x64] sm:$0xf]
      %v259 = vld [vmem:[%s226 + $0x68] sm:$0xf]
      %v260 = vld [vmem:[%s226 + $0x70] sm:$0xf]
      %v261 = vld [vmem:[%s226 + $0x74] sm:$0xf]
      %v262 = vld [vmem:[%s226 + $0x78] sm:$0xf]
      %v263 = vld [vmem:[%s226 + $0x80] sm:$0xf]
      %v264 = vld [vmem:[%s226 + $0x84] sm:$0xf]
      %v265 = vld [vmem:[%s226 + $0x88] sm:$0xf]
      %v266 = vld [vmem:[%s226 + $0x90] sm:$0xf]
      %v267 = vld [vmem:[%s226 + $0x94] sm:$0xf]
      %v268 = vld [vmem:[%s226 + $0x98] sm:$0xf]
      %v269 = vld [vmem:[%s226 + $0xa0] sm:$0xf]
      %v270 = vld [vmem:[%s226 + $0xa4] sm:$0xf]
      %v271 = vld [vmem:[%s226 + $0xa8] sm:$0xf]
      %v272 = vld [vmem:[%s226 + $0xb0] sm:$0xf]
      %v273 = vld [vmem:[%s226 + $0xb4] sm:$0xf]
      %v274 = vld [vmem:[%s226 + $0xb8] sm:$0xf]
      %v275 = vld [vmem:[%s226 + $0xc0] sm:$0xf]
      %v276 = vld [vmem:[%s226 + $0xc4] sm:$0xf]
      %v277 = vld [vmem:[%s226 + $0xc8] sm:$0xf]
      %v278 = vld [vmem:[%s226 + $0xd0] sm:$0xf]
      %v279 = vld [vmem:[%s226 + $0xd4] sm:$0xf]
      %v280 = vld [vmem:[%s226 + $0xd8] sm:$0xf]
      %v281 = vld [vmem:[%s226 + $0xe0] sm:$0xf]
      %v282 = vld [vmem:[%s226 + $0xe4] sm:$0xf]
      %v283 = vld [vmem:[%s226 + $0xe8] sm:$0xf]
      %v284 = vld [vmem:[%s226 + $0xf0] sm:$0xf]
      %v285 = vld [vmem:[%s226 + $0xf4] sm:$0xf]
      %v286 = vld [vmem:[%s226 + $0xf8] sm:$0xf]
      %v287 = vld [vmem:[%s226 + $0x100] sm:$0xf]
      %v288 = vld [vmem:[%s226 + $0x104] sm:$0xf]
      %v289 = vld [vmem:[%s226 + $0x108] sm:$0xf]
      %v290 = vld [vmem:[%s226 + $0x110] sm:$0xf]
      %v291 = vld [vmem:[%s226 + $0x114] sm:$0xf]
      %v292 = vld [vmem:[%s226 + $0x118] sm:$0xf]
      %v293 = vld [vmem:[%s226 + $0x120] sm:$0xf]
      %v294 = vld [vmem:[%s226 + $0x124] sm:$0xf]
      %v295 = vld [vmem:[%s226 + $0x128] sm:$0xf]
      %v296 = vld [vmem:[%s226 + $0x130] sm:$0xf]
      %v297 = vld [vmem:[%s226 + $0x134] sm:$0xf]
      %v298 = vld [vmem:[%s226 + $0x138] sm:$0xf]
      %v299 = vld [vmem:[%s226 + $0xc] sm:$0x1]
      %v300 = vld [vmem:[%s226 + $0x1c] sm:$0x1]
      %v301 = vld [vmem:[%s226 + $0x2c] sm:$0x1]
      %v302 = vld [vmem:[%s226 + $0x3c] sm:$0x1]
      %v303 = vld [vmem:[%s226 + $0x4c] sm:$0x1]
      %v304 = vld [vmem:[%s226 + $0x5c] sm:$0x1]
      %v305 = vld [vmem:[%s226 + $0x6c] sm:$0x1]
      %v306 = vld [vmem:[%s226 + $0x7c] sm:$0x1]
      %v307 = vld [vmem:[%s226 + $0x8c] sm:$0x1]
      %v308 = vld [vmem:[%s226 + $0x9c] sm:$0x1]
      %v309 = vld [vmem:[%s226 + $0xac] sm:$0x1]
      %v310 = vld [vmem:[%s226 + $0xbc] sm:$0x1]
      %v311 = vld [vmem:[%s226 + $0xcc] sm:$0x1]
      %v312 = vld [vmem:[%s226 + $0xdc] sm:$0x1]
      %v313 = vld [vmem:[%s226 + $0xec] sm:$0x1]
      %v314 = vld [vmem:[%s226 + $0xfc] sm:$0x1]
      %v315 = vld [vmem:[%s226 + $0x10c] sm:$0x1]
      %v316 = vld [vmem:[%s226 + $0x11c] sm:$0x1]
      %v317 = vld [vmem:[%s226 + $0x12c] sm:$0x1]
      %v318 = vld [vmem:[%s226 + $0x13c] sm:$0x1]
      %v319 = vld [vmem:[%s226] sm:$0xe]
      %v320 = vld [vmem:[%s226 + $0x10] sm:$0xe]
      %v321 = vld [vmem:[%s226 + $0x20] sm:$0xe]
      %v322 = vld [vmem:[%s226 + $0x30] sm:$0xe]
      %v323 = vld [vmem:[%s226 + $0x40] sm:$0xe]
      %v324 = vld [vmem:[%s226 + $0x50] sm:$0xe]
      %v325 = vld [vmem:[%s226 + $0x60] sm:$0xe]
      %v326 = vld [vmem:[%s226 + $0x70] sm:$0xe]
      %v327 = vld [vmem:[%s226 + $0x80] sm:$0xe]
      %v328 = vld [vmem:[%s226 + $0x90] sm:$0xe]
      %v329 = vld [vmem:[%s226 + $0xa0] sm:$0xe]
      %v330 = vld [vmem:[%s226 + $0xb0] sm:$0xe]
      %v331 = vld [vmem:[%s226 + $0xc0] sm:$0xe]
      %v332 = vld [vmem:[%s226 + $0xd0] sm:$0xe]
      %v333 = vld [vmem:[%s226 + $0xe0] sm:$0xe]
      %v334 = vld [vmem:[%s226 + $0xf0] sm:$0xe]
      %v335 = vld [vmem:[%s226 + $0x100] sm:$0xe]
      %v336 = vld [vmem:[%s226 + $0x110] sm:$0xe]
      %v337 = vld [vmem:[%s226 + $0x120] sm:$0xe]
      %v338 = vld [vmem:[%s226 + $0x130] sm:$0xe]
      %v399 = vunpack.c.l.b16 %v239
      %v400 = vunpack.c.l.b16 %v240
      %v401 = vunpack.c.l.b16 %v241
      %v402 = vunpack.c.l.b16 %v242
      %v403 = vunpack.c.l.b16 %v243
      %v404 = vunpack.c.l.b16 %v244
      %v405 = vunpack.c.l.b16 %v245
      %v406 = vunpack.c.l.b16 %v246
      %v407 = vunpack.c.l.b16 %v247
      %v408 = vunpack.c.l.b16 %v248
      %v409 = vunpack.c.l.b16 %v249
      %v410 = vunpack.c.l.b16 %v250
      %v411 = vunpack.c.l.b16 %v251
      %v412 = vunpack.c.l.b16 %v252
      %v413 = vunpack.c.l.b16 %v253
      %v414 = vunpack.c.l.b16 %v254
      %v415 = vunpack.c.l.b16 %v255
      %v416 = vunpack.c.l.b16 %v256
      %v417 = vunpack.c.l.b16 %v257
      %v418 = vunpack.c.l.b16 %v258
      %v419 = vunpack.c.l.b16 %v259
      %v420 = vunpack.c.l.b16 %v260
      %v421 = vunpack.c.l.b16 %v261
      %v422 = vunpack.c.l.b16 %v262
      %v423 = vunpack.c.l.b16 %v263
      %v424 = vunpack.c.l.b16 %v264
      %v425 = vunpack.c.l.b16 %v265
      %v426 = vunpack.c.l.b16 %v266
      %v427 = vunpack.c.l.b16 %v267
      %v428 = vunpack.c.l.b16 %v268
      %v429 = vunpack.c.l.b16 %v269
      %v430 = vunpack.c.l.b16 %v270
      %v431 = vunpack.c.l.b16 %v271
      %v432 = vunpack.c.l.b16 %v272
      %v433 = vunpack.c.l.b16 %v273
      %v434 = vunpack.c.l.b16 %v274
      %v435 = vunpack.c.l.b16 %v275
      %v436 = vunpack.c.l.b16 %v276
      %v437 = vunpack.c.l.b16 %v277
      %v438 = vunpack.c.l.b16 %v278
      %v439 = vunpack.c.l.b16 %v279
      %v440 = vunpack.c.l.b16 %v280
      %v441 = vunpack.c.l.b16 %v281
      %v442 = vunpack.c.l.b16 %v282
      %v443 = vunpack.c.l.b16 %v283
      %v444 = vunpack.c.l.b16 %v284
      %v445 = vunpack.c.l.b16 %v285
      %v446 = vunpack.c.l.b16 %v286
      %v447 = vunpack.c.l.b16 %v287
      %v448 = vunpack.c.l.b16 %v288
      %v449 = vunpack.c.l.b16 %v289
      %v450 = vunpack.c.l.b16 %v290
      %v451 = vunpack.c.l.b16 %v291
      %v452 = vunpack.c.l.b16 %v292
      %v453 = vunpack.c.l.b16 %v293
      %v454 = vunpack.c.l.b16 %v294
      %v455 = vunpack.c.l.b16 %v295
      %v456 = vunpack.c.l.b16 %v296
      %v457 = vunpack.c.l.b16 %v297
      %v458 = vunpack.c.l.b16 %v298
      %v459 = vpack.c.b16 %v400, %v399
      %v460 = vpack.c.b16 %v401, %v401
      %v461 = vpack.c.b16 %v403, %v402
      %v462 = vpack.c.b16 %v404, %v404
      %v463 = vpack.c.b16 %v406, %v405
      %v464 = vpack.c.b16 %v407, %v407
      %v465 = vpack.c.b16 %v409, %v408
      %v466 = vpack.c.b16 %v410, %v410
      %v467 = vpack.c.b16 %v412, %v411
      %v468 = vpack.c.b16 %v413, %v413
      %v469 = vpack.c.b16 %v415, %v414
      %v470 = vpack.c.b16 %v416, %v416
      %v471 = vpack.c.b16 %v418, %v417
      %v472 = vpack.c.b16 %v419, %v419
      %v473 = vpack.c.b16 %v421, %v420
      %v474 = vpack.c.b16 %v422, %v422
      %v475 = vpack.c.b16 %v424, %v423
      %v476 = vpack.c.b16 %v425, %v425
      %v477 = vpack.c.b16 %v427, %v426
      %v478 = vpack.c.b16 %v428, %v428
      %v479 = vpack.c.b16 %v430, %v429
      %v480 = vpack.c.b16 %v431, %v431
      %v481 = vpack.c.b16 %v433, %v432
      %v482 = vpack.c.b16 %v434, %v434
      %v483 = vpack.c.b16 %v436, %v435
      %v484 = vpack.c.b16 %v437, %v437
      %v485 = vpack.c.b16 %v439, %v438
      %v486 = vpack.c.b16 %v440, %v440
      %v487 = vpack.c.b16 %v442, %v441
      %v488 = vpack.c.b16 %v443, %v443
      %v489 = vpack.c.b16 %v445, %v444
      %v490 = vpack.c.b16 %v446, %v446
      %v491 = vpack.c.b16 %v448, %v447
      %v492 = vpack.c.b16 %v449, %v449
      %v493 = vpack.c.b16 %v451, %v450
      %v494 = vpack.c.b16 %v452, %v452
      %v495 = vpack.c.b16 %v454, %v453
      %v496 = vpack.c.b16 %v455, %v455
      %v497 = vpack.c.b16 %v457, %v456
      %v498 = vpack.c.b16 %v458, %v458
      %v519 = vunpack.c.l.b16 %v299
      %v520 = vunpack.c.l.b16 %v300
      %v521 = vunpack.c.l.b16 %v301
      %v522 = vunpack.c.l.b16 %v302
      %v523 = vunpack.c.l.b16 %v303
      %v524 = vunpack.c.l.b16 %v304
      %v525 = vunpack.c.l.b16 %v305
      %v526 = vunpack.c.l.b16 %v306
      %v527 = vunpack.c.l.b16 %v307
      %v528 = vunpack.c.l.b16 %v308
      %v529 = vunpack.c.l.b16 %v309
      %v530 = vunpack.c.l.b16 %v310
      %v531 = vunpack.c.l.b16 %v311
      %v532 = vunpack.c.l.b16 %v312
      %v533 = vunpack.c.l.b16 %v313
      %v534 = vunpack.c.l.b16 %v314
      %v535 = vunpack.c.l.b16 %v315
      %v536 = vunpack.c.l.b16 %v316
      %v537 = vunpack.c.l.b16 %v317
      %v538 = vunpack.c.l.b16 %v318
      %v539 = vpack.c.b16 %v519, %v401
      %v540 = vpack.c.b16 %v520, %v404
      %v541 = vpack.c.b16 %v521, %v407
      %v542 = vpack.c.b16 %v522, %v410
      %v543 = vpack.c.b16 %v523, %v413
      %v544 = vpack.c.b16 %v524, %v416
      %v545 = vpack.c.b16 %v525, %v419
      %v546 = vpack.c.b16 %v526, %v422
      %v547 = vpack.c.b16 %v527, %v425
      %v548 = vpack.c.b16 %v528, %v428
      %v549 = vpack.c.b16 %v529, %v431
      %v550 = vpack.c.b16 %v530, %v434
      %v551 = vpack.c.b16 %v531, %v437
      %v552 = vpack.c.b16 %v532, %v440
      %v553 = vpack.c.b16 %v533, %v443
      %v554 = vpack.c.b16 %v534, %v446
      %v555 = vpack.c.b16 %v535, %v449
      %v556 = vpack.c.b16 %v536, %v452
      %v557 = vpack.c.b16 %v537, %v455
      %v558 = vpack.c.b16 %v538, %v458
      %vm559 = vsmask.f32 7424
      %v561 = vshrl.u32 %v459, 16
      %v563 = vshll.u32 %v459, 16
      %v565 = vrot.slane %v563, 1
      %v566 = vor.u32 %v561, %v565
      %v568 = vshll.u32 %v539, 16
      %v570 = vrot.slane %v568, 1
      %v571 = vsel %vm559, %v566, %v570
      %v572 = vshrl.u32 %v539, 16
      %v574 = vor.u32 %v572, %v570
      %v576 = vshrl.u32 %v461, 16
      %v578 = vshll.u32 %v461, 16
      %v580 = vrot.slane %v578, 1
      %v581 = vor.u32 %v576, %v580
      %v583 = vshll.u32 %v540, 16
      %v585 = vrot.slane %v583, 1
      %v586 = vsel %vm559, %v581, %v585
      %v587 = vshrl.u32 %v540, 16
      %v589 = vor.u32 %v587, %v585
      %v591 = vshrl.u32 %v463, 16
      %v593 = vshll.u32 %v463, 16
      %v595 = vrot.slane %v593, 1
      %v596 = vor.u32 %v591, %v595
      %v598 = vshll.u32 %v541, 16
      %v600 = vrot.slane %v598, 1
      %v601 = vsel %vm559, %v596, %v600
      %v602 = vshrl.u32 %v541, 16
      %v604 = vor.u32 %v602, %v600
      %v606 = vshrl.u32 %v465, 16
      %v608 = vshll.u32 %v465, 16
      %v610 = vrot.slane %v608, 1
      %v611 = vor.u32 %v606, %v610
      %v613 = vshll.u32 %v542, 16
      %v615 = vrot.slane %v613, 1
      %v616 = vsel %vm559, %v611, %v615
      %v617 = vshrl.u32 %v542, 16
      %v619 = vor.u32 %v617, %v615
      %v621 = vshrl.u32 %v467, 16
      %v623 = vshll.u32 %v467, 16
      %v625 = vrot.slane %v623, 1
      %v626 = vor.u32 %v621, %v625
      %v628 = vshll.u32 %v543, 16
      %v630 = vrot.slane %v628, 1
      %v631 = vsel %vm559, %v626, %v630
      %v632 = vshrl.u32 %v543, 16
      %v634 = vor.u32 %v632, %v630
      %v636 = vshrl.u32 %v469, 16
      %v638 = vshll.u32 %v469, 16
      %v640 = vrot.slane %v638, 1
      %v641 = vor.u32 %v636, %v640
      %v643 = vshll.u32 %v544, 16
      %v645 = vrot.slane %v643, 1
      %v646 = vsel %vm559, %v641, %v645
      %v647 = vshrl.u32 %v544, 16
      %v649 = vor.u32 %v647, %v645
      %v651 = vshrl.u32 %v471, 16
      %v653 = vshll.u32 %v471, 16
      %v655 = vrot.slane %v653, 1
      %v656 = vor.u32 %v651, %v655
      %v658 = vshll.u32 %v545, 16
      %v660 = vrot.slane %v658, 1
      %v661 = vsel %vm559, %v656, %v660
      %v662 = vshrl.u32 %v545, 16
      %v664 = vor.u32 %v662, %v660
      %v666 = vshrl.u32 %v473, 16
      %v668 = vshll.u32 %v473, 16
      %v670 = vrot.slane %v668, 1
      %v671 = vor.u32 %v666, %v670
      %v673 = vshll.u32 %v546, 16
      %v675 = vrot.slane %v673, 1
      %v676 = vsel %vm559, %v671, %v675
      %v677 = vshrl.u32 %v546, 16
      %v679 = vor.u32 %v677, %v675
      %v681 = vshrl.u32 %v475, 16
      %v683 = vshll.u32 %v475, 16
      %v685 = vrot.slane %v683, 1
      %v686 = vor.u32 %v681, %v685
      %v688 = vshll.u32 %v547, 16
      %v690 = vrot.slane %v688, 1
      %v691 = vsel %vm559, %v686, %v690
      %v692 = vshrl.u32 %v547, 16
      %v694 = vor.u32 %v692, %v690
      %v696 = vshrl.u32 %v477, 16
      %v698 = vshll.u32 %v477, 16
      %v700 = vrot.slane %v698, 1
      %v701 = vor.u32 %v696, %v700
      %v703 = vshll.u32 %v548, 16
      %v705 = vrot.slane %v703, 1
      %v706 = vsel %vm559, %v701, %v705
      %v707 = vshrl.u32 %v548, 16
      %v709 = vor.u32 %v707, %v705
      %v711 = vshrl.u32 %v479, 16
      %v713 = vshll.u32 %v479, 16
      %v715 = vrot.slane %v713, 1
      %v716 = vor.u32 %v711, %v715
      %v718 = vshll.u32 %v549, 16
      %v720 = vrot.slane %v718, 1
      %v721 = vsel %vm559, %v716, %v720
      %v722 = vshrl.u32 %v549, 16
      %v724 = vor.u32 %v722, %v720
      %v726 = vshrl.u32 %v481, 16
      %v728 = vshll.u32 %v481, 16
      %v730 = vrot.slane %v728, 1
      %v731 = vor.u32 %v726, %v730
      %v733 = vshll.u32 %v550, 16
      %v735 = vrot.slane %v733, 1
      %v736 = vsel %vm559, %v731, %v735
      %v737 = vshrl.u32 %v550, 16
      %v739 = vor.u32 %v737, %v735
      %v741 = vshrl.u32 %v483, 16
      %v743 = vshll.u32 %v483, 16
      %v745 = vrot.slane %v743, 1
      %v746 = vor.u32 %v741, %v745
      %v748 = vshll.u32 %v551, 16
      %v750 = vrot.slane %v748, 1
      %v751 = vsel %vm559, %v746, %v750
      %v752 = vshrl.u32 %v551, 16
      %v754 = vor.u32 %v752, %v750
      %v756 = vshrl.u32 %v485, 16
      %v758 = vshll.u32 %v485, 16
      %v760 = vrot.slane %v758, 1
      %v761 = vor.u32 %v756, %v760
      %v763 = vshll.u32 %v552, 16
      %v765 = vrot.slane %v763, 1
      %v766 = vsel %vm559, %v761, %v765
      %v767 = vshrl.u32 %v552, 16
      %v769 = vor.u32 %v767, %v765
      %v771 = vshrl.u32 %v487, 16
      %v773 = vshll.u32 %v487, 16
      %v775 = vrot.slane %v773, 1
      %v776 = vor.u32 %v771, %v775
      %v778 = vshll.u32 %v553, 16
      %v780 = vrot.slane %v778, 1
      %v781 = vsel %vm559, %v776, %v780
      %v782 = vshrl.u32 %v553, 16
      %v784 = vor.u32 %v782, %v780
      %v786 = vshrl.u32 %v489, 16
      %v788 = vshll.u32 %v489, 16
      %v790 = vrot.slane %v788, 1
      %v791 = vor.u32 %v786, %v790
      %v793 = vshll.u32 %v554, 16
      %v795 = vrot.slane %v793, 1
      %v796 = vsel %vm559, %v791, %v795
      %v797 = vshrl.u32 %v554, 16
      %v799 = vor.u32 %v797, %v795
      %v801 = vshrl.u32 %v491, 16
      %v803 = vshll.u32 %v491, 16
      %v805 = vrot.slane %v803, 1
      %v806 = vor.u32 %v801, %v805
      %v808 = vshll.u32 %v555, 16
      %v810 = vrot.slane %v808, 1
      %v811 = vsel %vm559, %v806, %v810
      %v812 = vshrl.u32 %v555, 16
      %v814 = vor.u32 %v812, %v810
      %v816 = vshrl.u32 %v493, 16
      %v818 = vshll.u32 %v493, 16
      %v820 = vrot.slane %v818, 1
      %v821 = vor.u32 %v816, %v820
      %v823 = vshll.u32 %v556, 16
      %v825 = vrot.slane %v823, 1
      %v826 = vsel %vm559, %v821, %v825
      %v827 = vshrl.u32 %v556, 16
      %v829 = vor.u32 %v827, %v825
      %v831 = vshrl.u32 %v495, 16
      %v833 = vshll.u32 %v495, 16
      %v835 = vrot.slane %v833, 1
      %v836 = vor.u32 %v831, %v835
      %v838 = vshll.u32 %v557, 16
      %v840 = vrot.slane %v838, 1
      %v841 = vsel %vm559, %v836, %v840
      %v842 = vshrl.u32 %v557, 16
      %v844 = vor.u32 %v842, %v840
      %v846 = vshrl.u32 %v497, 16
      %v848 = vshll.u32 %v497, 16
      %v850 = vrot.slane %v848, 1
      %v851 = vor.u32 %v846, %v850
      %v853 = vshll.u32 %v558, 16
      %v855 = vrot.slane %v853, 1
      %v856 = vsel %vm559, %v851, %v855
      %v857 = vshrl.u32 %v558, 16
      %v859 = vor.u32 %v857, %v855
      %860 = vrot.lane.b32.xlu0 %v571, 16
      %v861 = vpop.permute.xlu0 %860
      %862 = vrot.lane.b32.xlu0 %v574, 16
      %v863 = vpop.permute.xlu0 %862
      %864 = vrot.lane.b32.xlu0 %v586, 16
      %v865 = vpop.permute.xlu0 %864
      %866 = vrot.lane.b32.xlu0 %v589, 16
      %v867 = vpop.permute.xlu0 %866
      %868 = vrot.lane.b32.xlu0 %v601, 16
      %v869 = vpop.permute.xlu0 %868
      %870 = vrot.lane.b32.xlu0 %v604, 16
      %v871 = vpop.permute.xlu0 %870
      %872 = vrot.lane.b32.xlu0 %v616, 16
      %v873 = vpop.permute.xlu0 %872
      %874 = vrot.lane.b32.xlu0 %v619, 16
      %v875 = vpop.permute.xlu0 %874
      %876 = vrot.lane.b32.xlu0 %v631, 16
      %v877 = vpop.permute.xlu0 %876
      %878 = vrot.lane.b32.xlu0 %v634, 16
      %v879 = vpop.permute.xlu0 %878
      %880 = vrot.lane.b32.xlu0 %v646, 16
      %v881 = vpop.permute.xlu0 %880
      %882 = vrot.lane.b32.xlu0 %v649, 16
      %v883 = vpop.permute.xlu0 %882
      %884 = vrot.lane.b32.xlu0 %v661, 16
      %v885 = vpop.permute.xlu0 %884
      %886 = vrot.lane.b32.xlu0 %v664, 16
      %v887 = vpop.permute.xlu0 %886
      %888 = vrot.lane.b32.xlu0 %v676, 16
      %v889 = vpop.permute.xlu0 %888
      %890 = vrot.lane.b32.xlu0 %v679, 16
      %v891 = vpop.permute.xlu0 %890
      %892 = vrot.lane.b32.xlu0 %v691, 16
      %v893 = vpop.permute.xlu0 %892
      %894 = vrot.lane.b32.xlu0 %v694, 16
      %v895 = vpop.permute.xlu0 %894
      %896 = vrot.lane.b32.xlu0 %v706, 16
      %v897 = vpop.permute.xlu0 %896
      %898 = vrot.lane.b32.xlu0 %v709, 16
      %v899 = vpop.permute.xlu0 %898
      %900 = vrot.lane.b32.xlu0 %v721, 16
      %v901 = vpop.permute.xlu0 %900
      %902 = vrot.lane.b32.xlu0 %v724, 16
      %v903 = vpop.permute.xlu0 %902
      %904 = vrot.lane.b32.xlu0 %v736, 16
      %v905 = vpop.permute.xlu0 %904
      %906 = vrot.lane.b32.xlu0 %v739, 16
      %v907 = vpop.permute.xlu0 %906
      %908 = vrot.lane.b32.xlu0 %v751, 16
      %v909 = vpop.permute.xlu0 %908
      %910 = vrot.lane.b32.xlu0 %v754, 16
      %v911 = vpop.permute.xlu0 %910
      %912 = vrot.lane.b32.xlu0 %v766, 16
      %v913 = vpop.permute.xlu0 %912
      %914 = vrot.lane.b32.xlu0 %v769, 16
      %v915 = vpop.permute.xlu0 %914
      %916 = vrot.lane.b32.xlu0 %v781, 16
      %v917 = vpop.permute.xlu0 %916
      %918 = vrot.lane.b32.xlu0 %v784, 16
      %v919 = vpop.permute.xlu0 %918
      %920 = vrot.lane.b32.xlu0 %v796, 16
      %v921 = vpop.permute.xlu0 %920
      %922 = vrot.lane.b32.xlu0 %v799, 16
      %v923 = vpop.permute.xlu0 %922
      %924 = vrot.lane.b32.xlu0 %v811, 16
      %v925 = vpop.permute.xlu0 %924
      %926 = vrot.lane.b32.xlu0 %v814, 16
      %v927 = vpop.permute.xlu0 %926
      %928 = vrot.lane.b32.xlu0 %v826, 16
      %v929 = vpop.permute.xlu0 %928
      %930 = vrot.lane.b32.xlu0 %v829, 16
      %v931 = vpop.permute.xlu0 %930
      %932 = vrot.lane.b32.xlu0 %v841, 16
      %v933 = vpop.permute.xlu0 %932
      %934 = vrot.lane.b32.xlu0 %v844, 16
      %v935 = vpop.permute.xlu0 %934
      %936 = vrot.lane.b32.xlu0 %v856, 16
      %v937 = vpop.permute.xlu0 %936
      %938 = vrot.lane.b32.xlu0 %v859, 16
      %v939 = vpop.permute.xlu0 %938
      %v960 = vunpack.c.l.b16 %v319
      %v961 = vunpack.c.l.b16 %v320
      %v962 = vunpack.c.l.b16 %v321
      %v963 = vunpack.c.l.b16 %v322
      %v964 = vunpack.c.l.b16 %v323
      %v965 = vunpack.c.l.b16 %v324
      %v966 = vunpack.c.l.b16 %v325
      %v967 = vunpack.c.l.b16 %v326
      %v968 = vunpack.c.l.b16 %v327
      %v969 = vunpack.c.l.b16 %v328
      %v970 = vunpack.c.l.b16 %v329
      %v971 = vunpack.c.l.b16 %v330
      %v972 = vunpack.c.l.b16 %v331
      %v973 = vunpack.c.l.b16 %v332
      %v974 = vunpack.c.l.b16 %v333
      %v975 = vunpack.c.l.b16 %v334
      %v976 = vunpack.c.l.b16 %v335
      %v977 = vunpack.c.l.b16 %v336
      %v978 = vunpack.c.l.b16 %v337
      %v979 = vunpack.c.l.b16 %v338
      %v980 = vpack.c.b16 %v400, %v960
      %v981 = vpack.c.b16 %v403, %v961
      %v982 = vpack.c.b16 %v406, %v962
      %v983 = vpack.c.b16 %v409, %v963
      %v984 = vpack.c.b16 %v412, %v964
      %v985 = vpack.c.b16 %v415, %v965
      %v986 = vpack.c.b16 %v418, %v966
      %v987 = vpack.c.b16 %v421, %v967
      %v988 = vpack.c.b16 %v424, %v968
      %v989 = vpack.c.b16 %v427, %v969
      %v990 = vpack.c.b16 %v430, %v970
      %v991 = vpack.c.b16 %v433, %v971
      %v992 = vpack.c.b16 %v436, %v972
      %v993 = vpack.c.b16 %v439, %v973
      %v994 = vpack.c.b16 %v442, %v974
      %v995 = vpack.c.b16 %v445, %v975
      %v996 = vpack.c.b16 %v448, %v976
      %v997 = vpack.c.b16 %v451, %v977
      %v998 = vpack.c.b16 %v454, %v978
      %v999 = vpack.c.b16 %v457, %v979
      %vm1000 = vcmask 1046528
      %v1001 = vrot.slane %v980, 1
      %v1002 = vrot.slane %v539, 1
      %v1003 = vsel %vm1000, %v1001, %v1002
      %v1004 = vrot.slane %v981, 1
      %v1005 = vrot.slane %v540, 1
      %v1006 = vsel %vm1000, %v1004, %v1005
      %v1007 = vrot.slane %v982, 1
      %v1008 = vrot.slane %v541, 1
      %v1009 = vsel %vm1000, %v1007, %v1008
      %v1010 = vrot.slane %v983, 1
      %v1011 = vrot.slane %v542, 1
      %v1012 = vsel %vm1000, %v1010, %v1011
      %v1013 = vrot.slane %v984, 1
      %v1014 = vrot.slane %v543, 1
      %v1015 = vsel %vm1000, %v1013, %v1014
      %v1016 = vrot.slane %v985, 1
      %v1017 = vrot.slane %v544, 1
      %v1018 = vsel %vm1000, %v1016, %v1017
      %v1019 = vrot.slane %v986, 1
      %v1020 = vrot.slane %v545, 1
      %v1021 = vsel %vm1000, %v1019, %v1020
      %v1022 = vrot.slane %v987, 1
      %v1023 = vrot.slane %v546, 1
      %v1024 = vsel %vm1000, %v1022, %v1023
      %v1025 = vrot.slane %v988, 1
      %v1026 = vrot.slane %v547, 1
      %v1027 = vsel %vm1000, %v1025, %v1026
      %v1028 = vrot.slane %v989, 1
      %v1029 = vrot.slane %v548, 1
      %v1030 = vsel %vm1000, %v1028, %v1029
      %v1031 = vrot.slane %v990, 1
      %v1032 = vrot.slane %v549, 1
      %v1033 = vsel %vm1000, %v1031, %v1032
      %v1034 = vrot.slane %v991, 1
      %v1035 = vrot.slane %v550, 1
      %v1036 = vsel %vm1000, %v1034, %v1035
      %v1037 = vrot.slane %v992, 1
      %v1038 = vrot.slane %v551, 1
      %v1039 = vsel %vm1000, %v1037, %v1038
      %v1040 = vrot.slane %v993, 1
      %v1041 = vrot.slane %v552, 1
      %v1042 = vsel %vm1000, %v1040, %v1041
      %v1043 = vrot.slane %v994, 1
      %v1044 = vrot.slane %v553, 1
      %v1045 = vsel %vm1000, %v1043, %v1044
      %v1046 = vrot.slane %v995, 1
      %v1047 = vrot.slane %v554, 1
      %v1048 = vsel %vm1000, %v1046, %v1047
      %v1049 = vrot.slane %v996, 1
      %v1050 = vrot.slane %v555, 1
      %v1051 = vsel %vm1000, %v1049, %v1050
      %v1052 = vrot.slane %v997, 1
      %v1053 = vrot.slane %v556, 1
      %v1054 = vsel %vm1000, %v1052, %v1053
      %v1055 = vrot.slane %v998, 1
      %v1056 = vrot.slane %v557, 1
      %v1057 = vsel %vm1000, %v1055, %v1056
      %v1058 = vrot.slane %v999, 1
      %v1059 = vrot.slane %v558, 1
      %v1060 = vsel %vm1000, %v1058, %v1059
      %1061 = vrot.lane.b32.xlu0 %v1003, 32
      %v1062 = vpop.permute.xlu0 %1061
      %1063 = vrot.lane.b32.xlu0 %v1002, 32
      %v1064 = vpop.permute.xlu0 %1063
      %1065 = vrot.lane.b32.xlu0 %v1006, 32
      %v1066 = vpop.permute.xlu0 %1065
      %1067 = vrot.lane.b32.xlu0 %v1005, 32
      %v1068 = vpop.permute.xlu0 %1067
      %1069 = vrot.lane.b32.xlu0 %v1009, 32
      %v1070 = vpop.permute.xlu0 %1069
      %1071 = vrot.lane.b32.xlu0 %v1008, 32
      %v1072 = vpop.permute.xlu0 %1071
      %1073 = vrot.lane.b32.xlu0 %v1012, 32
      %v1074 = vpop.permute.xlu0 %1073
      %1075 = vrot.lane.b32.xlu0 %v1011, 32
      %v1076 = vpop.permute.xlu0 %1075
      %1077 = vrot.lane.b32.xlu0 %v1015, 32
      %v1078 = vpop.permute.xlu0 %1077
      %1079 = vrot.lane.b32.xlu0 %v1014, 32
      %v1080 = vpop.permute.xlu0 %1079
      %1081 = vrot.lane.b32.xlu0 %v1018, 32
      %v1082 = vpop.permute.xlu0 %1081
      %1083 = vrot.lane.b32.xlu0 %v1017, 32
      %v1084 = vpop.permute.xlu0 %1083
      %1085 = vrot.lane.b32.xlu0 %v1021, 32
      %v1086 = vpop.permute.xlu0 %1085
      %1087 = vrot.lane.b32.xlu0 %v1020, 32
      %v1088 = vpop.permute.xlu0 %1087
      %1089 = vrot.lane.b32.xlu0 %v1024, 32
      %v1090 = vpop.permute.xlu0 %1089
      %1091 = vrot.lane.b32.xlu0 %v1023, 32
      %v1092 = vpop.permute.xlu0 %1091
      %1093 = vrot.lane.b32.xlu0 %v1027, 32
      %v1094 = vpop.permute.xlu0 %1093
      %1095 = vrot.lane.b32.xlu0 %v1026, 32
      %v1096 = vpop.permute.xlu0 %1095
      %1097 = vrot.lane.b32.xlu0 %v1030, 32
      %v1098 = vpop.permute.xlu0 %1097
      %1099 = vrot.lane.b32.xlu0 %v1029, 32
      %v1100 = vpop.permute.xlu0 %1099
      %1101 = vrot.lane.b32.xlu0 %v1033, 32
      %v1102 = vpop.permute.xlu0 %1101
      %1103 = vrot.lane.b32.xlu0 %v1032, 32
      %v1104 = vpop.permute.xlu0 %1103
      %1105 = vrot.lane.b32.xlu0 %v1036, 32
      %v1106 = vpop.permute.xlu0 %1105
      %1107 = vrot.lane.b32.xlu0 %v1035, 32
      %v1108 = vpop.permute.xlu0 %1107
      %1109 = vrot.lane.b32.xlu0 %v1039, 32
      %v1110 = vpop.permute.xlu0 %1109
      %1111 = vrot.lane.b32.xlu0 %v1038, 32
      %v1112 = vpop.permute.xlu0 %1111
      %1113 = vrot.lane.b32.xlu0 %v1042, 32
      %v1114 = vpop.permute.xlu0 %1113
      %1115 = vrot.lane.b32.xlu0 %v1041, 32
      %v1116 = vpop.permute.xlu0 %1115
      %1117 = vrot.lane.b32.xlu0 %v1045, 32
      %v1118 = vpop.permute.xlu0 %1117
      %1119 = vrot.lane.b32.xlu0 %v1044, 32
      %v1120 = vpop.permute.xlu0 %1119
      %1121 = vrot.lane.b32.xlu0 %v1048, 32
      %v1122 = vpop.permute.xlu0 %1121
      %1123 = vrot.lane.b32.xlu0 %v1047, 32
      %v1124 = vpop.permute.xlu0 %1123
      %1125 = vrot.lane.b32.xlu0 %v1051, 32
      %v1126 = vpop.permute.xlu0 %1125
      %1127 = vrot.lane.b32.xlu0 %v1050, 32
      %v1128 = vpop.permute.xlu0 %1127
      %1129 = vrot.lane.b32.xlu0 %v1054, 32
      %v1130 = vpop.permute.xlu0 %1129
      %1131 = vrot.lane.b32.xlu0 %v1053, 32
      %v1132 = vpop.permute.xlu0 %1131
      %1133 = vrot.lane.b32.xlu0 %v1057, 32
      %v1134 = vpop.permute.xlu0 %1133
      %1135 = vrot.lane.b32.xlu0 %v1056, 32
      %v1136 = vpop.permute.xlu0 %1135
      %1137 = vrot.lane.b32.xlu0 %v1060, 32
      %v1138 = vpop.permute.xlu0 %1137
      %1139 = vrot.lane.b32.xlu0 %v1059, 32
      %v1140 = vpop.permute.xlu0 %1139
      %vm1141 = vcmask 130048
      %v1143 = vsel %vm1141, %v459, %v861
      %v1146 = vsel %vm1141, %v460, %v863
      %v1148 = vsel %vm1141, %v461, %v865
      %v1151 = vsel %vm1141, %v462, %v867
      %v1153 = vsel %vm1141, %v463, %v869
      %v1156 = vsel %vm1141, %v464, %v871
      %v1158 = vsel %vm1141, %v465, %v873
      %v1161 = vsel %vm1141, %v466, %v875
      %v1163 = vsel %vm1141, %v467, %v877
      %v1166 = vsel %vm1141, %v468, %v879
      %v1168 = vsel %vm1141, %v469, %v881
      %v1171 = vsel %vm1141, %v470, %v883
      %v1173 = vsel %vm1141, %v471, %v885
      %v1176 = vsel %vm1141, %v472, %v887
      %v1178 = vsel %vm1141, %v473, %v889
      %v1181 = vsel %vm1141, %v474, %v891
      %v1183 = vsel %vm1141, %v475, %v893
      %v1186 = vsel %vm1141, %v476, %v895
      %v1188 = vsel %vm1141, %v477, %v897
      %v1191 = vsel %vm1141, %v478, %v899
      %v1193 = vsel %vm1141, %v479, %v901
      %v1196 = vsel %vm1141, %v480, %v903
      %v1198 = vsel %vm1141, %v481, %v905
      %v1201 = vsel %vm1141, %v482, %v907
      %v1203 = vsel %vm1141, %v483, %v909
      %v1206 = vsel %vm1141, %v484, %v911
      %v1208 = vsel %vm1141, %v485, %v913
      %v1211 = vsel %vm1141, %v486, %v915
      %v1213 = vsel %vm1141, %v487, %v917
      %v1216 = vsel %vm1141, %v488, %v919
      %v1218 = vsel %vm1141, %v489, %v921
      %v1221 = vsel %vm1141, %v490, %v923
      %v1223 = vsel %vm1141, %v491, %v925
      %v1226 = vsel %vm1141, %v492, %v927
      %v1228 = vsel %vm1141, %v493, %v929
      %v1231 = vsel %vm1141, %v494, %v931
      %v1233 = vsel %vm1141, %v495, %v933
      %v1236 = vsel %vm1141, %v496, %v935
      %v1238 = vsel %vm1141, %v497, %v937
      %v1241 = vsel %vm1141, %v498, %v939
      %vm1242 = vcmask 261120
      %v1244 = vsel %vm1242, %v1143, %v1062
      %v1246 = vsel %vm1242, %v1146, %v1064
      %v1248 = vsel %vm1242, %v1148, %v1066
      %v1250 = vsel %vm1242, %v1151, %v1068
      %v1252 = vsel %vm1242, %v1153, %v1070
      %v1254 = vsel %vm1242, %v1156, %v1072
      %v1256 = vsel %vm1242, %v1158, %v1074
      %v1258 = vsel %vm1242, %v1161, %v1076
      %v1260 = vsel %vm1242, %v1163, %v1078
      %v1262 = vsel %vm1242, %v1166, %v1080
      %v1264 = vsel %vm1242, %v1168, %v1082
      %v1266 = vsel %vm1242, %v1171, %v1084
      %v1268 = vsel %vm1242, %v1173, %v1086
      %v1270 = vsel %vm1242, %v1176, %v1088
      %v1272 = vsel %vm1242, %v1178, %v1090
      %v1274 = vsel %vm1242, %v1181, %v1092
      %v1276 = vsel %vm1242, %v1183, %v1094
      %v1278 = vsel %vm1242, %v1186, %v1096
      %v1280 = vsel %vm1242, %v1188, %v1098
      %v1282 = vsel %vm1242, %v1191, %v1100
      %v1284 = vsel %vm1242, %v1193, %v1102
      %v1286 = vsel %vm1242, %v1196, %v1104
      %v1288 = vsel %vm1242, %v1198, %v1106
      %v1290 = vsel %vm1242, %v1201, %v1108
      %v1292 = vsel %vm1242, %v1203, %v1110
      %v1294 = vsel %vm1242, %v1206, %v1112
      %v1296 = vsel %vm1242, %v1208, %v1114
      %v1298 = vsel %vm1242, %v1211, %v1116
      %v1300 = vsel %vm1242, %v1213, %v1118
      %v1302 = vsel %vm1242, %v1216, %v1120
      %v1304 = vsel %vm1242, %v1218, %v1122
      %v1306 = vsel %vm1242, %v1221, %v1124
      %v1308 = vsel %vm1242, %v1223, %v1126
      %v1310 = vsel %vm1242, %v1226, %v1128
      %v1312 = vsel %vm1242, %v1228, %v1130
      %v1314 = vsel %vm1242, %v1231, %v1132
      %v1316 = vsel %vm1242, %v1233, %v1134
      %v1318 = vsel %vm1242, %v1236, %v1136
      %v1320 = vsel %vm1242, %v1238, %v1138
      %v1322 = vsel %vm1242, %v1241, %v1140
      %v1363 = vunpack.c.l.b16 %v1244
      %v1364 = vunpack.c.h.b16 %v1244
      %v1365 = vunpack.c.l.b16 %v1246
      %v1366 = vunpack.c.l.b16 %v1248
      %v1367 = vunpack.c.h.b16 %v1248
      %v1368 = vunpack.c.l.b16 %v1250
      %v1369 = vunpack.c.l.b16 %v1252
      %v1370 = vunpack.c.h.b16 %v1252
      %v1371 = vunpack.c.l.b16 %v1254
      %v1372 = vunpack.c.l.b16 %v1256
      %v1373 = vunpack.c.h.b16 %v1256
      %v1374 = vunpack.c.l.b16 %v1258
      %v1375 = vunpack.c.l.b16 %v1260
      %v1376 = vunpack.c.h.b16 %v1260
      %v1377 = vunpack.c.l.b16 %v1262
      %v1378 = vunpack.c.l.b16 %v1264
      %v1379 = vunpack.c.h.b16 %v1264
      %v1380 = vunpack.c.l.b16 %v1266
      %v1381 = vunpack.c.l.b16 %v1268
      %v1382 = vunpack.c.h.b16 %v1268
      %v1383 = vunpack.c.l.b16 %v1270
      %v1384 = vunpack.c.l.b16 %v1272
      %v1385 = vunpack.c.h.b16 %v1272
      %v1386 = vunpack.c.l.b16 %v1274
      %v1387 = vunpack.c.l.b16 %v1276
      %v1388 = vunpack.c.h.b16 %v1276
      %v1389 = vunpack.c.l.b16 %v1278
      %v1390 = vunpack.c.l.b16 %v1280
      %v1391 = vunpack.c.h.b16 %v1280
      %v1392 = vunpack.c.l.b16 %v1282
      %v1393 = vunpack.c.l.b16 %v1284
      %v1394 = vunpack.c.h.b16 %v1284
      %v1395 = vunpack.c.l.b16 %v1286
      %v1396 = vunpack.c.l.b16 %v1288
      %v1397 = vunpack.c.h.b16 %v1288
      %v1398 = vunpack.c.l.b16 %v1290
      %v1399 = vunpack.c.l.b16 %v1292
      %v1400 = vunpack.c.h.b16 %v1292
      %v1401 = vunpack.c.l.b16 %v1294
      %v1402 = vunpack.c.l.b16 %v1296
      %v1403 = vunpack.c.h.b16 %v1296
      %v1404 = vunpack.c.l.b16 %v1298
      %v1405 = vunpack.c.l.b16 %v1300
      %v1406 = vunpack.c.h.b16 %v1300
      %v1407 = vunpack.c.l.b16 %v1302
      %v1408 = vunpack.c.l.b16 %v1304
      %v1409 = vunpack.c.h.b16 %v1304
      %v1410 = vunpack.c.l.b16 %v1306
      %v1411 = vunpack.c.l.b16 %v1308
      %v1412 = vunpack.c.h.b16 %v1308
      %v1413 = vunpack.c.l.b16 %v1310
      %v1414 = vunpack.c.l.b16 %v1312
      %v1415 = vunpack.c.h.b16 %v1312
      %v1416 = vunpack.c.l.b16 %v1314
      %v1417 = vunpack.c.l.b16 %v1316
      %v1418 = vunpack.c.h.b16 %v1316
      %v1419 = vunpack.c.l.b16 %v1318
      %v1420 = vunpack.c.l.b16 %v1320
      %v1421 = vunpack.c.h.b16 %v1320
      %v1422 = vunpack.c.l.b16 %v1322
      %v1423 = vld [vmem:[%s2] sm:$0xf]
      %v1424 = vld [vmem:[%s2 + $0x4] sm:$0xf]
      %v1425 = vld [vmem:[%s2 + $0x8] sm:$0xf]
      %v1426 = vld [vmem:[%s2 + $0xc] sm:$0xf]
      %v1427 = vld [vmem:[%s2 + $0x10] sm:$0xf]
      %v1428 = vld [vmem:[%s2 + $0x14] sm:$0xf]
      %s1429 = scalar_lea.vmem %s226, 16
      %v1430 = vld [vmem:[%s1429] sm:$0xf]
      %v1431 = vld [vmem:[%s1429 + $0x4] sm:$0xf]
      %v1432 = vld [vmem:[%s1429 + $0x8] sm:$0xf]
      %v1433 = vld [vmem:[%s1429 + $0x10] sm:$0xf]
      %v1434 = vld [vmem:[%s1429 + $0x14] sm:$0xf]
      %v1435 = vld [vmem:[%s1429 + $0x18] sm:$0xf]
      %v1436 = vld [vmem:[%s1429 + $0x20] sm:$0xf]
      %v1437 = vld [vmem:[%s1429 + $0x24] sm:$0xf]
      %v1438 = vld [vmem:[%s1429 + $0x28] sm:$0xf]
      %v1439 = vld [vmem:[%s1429 + $0x30] sm:$0xf]
      %v1440 = vld [vmem:[%s1429 + $0x34] sm:$0xf]
      %v1441 = vld [vmem:[%s1429 + $0x38] sm:$0xf]
      %v1442 = vld [vmem:[%s1429 + $0x40] sm:$0xf]
      %v1443 = vld [vmem:[%s1429 + $0x44] sm:$0xf]
      %v1444 = vld [vmem:[%s1429 + $0x48] sm:$0xf]
      %v1445 = vld [vmem:[%s1429 + $0x50] sm:$0xf]
      %v1446 = vld [vmem:[%s1429 + $0x54] sm:$0xf]
      %v1447 = vld [vmem:[%s1429 + $0x58] sm:$0xf]
      %v1448 = vld [vmem:[%s1429 + $0x60] sm:$0xf]
      %v1449 = vld [vmem:[%s1429 + $0x64] sm:$0xf]
      %v1450 = vld [vmem:[%s1429 + $0x68] sm:$0xf]
      %v1451 = vld [vmem:[%s1429 + $0x70] sm:$0xf]
      %v1452 = vld [vmem:[%s1429 + $0x74] sm:$0xf]
      %v1453 = vld [vmem:[%s1429 + $0x78] sm:$0xf]
      %v1454 = vld [vmem:[%s1429 + $0x80] sm:$0xf]
      %v1455 = vld [vmem:[%s1429 + $0x84] sm:$0xf]
      %v1456 = vld [vmem:[%s1429 + $0x88] sm:$0xf]
      %v1457 = vld [vmem:[%s1429 + $0x90] sm:$0xf]
      %v1458 = vld [vmem:[%s1429 + $0x94] sm:$0xf]
      %v1459 = vld [vmem:[%s1429 + $0x98] sm:$0xf]
      %v1460 = vld [vmem:[%s1429 + $0xa0] sm:$0xf]
      %v1461 = vld [vmem:[%s1429 + $0xa4] sm:$0xf]
      %v1462 = vld [vmem:[%s1429 + $0xa8] sm:$0xf]
      %v1463 = vld [vmem:[%s1429 + $0xb0] sm:$0xf]
      %v1464 = vld [vmem:[%s1429 + $0xb4] sm:$0xf]
      %v1465 = vld [vmem:[%s1429 + $0xb8] sm:$0xf]
      %v1466 = vld [vmem:[%s1429 + $0xc0] sm:$0xf]
      %v1467 = vld [vmem:[%s1429 + $0xc4] sm:$0xf]
      %v1468 = vld [vmem:[%s1429 + $0xc8] sm:$0xf]
      %v1469 = vld [vmem:[%s1429 + $0xd0] sm:$0xf]
      %v1470 = vld [vmem:[%s1429 + $0xd4] sm:$0xf]
      %v1471 = vld [vmem:[%s1429 + $0xd8] sm:$0xf]
      %v1472 = vld [vmem:[%s1429 + $0xe0] sm:$0xf]
      %v1473 = vld [vmem:[%s1429 + $0xe4] sm:$0xf]
      %v1474 = vld [vmem:[%s1429 + $0xe8] sm:$0xf]
      %v1475 = vld [vmem:[%s1429 + $0xf0] sm:$0xf]
      %v1476 = vld [vmem:[%s1429 + $0xf4] sm:$0xf]
      %v1477 = vld [vmem:[%s1429 + $0xf8] sm:$0xf]
      %v1478 = vld [vmem:[%s1429 + $0x100] sm:$0xf]
      %v1479 = vld [vmem:[%s1429 + $0x104] sm:$0xf]
      %v1480 = vld [vmem:[%s1429 + $0x108] sm:$0xf]
      %v1481 = vld [vmem:[%s1429 + $0x110] sm:$0xf]
      %v1482 = vld [vmem:[%s1429 + $0x114] sm:$0xf]
      %v1483 = vld [vmem:[%s1429 + $0x118] sm:$0xf]
      %v1484 = vld [vmem:[%s1429 + $0x120] sm:$0xf]
      %v1485 = vld [vmem:[%s1429 + $0x124] sm:$0xf]
      %v1486 = vld [vmem:[%s1429 + $0x128] sm:$0xf]
      %v1487 = vld [vmem:[%s1429 + $0x130] sm:$0xf]
      %v1488 = vld [vmem:[%s1429 + $0x134] sm:$0xf]
      %v1489 = vld [vmem:[%s1429 + $0x138] sm:$0xf]
      %v1490 = vld [vmem:[%s1429 + $0xc] sm:$0x1]
      %v1491 = vld [vmem:[%s1429 + $0x1c] sm:$0x1]
      %v1492 = vld [vmem:[%s1429 + $0x2c] sm:$0x1]
      %v1493 = vld [vmem:[%s1429 + $0x3c] sm:$0x1]
      %v1494 = vld [vmem:[%s1429 + $0x4c] sm:$0x1]
      %v1495 = vld [vmem:[%s1429 + $0x5c] sm:$0x1]
      %v1496 = vld [vmem:[%s1429 + $0x6c] sm:$0x1]
      %v1497 = vld [vmem:[%s1429 + $0x7c] sm:$0x1]
      %v1498 = vld [vmem:[%s1429 + $0x8c] sm:$0x1]
      %v1499 = vld [vmem:[%s1429 + $0x9c] sm:$0x1]
      %v1500 = vld [vmem:[%s1429 + $0xac] sm:$0x1]
      %v1501 = vld [vmem:[%s1429 + $0xbc] sm:$0x1]
      %v1502 = vld [vmem:[%s1429 + $0xcc] sm:$0x1]
      %v1503 = vld [vmem:[%s1429 + $0xdc] sm:$0x1]
      %v1504 = vld [vmem:[%s1429 + $0xec] sm:$0x1]
      %v1505 = vld [vmem:[%s1429 + $0xfc] sm:$0x1]
      %v1506 = vld [vmem:[%s1429 + $0x10c] sm:$0x1]
      %v1507 = vld [vmem:[%s1429 + $0x11c] sm:$0x1]
      %v1508 = vld [vmem:[%s1429 + $0x12c] sm:$0x1]
      %v1509 = vld [vmem:[%s1429 + $0x13c] sm:$0x1]
      %v1510 = vld [vmem:[%s1429] sm:$0xe]
      %v1511 = vld [vmem:[%s1429 + $0x10] sm:$0xe]
      %v1512 = vld [vmem:[%s1429 + $0x20] sm:$0xe]
      %v1513 = vld [vmem:[%s1429 + $0x30] sm:$0xe]
      %v1514 = vld [vmem:[%s1429 + $0x40] sm:$0xe]
      %v1515 = vld [vmem:[%s1429 + $0x50] sm:$0xe]
      %v1516 = vld [vmem:[%s1429 + $0x60] sm:$0xe]
      %v1517 = vld [vmem:[%s1429 + $0x70] sm:$0xe]
      %v1518 = vld [vmem:[%s1429 + $0x80] sm:$0xe]
      %v1519 = vld [vmem:[%s1429 + $0x90] sm:$0xe]
      %v1520 = vld [vmem:[%s1429 + $0xa0] sm:$0xe]
      %v1521 = vld [vmem:[%s1429 + $0xb0] sm:$0xe]
      %v1522 = vld [vmem:[%s1429 + $0xc0] sm:$0xe]
      %v1523 = vld [vmem:[%s1429 + $0xd0] sm:$0xe]
      %v1524 = vld [vmem:[%s1429 + $0xe0] sm:$0xe]
      %v1525 = vld [vmem:[%s1429 + $0xf0] sm:$0xe]
      %v1526 = vld [vmem:[%s1429 + $0x100] sm:$0xe]
      %v1527 = vld [vmem:[%s1429 + $0x110] sm:$0xe]
      %v1528 = vld [vmem:[%s1429 + $0x120] sm:$0xe]
      %v1529 = vld [vmem:[%s1429 + $0x130] sm:$0xe]
      %v1590 = vunpack.c.l.b16 %v1430
      %v1591 = vunpack.c.l.b16 %v1431
      %v1592 = vunpack.c.l.b16 %v1432
      %v1593 = vunpack.c.l.b16 %v1433
      %v1594 = vunpack.c.l.b16 %v1434
      %v1595 = vunpack.c.l.b16 %v1435
      %v1596 = vunpack.c.l.b16 %v1436
      %v1597 = vunpack.c.l.b16 %v1437
      %v1598 = vunpack.c.l.b16 %v1438
      %v1599 = vunpack.c.l.b16 %v1439
      %v1600 = vunpack.c.l.b16 %v1440
      %v1601 = vunpack.c.l.b16 %v1441
      %v1602 = vunpack.c.l.b16 %v1442
      %v1603 = vunpack.c.l.b16 %v1443
      %v1604 = vunpack.c.l.b16 %v1444
      %v1605 = vunpack.c.l.b16 %v1445
      %v1606 = vunpack.c.l.b16 %v1446
      %v1607 = vunpack.c.l.b16 %v1447
      %v1608 = vunpack.c.l.b16 %v1448
      %v1609 = vunpack.c.l.b16 %v1449
      %v1610 = vunpack.c.l.b16 %v1450
      %v1611 = vunpack.c.l.b16 %v1451
      %v1612 = vunpack.c.l.b16 %v1452
      %v1613 = vunpack.c.l.b16 %v1453
      %v1614 = vunpack.c.l.b16 %v1454
      %v1615 = vunpack.c.l.b16 %v1455
      %v1616 = vunpack.c.l.b16 %v1456
      %v1617 = vunpack.c.l.b16 %v1457
      %v1618 = vunpack.c.l.b16 %v1458
      %v1619 = vunpack.c.l.b16 %v1459
      %v1620 = vunpack.c.l.b16 %v1460
      %v1621 = vunpack.c.l.b16 %v1461
      %v1622 = vunpack.c.l.b16 %v1462
      %v1623 = vunpack.c.l.b16 %v1463
      %v1624 = vunpack.c.l.b16 %v1464
      %v1625 = vunpack.c.l.b16 %v1465
      %v1626 = vunpack.c.l.b16 %v1466
      %v1627 = vunpack.c.l.b16 %v1467
      %v1628 = vunpack.c.l.b16 %v1468
      %v1629 = vunpack.c.l.b16 %v1469
      %v1630 = vunpack.c.l.b16 %v1470
      %v1631 = vunpack.c.l.b16 %v1471
      %v1632 = vunpack.c.l.b16 %v1472
      %v1633 = vunpack.c.l.b16 %v1473
      %v1634 = vunpack.c.l.b16 %v1474
      %v1635 = vunpack.c.l.b16 %v1475
      %v1636 = vunpack.c.l.b16 %v1476
      %v1637 = vunpack.c.l.b16 %v1477
      %v1638 = vunpack.c.l.b16 %v1478
      %v1639 = vunpack.c.l.b16 %v1479
      %v1640 = vunpack.c.l.b16 %v1480
      %v1641 = vunpack.c.l.b16 %v1481
      %v1642 = vunpack.c.l.b16 %v1482
      %v1643 = vunpack.c.l.b16 %v1483
      %v1644 = vunpack.c.l.b16 %v1484
      %v1645 = vunpack.c.l.b16 %v1485
      %v1646 = vunpack.c.l.b16 %v1486
      %v1647 = vunpack.c.l.b16 %v1487
      %v1648 = vunpack.c.l.b16 %v1488
      %v1649 = vunpack.c.l.b16 %v1489
      %v1650 = vpack.c.b16 %v1591, %v1590
      %v1651 = vpack.c.b16 %v1592, %v1592
      %v1652 = vpack.c.b16 %v1594, %v1593
      %v1653 = vpack.c.b16 %v1595, %v1595
      %v1654 = vpack.c.b16 %v1597, %v1596
      %v1655 = vpack.c.b16 %v1598, %v1598
      %v1656 = vpack.c.b16 %v1600, %v1599
      %v1657 = vpack.c.b16 %v1601, %v1601
      %v1658 = vpack.c.b16 %v1603, %v1602
      %v1659 = vpack.c.b16 %v1604, %v1604
      %v1660 = vpack.c.b16 %v1606, %v1605
      %v1661 = vpack.c.b16 %v1607, %v1607
      %v1662 = vpack.c.b16 %v1609, %v1608
      %v1663 = vpack.c.b16 %v1610, %v1610
      %v1664 = vpack.c.b16 %v1612, %v1611
      %v1665 = vpack.c.b16 %v1613, %v1613
      %v1666 = vpack.c.b16 %v1615, %v1614
      %v1667 = vpack.c.b16 %v1616, %v1616
      %v1668 = vpack.c.b16 %v1618, %v1617
      %v1669 = vpack.c.b16 %v1619, %v1619
      %v1670 = vpack.c.b16 %v1621, %v1620
      %v1671 = vpack.c.b16 %v1622, %v1622
      %v1672 = vpack.c.b16 %v1624, %v1623
      %v1673 = vpack.c.b16 %v1625, %v1625
      %v1674 = vpack.c.b16 %v1627, %v1626
      %v1675 = vpack.c.b16 %v1628, %v1628
      %v1676 = vpack.c.b16 %v1630, %v1629
      %v1677 = vpack.c.b16 %v1631, %v1631
      %v1678 = vpack.c.b16 %v1633, %v1632
      %v1679 = vpack.c.b16 %v1634, %v1634
      %v1680 = vpack.c.b16 %v1636, %v1635
      %v1681 = vpack.c.b16 %v1637, %v1637
      %v1682 = vpack.c.b16 %v1639, %v1638
      %v1683 = vpack.c.b16 %v1640, %v1640
      %v1684 = vpack.c.b16 %v1642, %v1641
      %v1685 = vpack.c.b16 %v1643, %v1643
      %v1686 = vpack.c.b16 %v1645, %v1644
      %v1687 = vpack.c.b16 %v1646, %v1646
      %v1688 = vpack.c.b16 %v1648, %v1647
      %v1689 = vpack.c.b16 %v1649, %v1649
      %v1710 = vunpack.c.l.b16 %v1490
      %v1711 = vunpack.c.l.b16 %v1491
      %v1712 = vunpack.c.l.b16 %v1492
      %v1713 = vunpack.c.l.b16 %v1493
      %v1714 = vunpack.c.l.b16 %v1494
      %v1715 = vunpack.c.l.b16 %v1495
      %v1716 = vunpack.c.l.b16 %v1496
      %v1717 = vunpack.c.l.b16 %v1497
      %v1718 = vunpack.c.l.b16 %v1498
      %v1719 = vunpack.c.l.b16 %v1499
      %v1720 = vunpack.c.l.b16 %v1500
      %v1721 = vunpack.c.l.b16 %v1501
      %v1722 = vunpack.c.l.b16 %v1502
      %v1723 = vunpack.c.l.b16 %v1503
      %v1724 = vunpack.c.l.b16 %v1504
      %v1725 = vunpack.c.l.b16 %v1505
      %v1726 = vunpack.c.l.b16 %v1506
      %v1727 = vunpack.c.l.b16 %v1507
      %v1728 = vunpack.c.l.b16 %v1508
      %v1729 = vunpack.c.l.b16 %v1509
      %v1730 = vpack.c.b16 %v1710, %v1592
      %v1731 = vpack.c.b16 %v1711, %v1595
      %v1732 = vpack.c.b16 %v1712, %v1598
      %v1733 = vpack.c.b16 %v1713, %v1601
      %v1734 = vpack.c.b16 %v1714, %v1604
      %v1735 = vpack.c.b16 %v1715, %v1607
      %v1736 = vpack.c.b16 %v1716, %v1610
      %v1737 = vpack.c.b16 %v1717, %v1613
      %v1738 = vpack.c.b16 %v1718, %v1616
      %v1739 = vpack.c.b16 %v1719, %v1619
      %v1740 = vpack.c.b16 %v1720, %v1622
      %v1741 = vpack.c.b16 %v1721, %v1625
      %v1742 = vpack.c.b16 %v1722, %v1628
      %v1743 = vpack.c.b16 %v1723, %v1631
      %v1744 = vpack.c.b16 %v1724, %v1634
      %v1745 = vpack.c.b16 %v1725, %v1637
      %v1746 = vpack.c.b16 %v1726, %v1640
      %v1747 = vpack.c.b16 %v1727, %v1643
      %v1748 = vpack.c.b16 %v1728, %v1646
      %v1749 = vpack.c.b16 %v1729, %v1649
      %v1751 = vshrl.u32 %v1650, 16
      %v1753 = vshll.u32 %v1650, 16
      %v1755 = vrot.slane %v1753, 1
      %v1756 = vor.u32 %v1751, %v1755
      %v1758 = vshll.u32 %v1730, 16
      %v1760 = vrot.slane %v1758, 1
      %v1761 = vsel %vm559, %v1756, %v1760
      %v1762 = vshrl.u32 %v1730, 16
      %v1764 = vor.u32 %v1762, %v1760
      %v1766 = vshrl.u32 %v1652, 16
      %v1768 = vshll.u32 %v1652, 16
      %v1770 = vrot.slane %v1768, 1
      %v1771 = vor.u32 %v1766, %v1770
      %v1773 = vshll.u32 %v1731, 16
      %v1775 = vrot.slane %v1773, 1
      %v1776 = vsel %vm559, %v1771, %v1775
      %v1777 = vshrl.u32 %v1731, 16
      %v1779 = vor.u32 %v1777, %v1775
      %v1781 = vshrl.u32 %v1654, 16
      %v1783 = vshll.u32 %v1654, 16
      %v1785 = vrot.slane %v1783, 1
      %v1786 = vor.u32 %v1781, %v1785
      %v1788 = vshll.u32 %v1732, 16
      %v1790 = vrot.slane %v1788, 1
      %v1791 = vsel %vm559, %v1786, %v1790
      %v1792 = vshrl.u32 %v1732, 16
      %v1794 = vor.u32 %v1792, %v1790
      %v1796 = vshrl.u32 %v1656, 16
      %v1798 = vshll.u32 %v1656, 16
      %v1800 = vrot.slane %v1798, 1
      %v1801 = vor.u32 %v1796, %v1800
      %v1803 = vshll.u32 %v1733, 16
      %v1805 = vrot.slane %v1803, 1
      %v1806 = vsel %vm559, %v1801, %v1805
      %v1807 = vshrl.u32 %v1733, 16
      %v1809 = vor.u32 %v1807, %v1805
      %v1811 = vshrl.u32 %v1658, 16
      %v1813 = vshll.u32 %v1658, 16
      %v1815 = vrot.slane %v1813, 1
      %v1816 = vor.u32 %v1811, %v1815
      %v1818 = vshll.u32 %v1734, 16
      %v1820 = vrot.slane %v1818, 1
      %v1821 = vsel %vm559, %v1816, %v1820
      %v1822 = vshrl.u32 %v1734, 16
      %v1824 = vor.u32 %v1822, %v1820
      %v1826 = vshrl.u32 %v1660, 16
      %v1828 = vshll.u32 %v1660, 16
      %v1830 = vrot.slane %v1828, 1
      %v1831 = vor.u32 %v1826, %v1830
      %v1833 = vshll.u32 %v1735, 16
      %v1835 = vrot.slane %v1833, 1
      %v1836 = vsel %vm559, %v1831, %v1835
      %v1837 = vshrl.u32 %v1735, 16
      %v1839 = vor.u32 %v1837, %v1835
      %v1841 = vshrl.u32 %v1662, 16
      %v1843 = vshll.u32 %v1662, 16
      %v1845 = vrot.slane %v1843, 1
      %v1846 = vor.u32 %v1841, %v1845
      %v1848 = vshll.u32 %v1736, 16
      %v1850 = vrot.slane %v1848, 1
      %v1851 = vsel %vm559, %v1846, %v1850
      %v1852 = vshrl.u32 %v1736, 16
      %v1854 = vor.u32 %v1852, %v1850
      %v1856 = vshrl.u32 %v1664, 16
      %v1858 = vshll.u32 %v1664, 16
      %v1860 = vrot.slane %v1858, 1
      %v1861 = vor.u32 %v1856, %v1860
      %v1863 = vshll.u32 %v1737, 16
      %v1865 = vrot.slane %v1863, 1
      %v1866 = vsel %vm559, %v1861, %v1865
      %v1867 = vshrl.u32 %v1737, 16
      %v1869 = vor.u32 %v1867, %v1865
      %v1871 = vshrl.u32 %v1666, 16
      %v1873 = vshll.u32 %v1666, 16
      %v1875 = vrot.slane %v1873, 1
      %v1876 = vor.u32 %v1871, %v1875
      %v1878 = vshll.u32 %v1738, 16
      %v1880 = vrot.slane %v1878, 1
      %v1881 = vsel %vm559, %v1876, %v1880
      %v1882 = vshrl.u32 %v1738, 16
      %v1884 = vor.u32 %v1882, %v1880
      %v1886 = vshrl.u32 %v1668, 16
      %v1888 = vshll.u32 %v1668, 16
      %v1890 = vrot.slane %v1888, 1
      %v1891 = vor.u32 %v1886, %v1890
      %v1893 = vshll.u32 %v1739, 16
      %v1895 = vrot.slane %v1893, 1
      %v1896 = vsel %vm559, %v1891, %v1895
      %v1897 = vshrl.u32 %v1739, 16
      %v1899 = vor.u32 %v1897, %v1895
      %v1901 = vshrl.u32 %v1670, 16
      %v1903 = vshll.u32 %v1670, 16
      %v1905 = vrot.slane %v1903, 1
      %v1906 = vor.u32 %v1901, %v1905
      %v1908 = vshll.u32 %v1740, 16
      %v1910 = vrot.slane %v1908, 1
      %v1911 = vsel %vm559, %v1906, %v1910
      %v1912 = vshrl.u32 %v1740, 16
      %v1914 = vor.u32 %v1912, %v1910
      %v1916 = vshrl.u32 %v1672, 16
      %v1918 = vshll.u32 %v1672, 16
      %v1920 = vrot.slane %v1918, 1
      %v1921 = vor.u32 %v1916, %v1920
      %v1923 = vshll.u32 %v1741, 16
      %v1925 = vrot.slane %v1923, 1
      %v1926 = vsel %vm559, %v1921, %v1925
      %v1927 = vshrl.u32 %v1741, 16
      %v1929 = vor.u32 %v1927, %v1925
      %v1931 = vshrl.u32 %v1674, 16
      %v1933 = vshll.u32 %v1674, 16
      %v1935 = vrot.slane %v1933, 1
      %v1936 = vor.u32 %v1931, %v1935
      %v1938 = vshll.u32 %v1742, 16
      %v1940 = vrot.slane %v1938, 1
      %v1941 = vsel %vm559, %v1936, %v1940
      %v1942 = vshrl.u32 %v1742, 16
      %v1944 = vor.u32 %v1942, %v1940
      %v1946 = vshrl.u32 %v1676, 16
      %v1948 = vshll.u32 %v1676, 16
      %v1950 = vrot.slane %v1948, 1
      %v1951 = vor.u32 %v1946, %v1950
      %v1953 = vshll.u32 %v1743, 16
      %v1955 = vrot.slane %v1953, 1
      %v1956 = vsel %vm559, %v1951, %v1955
      %v1957 = vshrl.u32 %v1743, 16
      %v1959 = vor.u32 %v1957, %v1955
      %v1961 = vshrl.u32 %v1678, 16
      %v1963 = vshll.u32 %v1678, 16
      %v1965 = vrot.slane %v1963, 1
      %v1966 = vor.u32 %v1961, %v1965
      %v1968 = vshll.u32 %v1744, 16
      %v1970 = vrot.slane %v1968, 1
      %v1971 = vsel %vm559, %v1966, %v1970
      %v1972 = vshrl.u32 %v1744, 16
      %v1974 = vor.u32 %v1972, %v1970
      %v1976 = vshrl.u32 %v1680, 16
      %v1978 = vshll.u32 %v1680, 16
      %v1980 = vrot.slane %v1978, 1
      %v1981 = vor.u32 %v1976, %v1980
      %v1983 = vshll.u32 %v1745, 16
      %v1985 = vrot.slane %v1983, 1
      %v1986 = vsel %vm559, %v1981, %v1985
      %v1987 = vshrl.u32 %v1745, 16
      %v1989 = vor.u32 %v1987, %v1985
      %v1991 = vshrl.u32 %v1682, 16
      %v1993 = vshll.u32 %v1682, 16
      %v1995 = vrot.slane %v1993, 1
      %v1996 = vor.u32 %v1991, %v1995
      %v1998 = vshll.u32 %v1746, 16
      %v2000 = vrot.slane %v1998, 1
      %v2001 = vsel %vm559, %v1996, %v2000
      %v2002 = vshrl.u32 %v1746, 16
      %v2004 = vor.u32 %v2002, %v2000
      %v2006 = vshrl.u32 %v1684, 16
      %v2008 = vshll.u32 %v1684, 16
      %v2010 = vrot.slane %v2008, 1
      %v2011 = vor.u32 %v2006, %v2010
      %v2013 = vshll.u32 %v1747, 16
      %v2015 = vrot.slane %v2013, 1
      %v2016 = vsel %vm559, %v2011, %v2015
      %v2017 = vshrl.u32 %v1747, 16
      %v2019 = vor.u32 %v2017, %v2015
      %v2021 = vshrl.u32 %v1686, 16
      %v2023 = vshll.u32 %v1686, 16
      %v2025 = vrot.slane %v2023, 1
      %v2026 = vor.u32 %v2021, %v2025
      %v2028 = vshll.u32 %v1748, 16
      %v2030 = vrot.slane %v2028, 1
      %v2031 = vsel %vm559, %v2026, %v2030
      %v2032 = vshrl.u32 %v1748, 16
      %v2034 = vor.u32 %v2032, %v2030
      %v2036 = vshrl.u32 %v1688, 16
      %v2038 = vshll.u32 %v1688, 16
      %v2040 = vrot.slane %v2038, 1
      %v2041 = vor.u32 %v2036, %v2040
      %v2043 = vshll.u32 %v1749, 16
      %v2045 = vrot.slane %v2043, 1
      %v2046 = vsel %vm559, %v2041, %v2045
      %v2047 = vshrl.u32 %v1749, 16
      %v2049 = vor.u32 %v2047, %v2045
      %2050 = vrot.lane.b32.xlu0 %v1761, 16
      %v2051 = vpop.permute.xlu0 %2050
      %2052 = vrot.lane.b32.xlu0 %v1764, 16
      %v2053 = vpop.permute.xlu0 %2052
      %2054 = vrot.lane.b32.xlu0 %v1776, 16
      %v2055 = vpop.permute.xlu0 %2054
      %2056 = vrot.lane.b32.xlu0 %v1779, 16
      %v2057 = vpop.permute.xlu0 %2056
      %2058 = vrot.lane.b32.xlu0 %v1791, 16
      %v2059 = vpop.permute.xlu0 %2058
      %2060 = vrot.lane.b32.xlu0 %v1794, 16
      %v2061 = vpop.permute.xlu0 %2060
      %2062 = vrot.lane.b32.xlu0 %v1806, 16
      %v2063 = vpop.permute.xlu0 %2062
      %2064 = vrot.lane.b32.xlu0 %v1809, 16
      %v2065 = vpop.permute.xlu0 %2064
      %2066 = vrot.lane.b32.xlu0 %v1821, 16
      %v2067 = vpop.permute.xlu0 %2066
      %2068 = vrot.lane.b32.xlu0 %v1824, 16
      %v2069 = vpop.permute.xlu0 %2068
      %2070 = vrot.lane.b32.xlu0 %v1836, 16
      %v2071 = vpop.permute.xlu0 %2070
      %2072 = vrot.lane.b32.xlu0 %v1839, 16
      %v2073 = vpop.permute.xlu0 %2072
      %2074 = vrot.lane.b32.xlu0 %v1851, 16
      %v2075 = vpop.permute.xlu0 %2074
      %2076 = vrot.lane.b32.xlu0 %v1854, 16
      %v2077 = vpop.permute.xlu0 %2076
      %2078 = vrot.lane.b32.xlu0 %v1866, 16
      %v2079 = vpop.permute.xlu0 %2078
      %2080 = vrot.lane.b32.xlu0 %v1869, 16
      %v2081 = vpop.permute.xlu0 %2080
      %2082 = vrot.lane.b32.xlu0 %v1881, 16
      %v2083 = vpop.permute.xlu0 %2082
      %2084 = vrot.lane.b32.xlu0 %v1884, 16
      %v2085 = vpop.permute.xlu0 %2084
      %2086 = vrot.lane.b32.xlu0 %v1896, 16
      %v2087 = vpop.permute.xlu0 %2086
      %2088 = vrot.lane.b32.xlu0 %v1899, 16
      %v2089 = vpop.permute.xlu0 %2088
      %2090 = vrot.lane.b32.xlu0 %v1911, 16
      %v2091 = vpop.permute.xlu0 %2090
      %2092 = vrot.lane.b32.xlu0 %v1914, 16
      %v2093 = vpop.permute.xlu0 %2092
      %2094 = vrot.lane.b32.xlu0 %v1926, 16
      %v2095 = vpop.permute.xlu0 %2094
      %2096 = vrot.lane.b32.xlu0 %v1929, 16
      %v2097 = vpop.permute.xlu0 %2096
      %2098 = vrot.lane.b32.xlu0 %v1941, 16
      %v2099 = vpop.permute.xlu0 %2098
      %2100 = vrot.lane.b32.xlu0 %v1944, 16
      %v2101 = vpop.permute.xlu0 %2100
      %2102 = vrot.lane.b32.xlu0 %v1956, 16
      %v2103 = vpop.permute.xlu0 %2102
      %2104 = vrot.lane.b32.xlu0 %v1959, 16
      %v2105 = vpop.permute.xlu0 %2104
      %2106 = vrot.lane.b32.xlu0 %v1971, 16
      %v2107 = vpop.permute.xlu0 %2106
      %2108 = vrot.lane.b32.xlu0 %v1974, 16
      %v2109 = vpop.permute.xlu0 %2108
      %2110 = vrot.lane.b32.xlu0 %v1986, 16
      %v2111 = vpop.permute.xlu0 %2110
      %2112 = vrot.lane.b32.xlu0 %v1989, 16
      %v2113 = vpop.permute.xlu0 %2112
      %2114 = vrot.lane.b32.xlu0 %v2001, 16
      %v2115 = vpop.permute.xlu0 %2114
      %2116 = vrot.lane.b32.xlu0 %v2004, 16
      %v2117 = vpop.permute.xlu0 %2116
      %2118 = vrot.lane.b32.xlu0 %v2016, 16
      %v2119 = vpop.permute.xlu0 %2118
      %2120 = vrot.lane.b32.xlu0 %v2019, 16
      %v2121 = vpop.permute.xlu0 %2120
      %2122 = vrot.lane.b32.xlu0 %v2031, 16
      %v2123 = vpop.permute.xlu0 %2122
      %2124 = vrot.lane.b32.xlu0 %v2034, 16
      %v2125 = vpop.permute.xlu0 %2124
      %2126 = vrot.lane.b32.xlu0 %v2046, 16
      %v2127 = vpop.permute.xlu0 %2126
      %2128 = vrot.lane.b32.xlu0 %v2049, 16
      %v2129 = vpop.permute.xlu0 %2128
      %v2150 = vunpack.c.l.b16 %v1510
      %v2151 = vunpack.c.l.b16 %v1511
      %v2152 = vunpack.c.l.b16 %v1512
      %v2153 = vunpack.c.l.b16 %v1513
      %v2154 = vunpack.c.l.b16 %v1514
      %v2155 = vunpack.c.l.b16 %v1515
      %v2156 = vunpack.c.l.b16 %v1516
      %v2157 = vunpack.c.l.b16 %v1517
      %v2158 = vunpack.c.l.b16 %v1518
      %v2159 = vunpack.c.l.b16 %v1519
      %v2160 = vunpack.c.l.b16 %v1520
      %v2161 = vunpack.c.l.b16 %v1521
      %v2162 = vunpack.c.l.b16 %v1522
      %v2163 = vunpack.c.l.b16 %v1523
      %v2164 = vunpack.c.l.b16 %v1524
      %v2165 = vunpack.c.l.b16 %v1525
      %v2166 = vunpack.c.l.b16 %v1526
      %v2167 = vunpack.c.l.b16 %v1527
      %v2168 = vunpack.c.l.b16 %v1528
      %v2169 = vunpack.c.l.b16 %v1529
      %v2170 = vpack.c.b16 %v1591, %v2150
      %v2171 = vpack.c.b16 %v1594, %v2151
      %v2172 = vpack.c.b16 %v1597, %v2152
      %v2173 = vpack.c.b16 %v1600, %v2153
      %v2174 = vpack.c.b16 %v1603, %v2154
      %v2175 = vpack.c.b16 %v1606, %v2155
      %v2176 = vpack.c.b16 %v1609, %v2156
      %v2177 = vpack.c.b16 %v1612, %v2157
      %v2178 = vpack.c.b16 %v1615, %v2158
      %v2179 = vpack.c.b16 %v1618, %v2159
      %v2180 = vpack.c.b16 %v1621, %v2160
      %v2181 = vpack.c.b16 %v1624, %v2161
      %v2182 = vpack.c.b16 %v1627, %v2162
      %v2183 = vpack.c.b16 %v1630, %v2163
      %v2184 = vpack.c.b16 %v1633, %v2164
      %v2185 = vpack.c.b16 %v1636, %v2165
      %v2186 = vpack.c.b16 %v1639, %v2166
      %v2187 = vpack.c.b16 %v1642, %v2167
      %v2188 = vpack.c.b16 %v1645, %v2168
      %v2189 = vpack.c.b16 %v1648, %v2169
      %v2190 = vrot.slane %v2170, 1
      %v2191 = vrot.slane %v1730, 1
      %v2192 = vsel %vm1000, %v2190, %v2191
      %v2193 = vrot.slane %v2171, 1
      %v2194 = vrot.slane %v1731, 1
      %v2195 = vsel %vm1000, %v2193, %v2194
      %v2196 = vrot.slane %v2172, 1
      %v2197 = vrot.slane %v1732, 1
      %v2198 = vsel %vm1000, %v2196, %v2197
      %v2199 = vrot.slane %v2173, 1
      %v2200 = vrot.slane %v1733, 1
      %v2201 = vsel %vm1000, %v2199, %v2200
      %v2202 = vrot.slane %v2174, 1
      %v2203 = vrot.slane %v1734, 1
      %v2204 = vsel %vm1000, %v2202, %v2203
      %v2205 = vrot.slane %v2175, 1
      %v2206 = vrot.slane %v1735, 1
      %v2207 = vsel %vm1000, %v2205, %v2206
      %v2208 = vrot.slane %v2176, 1
      %v2209 = vrot.slane %v1736, 1
      %v2210 = vsel %vm1000, %v2208, %v2209
      %v2211 = vrot.slane %v2177, 1
      %v2212 = vrot.slane %v1737, 1
      %v2213 = vsel %vm1000, %v2211, %v2212
      %v2214 = vrot.slane %v2178, 1
      %v2215 = vrot.slane %v1738, 1
      %v2216 = vsel %vm1000, %v2214, %v2215
      %v2217 = vrot.slane %v2179, 1
      %v2218 = vrot.slane %v1739, 1
      %v2219 = vsel %vm1000, %v2217, %v2218
      %v2220 = vrot.slane %v2180, 1
      %v2221 = vrot.slane %v1740, 1
      %v2222 = vsel %vm1000, %v2220, %v2221
      %v2223 = vrot.slane %v2181, 1
      %v2224 = vrot.slane %v1741, 1
      %v2225 = vsel %vm1000, %v2223, %v2224
      %v2226 = vrot.slane %v2182, 1
      %v2227 = vrot.slane %v1742, 1
      %v2228 = vsel %vm1000, %v2226, %v2227
      %v2229 = vrot.slane %v2183, 1
      %v2230 = vrot.slane %v1743, 1
      %v2231 = vsel %vm1000, %v2229, %v2230
      %v2232 = vrot.slane %v2184, 1
      %v2233 = vrot.slane %v1744, 1
      %v2234 = vsel %vm1000, %v2232, %v2233
      %v2235 = vrot.slane %v2185, 1
      %v2236 = vrot.slane %v1745, 1
      %v2237 = vsel %vm1000, %v2235, %v2236
      %v2238 = vrot.slane %v2186, 1
      %v2239 = vrot.slane %v1746, 1
      %v2240 = vsel %vm1000, %v2238, %v2239
      %v2241 = vrot.slane %v2187, 1
      %v2242 = vrot.slane %v1747, 1
      %v2243 = vsel %vm1000, %v2241, %v2242
      %v2244 = vrot.slane %v2188, 1
      %v2245 = vrot.slane %v1748, 1
      %v2246 = vsel %vm1000, %v2244, %v2245
      %v2247 = vrot.slane %v2189, 1
      %v2248 = vrot.slane %v1749, 1
      %v2249 = vsel %vm1000, %v2247, %v2248
      %2250 = vrot.lane.b32.xlu0 %v2192, 32
      %v2251 = vpop.permute.xlu0 %2250
      %2252 = vrot.lane.b32.xlu0 %v2191, 32
      %v2253 = vpop.permute.xlu0 %2252
      %2254 = vrot.lane.b32.xlu0 %v2195, 32
      %v2255 = vpop.permute.xlu0 %2254
      %2256 = vrot.lane.b32.xlu0 %v2194, 32
      %v2257 = vpop.permute.xlu0 %2256
      %2258 = vrot.lane.b32.xlu0 %v2198, 32
      %v2259 = vpop.permute.xlu0 %2258
      %2260 = vrot.lane.b32.xlu0 %v2197, 32
      %v2261 = vpop.permute.xlu0 %2260
      %2262 = vrot.lane.b32.xlu0 %v2201, 32
      %v2263 = vpop.permute.xlu0 %2262
      %2264 = vrot.lane.b32.xlu0 %v2200, 32
      %v2265 = vpop.permute.xlu0 %2264
      %2266 = vrot.lane.b32.xlu0 %v2204, 32
      %v2267 = vpop.permute.xlu0 %2266
      %2268 = vrot.lane.b32.xlu0 %v2203, 32
      %v2269 = vpop.permute.xlu0 %2268
      %2270 = vrot.lane.b32.xlu0 %v2207, 32
      %v2271 = vpop.permute.xlu0 %2270
      %2272 = vrot.lane.b32.xlu0 %v2206, 32
      %v2273 = vpop.permute.xlu0 %2272
      %2274 = vrot.lane.b32.xlu0 %v2210, 32
      %v2275 = vpop.permute.xlu0 %2274
      %2276 = vrot.lane.b32.xlu0 %v2209, 32
      %v2277 = vpop.permute.xlu0 %2276
      %2278 = vrot.lane.b32.xlu0 %v2213, 32
      %v2279 = vpop.permute.xlu0 %2278
      %2280 = vrot.lane.b32.xlu0 %v2212, 32
      %v2281 = vpop.permute.xlu0 %2280
      %2282 = vrot.lane.b32.xlu0 %v2216, 32
      %v2283 = vpop.permute.xlu0 %2282
      %2284 = vrot.lane.b32.xlu0 %v2215, 32
      %v2285 = vpop.permute.xlu0 %2284
      %2286 = vrot.lane.b32.xlu0 %v2219, 32
      %v2287 = vpop.permute.xlu0 %2286
      %2288 = vrot.lane.b32.xlu0 %v2218, 32
      %v2289 = vpop.permute.xlu0 %2288
      %2290 = vrot.lane.b32.xlu0 %v2222, 32
      %v2291 = vpop.permute.xlu0 %2290
      %2292 = vrot.lane.b32.xlu0 %v2221, 32
      %v2293 = vpop.permute.xlu0 %2292
      %2294 = vrot.lane.b32.xlu0 %v2225, 32
      %v2295 = vpop.permute.xlu0 %2294
      %2296 = vrot.lane.b32.xlu0 %v2224, 32
      %v2297 = vpop.permute.xlu0 %2296
      %2298 = vrot.lane.b32.xlu0 %v2228, 32
      %v2299 = vpop.permute.xlu0 %2298
      %2300 = vrot.lane.b32.xlu0 %v2227, 32
      %v2301 = vpop.permute.xlu0 %2300
      %2302 = vrot.lane.b32.xlu0 %v2231, 32
      %v2303 = vpop.permute.xlu0 %2302
      %2304 = vrot.lane.b32.xlu0 %v2230, 32
      %v2305 = vpop.permute.xlu0 %2304
      %2306 = vrot.lane.b32.xlu0 %v2234, 32
      %v2307 = vpop.permute.xlu0 %2306
      %2308 = vrot.lane.b32.xlu0 %v2233, 32
      %v2309 = vpop.permute.xlu0 %2308
      %2310 = vrot.lane.b32.xlu0 %v2237, 32
      %v2311 = vpop.permute.xlu0 %2310
      %2312 = vrot.lane.b32.xlu0 %v2236, 32
      %v2313 = vpop.permute.xlu0 %2312
      %2314 = vrot.lane.b32.xlu0 %v2240, 32
      %v2315 = vpop.permute.xlu0 %2314
      %2316 = vrot.lane.b32.xlu0 %v2239, 32
      %v2317 = vpop.permute.xlu0 %2316
      %2318 = vrot.lane.b32.xlu0 %v2243, 32
      %v2319 = vpop.permute.xlu0 %2318
      %2320 = vrot.lane.b32.xlu0 %v2242, 32
      %v2321 = vpop.permute.xlu0 %2320
      %2322 = vrot.lane.b32.xlu0 %v2246, 32
      %v2323 = vpop.permute.xlu0 %2322
      %2324 = vrot.lane.b32.xlu0 %v2245, 32
      %v2325 = vpop.permute.xlu0 %2324
      %2326 = vrot.lane.b32.xlu0 %v2249, 32
      %v2327 = vpop.permute.xlu0 %2326
      %2328 = vrot.lane.b32.xlu0 %v2248, 32
      %v2329 = vpop.permute.xlu0 %2328
      %v2331 = vsel %vm1141, %v1650, %v2051
      %v2334 = vsel %vm1141, %v1651, %v2053
      %v2336 = vsel %vm1141, %v1652, %v2055
      %v2339 = vsel %vm1141, %v1653, %v2057
      %v2341 = vsel %vm1141, %v1654, %v2059
      %v2344 = vsel %vm1141, %v1655, %v2061
      %v2346 = vsel %vm1141, %v1656, %v2063
      %v2349 = vsel %vm1141, %v1657, %v2065
      %v2351 = vsel %vm1141, %v1658, %v2067
      %v2354 = vsel %vm1141, %v1659, %v2069
      %v2356 = vsel %vm1141, %v1660, %v2071
      %v2359 = vsel %vm1141, %v1661, %v2073
      %v2361 = vsel %vm1141, %v1662, %v2075
      %v2364 = vsel %vm1141, %v1663, %v2077
      %v2366 = vsel %vm1141, %v1664, %v2079
      %v2369 = vsel %vm1141, %v1665, %v2081
      %v2371 = vsel %vm1141, %v1666, %v2083
      %v2374 = vsel %vm1141, %v1667, %v2085
      %v2376 = vsel %vm1141, %v1668, %v2087
      %v2379 = vsel %vm1141, %v1669, %v2089
      %v2381 = vsel %vm1141, %v1670, %v2091
      %v2384 = vsel %vm1141, %v1671, %v2093
      %v2386 = vsel %vm1141, %v1672, %v2095
      %v2389 = vsel %vm1141, %v1673, %v2097
      %v2391 = vsel %vm1141, %v1674, %v2099
      %v2394 = vsel %vm1141, %v1675, %v2101
      %v2396 = vsel %vm1141, %v1676, %v2103
      %v2399 = vsel %vm1141, %v1677, %v2105
      %v2401 = vsel %vm1141, %v1678, %v2107
      %v2404 = vsel %vm1141, %v1679, %v2109
      %v2406 = vsel %vm1141, %v1680, %v2111
      %v2409 = vsel %vm1141, %v1681, %v2113
      %v2411 = vsel %vm1141, %v1682, %v2115
      %v2414 = vsel %vm1141, %v1683, %v2117
      %v2416 = vsel %vm1141, %v1684, %v2119
      %v2419 = vsel %vm1141, %v1685, %v2121
      %v2421 = vsel %vm1141, %v1686, %v2123
      %v2424 = vsel %vm1141, %v1687, %v2125
      %v2426 = vsel %vm1141, %v1688, %v2127
      %v2429 = vsel %vm1141, %v1689, %v2129
      %v2431 = vsel %vm1242, %v2331, %v2251
      %v2433 = vsel %vm1242, %v2334, %v2253
      %v2435 = vsel %vm1242, %v2336, %v2255
      %v2437 = vsel %vm1242, %v2339, %v2257
      %v2439 = vsel %vm1242, %v2341, %v2259
      %v2441 = vsel %vm1242, %v2344, %v2261
      %v2443 = vsel %vm1242, %v2346, %v2263
      %v2445 = vsel %vm1242, %v2349, %v2265
      %v2447 = vsel %vm1242, %v2351, %v2267
      %v2449 = vsel %vm1242, %v2354, %v2269
      %v2451 = vsel %vm1242, %v2356, %v2271
      %v2453 = vsel %vm1242, %v2359, %v2273
      %v2455 = vsel %vm1242, %v2361, %v2275
      %v2457 = vsel %vm1242, %v2364, %v2277
      %v2459 = vsel %vm1242, %v2366, %v2279
      %v2461 = vsel %vm1242, %v2369, %v2281
      %v2463 = vsel %vm1242, %v2371, %v2283
      %v2465 = vsel %vm1242, %v2374, %v2285
      %v2467 = vsel %vm1242, %v2376, %v2287
      %v2469 = vsel %vm1242, %v2379, %v2289
      %v2471 = vsel %vm1242, %v2381, %v2291
      %v2473 = vsel %vm1242, %v2384, %v2293
      %v2475 = vsel %vm1242, %v2386, %v2295
      %v2477 = vsel %vm1242, %v2389, %v2297
      %v2479 = vsel %vm1242, %v2391, %v2299
      %v2481 = vsel %vm1242, %v2394, %v2301
      %v2483 = vsel %vm1242, %v2396, %v2303
      %v2485 = vsel %vm1242, %v2399, %v2305
      %v2487 = vsel %vm1242, %v2401, %v2307
      %v2489 = vsel %vm1242, %v2404, %v2309
      %v2491 = vsel %vm1242, %v2406, %v2311
      %v2493 = vsel %vm1242, %v2409, %v2313
      %v2495 = vsel %vm1242, %v2411, %v2315
      %v2497 = vsel %vm1242, %v2414, %v2317
      %v2499 = vsel %vm1242, %v2416, %v2319
      %v2501 = vsel %vm1242, %v2419, %v2321
      %v2503 = vsel %vm1242, %v2421, %v2323
      %v2505 = vsel %vm1242, %v2424, %v2325
      %v2507 = vsel %vm1242, %v2426, %v2327
      %v2509 = vsel %vm1242, %v2429, %v2329
      %v2550 = vunpack.c.l.b16 %v2431
      %v2551 = vunpack.c.h.b16 %v2431
      %v2552 = vunpack.c.l.b16 %v2433
      %v2553 = vunpack.c.l.b16 %v2435
      %v2554 = vunpack.c.h.b16 %v2435
      %v2555 = vunpack.c.l.b16 %v2437
      %v2556 = vunpack.c.l.b16 %v2439
      %v2557 = vunpack.c.h.b16 %v2439
      %v2558 = vunpack.c.l.b16 %v2441
      %v2559 = vunpack.c.l.b16 %v2443
      %v2560 = vunpack.c.h.b16 %v2443
      %v2561 = vunpack.c.l.b16 %v2445
      %v2562 = vunpack.c.l.b16 %v2447
      %v2563 = vunpack.c.h.b16 %v2447
      %v2564 = vunpack.c.l.b16 %v2449
      %v2565 = vunpack.c.l.b16 %v2451
      %v2566 = vunpack.c.h.b16 %v2451
      %v2567 = vunpack.c.l.b16 %v2453
      %v2568 = vunpack.c.l.b16 %v2455
      %v2569 = vunpack.c.h.b16 %v2455
      %v2570 = vunpack.c.l.b16 %v2457
      %v2571 = vunpack.c.l.b16 %v2459
      %v2572 = vunpack.c.h.b16 %v2459
      %v2573 = vunpack.c.l.b16 %v2461
      %v2574 = vunpack.c.l.b16 %v2463
      %v2575 = vunpack.c.h.b16 %v2463
      %v2576 = vunpack.c.l.b16 %v2465
      %v2577 = vunpack.c.l.b16 %v2467
      %v2578 = vunpack.c.h.b16 %v2467
      %v2579 = vunpack.c.l.b16 %v2469
      %v2580 = vunpack.c.l.b16 %v2471
      %v2581 = vunpack.c.h.b16 %v2471
      %v2582 = vunpack.c.l.b16 %v2473
      %v2583 = vunpack.c.l.b16 %v2475
      %v2584 = vunpack.c.h.b16 %v2475
      %v2585 = vunpack.c.l.b16 %v2477
      %v2586 = vunpack.c.l.b16 %v2479
      %v2587 = vunpack.c.h.b16 %v2479
      %v2588 = vunpack.c.l.b16 %v2481
      %v2589 = vunpack.c.l.b16 %v2483
      %v2590 = vunpack.c.h.b16 %v2483
      %v2591 = vunpack.c.l.b16 %v2485
      %v2592 = vunpack.c.l.b16 %v2487
      %v2593 = vunpack.c.h.b16 %v2487
      %v2594 = vunpack.c.l.b16 %v2489
      %v2595 = vunpack.c.l.b16 %v2491
      %v2596 = vunpack.c.h.b16 %v2491
      %v2597 = vunpack.c.l.b16 %v2493
      %v2598 = vunpack.c.l.b16 %v2495
      %v2599 = vunpack.c.h.b16 %v2495
      %v2600 = vunpack.c.l.b16 %v2497
      %v2601 = vunpack.c.l.b16 %v2499
      %v2602 = vunpack.c.h.b16 %v2499
      %v2603 = vunpack.c.l.b16 %v2501
      %v2604 = vunpack.c.l.b16 %v2503
      %v2605 = vunpack.c.h.b16 %v2503
      %v2606 = vunpack.c.l.b16 %v2505
      %v2607 = vunpack.c.l.b16 %v2507
      %v2608 = vunpack.c.h.b16 %v2507
      %v2609 = vunpack.c.l.b16 %v2509
      %s2610 = scalar_lea.vmem %s2, 24
      %v2611 = vld [vmem:[%s2610] sm:$0xf]
      %v2612 = vld [vmem:[%s2610 + $0x4] sm:$0xf]
      %v2613 = vld [vmem:[%s2610 + $0x8] sm:$0xf]
      %v2614 = vld [vmem:[%s2610 + $0xc] sm:$0xf]
      %v2615 = vld [vmem:[%s2610 + $0x10] sm:$0xf]
      %v2616 = vld [vmem:[%s2610 + $0x14] sm:$0xf]
      %v2617 = vpack.c.b16 %v2551, %v2550
      %v2618 = vpack.c.b16 %v2553, %v2552
      %v2619 = vpack.c.b16 %v2555, %v2554
      %v2620 = vpack.c.b16 %v2557, %v2556
      %v2621 = vpack.c.b16 %v2559, %v2558
      %v2622 = vpack.c.b16 %v2561, %v2560
      %v2623 = vpack.c.b16 %v2563, %v2562
      %v2624 = vpack.c.b16 %v2565, %v2564
      %v2625 = vpack.c.b16 %v2567, %v2566
      %v2626 = vpack.c.b16 %v2569, %v2568
      %v2627 = vpack.c.b16 %v2571, %v2570
      %v2628 = vpack.c.b16 %v2573, %v2572
      %v2629 = vpack.c.b16 %v2575, %v2574
      %v2630 = vpack.c.b16 %v2577, %v2576
      %v2631 = vpack.c.b16 %v2579, %v2578
      %v2632 = vpack.c.b16 %v2581, %v2580
      %v2633 = vpack.c.b16 %v2583, %v2582
      %v2634 = vpack.c.b16 %v2585, %v2584
      %v2635 = vpack.c.b16 %v2587, %v2586
      %v2636 = vpack.c.b16 %v2589, %v2588
      %v2637 = vpack.c.b16 %v2591, %v2590
      %v2638 = vpack.c.b16 %v2593, %v2592
      %v2639 = vpack.c.b16 %v2595, %v2594
      %v2640 = vpack.c.b16 %v2597, %v2596
      %v2641 = vpack.c.b16 %v2599, %v2598
      %v2642 = vpack.c.b16 %v2601, %v2600
      %v2643 = vpack.c.b16 %v2603, %v2602
      %v2644 = vpack.c.b16 %v2605, %v2604
      %v2645 = vpack.c.b16 %v2607, %v2606
      %v2646 = vpack.c.b16 %v2609, %v2608
      %v2653 = vunpack.c.l.b16 %v2611
      %v2654 = vunpack.c.l.b16 %v2612
      %v2655 = vunpack.c.l.b16 %v2613
      %v2656 = vunpack.c.l.b16 %v2614
      %v2657 = vunpack.c.l.b16 %v2615
      %v2658 = vunpack.c.l.b16 %v2616
      %v2659 = vpack.c.b16 %v2654, %v2653
      %v2660 = vpack.c.b16 %v2656, %v2655
      %v2661 = vpack.c.b16 %v2658, %v2657
      %vm2665 = vcmask 392192
      %v2667 = vsel %vm2665, %v2617, 0
      %v2670 = vsel %vm2665, %v2618, 0
      %v2673 = vsel %vm2665, %v2619, 0
      %v2676 = vsel %vm2665, %v2620, 0
      %v2679 = vsel %vm2665, %v2621, 0
      %v2682 = vsel %vm2665, %v2622, 0
      %v2685 = vsel %vm2665, %v2623, 0
      %v2688 = vsel %vm2665, %v2624, 0
      %v2691 = vsel %vm2665, %v2625, 0
      %v2694 = vsel %vm2665, %v2626, 0
      %v2697 = vsel %vm2665, %v2627, 0
      %v2700 = vsel %vm2665, %v2628, 0
      %v2703 = vsel %vm2665, %v2629, 0
      %v2706 = vsel %vm2665, %v2630, 0
      %v2709 = vsel %vm2665, %v2631, 0
      %v2712 = vsel %vm2665, %v2632, 0
      %v2715 = vsel %vm2665, %v2633, 0
      %v2718 = vsel %vm2665, %v2634, 0
      %v2721 = vsel %vm2665, %v2635, 0
      %v2724 = vsel %vm2665, %v2636, 0
      %v2727 = vsel %vm2665, %v2637, 0
      %v2730 = vsel %vm2665, %v2638, 0
      %v2733 = vsel %vm2665, %v2639, 0
      %v2736 = vsel %vm2665, %v2640, 0
      %v2739 = vsel %vm2665, %v2641, 0
      %v2742 = vsel %vm2665, %v2642, 0
      %v2745 = vsel %vm2665, %v2643, 0
      %v2748 = vsel %vm2665, %v2644, 0
      %v2751 = vsel %vm2665, %v2645, 0
      %v2754 = vsel %vm2665, %v2646, 0
      %2756 = vmatprep.subr.bf16.mxu0 0
      %2757 = vmatpush1.bf16.msra.mxu0 %v2659
      %2758 = vmatprep.subr.bf16.mxu0 0
      %2759 = vmatpush1.bf16.msra.mxu0 %v2660
      %2760 = vmatprep.subr.bf16.mxu0 0
      %2761 = vmatpush1.bf16.msra.mxu0 %v2661
      %2762 = vmatprep.subr.bf16.mxu0 0
      %2763 = vmatpush1.bf16.msra.mxu0 0
      %2764 = vmatprep.subr.bf16.mxu0 0
      %2765 = vmatpush1.bf16.msra.mxu0 0
      %2766 = vmatprep.subr.bf16.mxu0 0
      %2767 = vmatpush1.bf16.msra.mxu0 0
      %2768 = vmatprep.subr.bf16.mxu0 0
      %2769 = vmatpush1.bf16.msra.mxu0 0
      %2770 = vmatprep.subr.bf16.mxu0 0
      %2771 = vmatpush1.bf16.msra.mxu0 0
      %2772 = vmatprep.subr.bf16.mxu0 0
      %2773 = vmatpush1.bf16.msra.mxu0 0
      %2774 = vmatprep.subr.bf16.mxu0 0
      %2775 = vmatpush1.bf16.msra.mxu0 0
      %2776 = vmatprep.subr.bf16.mxu0 0
      %2777 = vmatpush1.bf16.msra.mxu0 0
      %2778 = vmatprep.subr.bf16.mxu0 0
      %2779 = vmatpush1.bf16.msra.mxu0 0
      %2780 = vmatprep.subr.bf16.mxu0 0
      %2781 = vmatpush1.bf16.msra.mxu0 0
      %2782 = vmatprep.subr.bf16.mxu0 0
      %2783 = vmatpush1.bf16.msra.mxu0 0
      %2784 = vmatprep.subr.bf16.mxu0 0
      %2785 = vmatpush1.bf16.msra.mxu0 0
      %2786 = vmatprep.subr.bf16.mxu0 0
      %2787 = vmatpush1.bf16.msra.mxu0 0
      %2788 = vmatprep.mubr.bf16.mxu0 0
      %2789 = vmatmul.mubr.bf16.gmra.mrb[0].mxu0 %v2667
      %v2790 = vpop.f32.mrb[0].mxu0
      %v2791 = vadd.f32 0.0, %v2790
      %v2792 = vpop.f32.mrb[0].mxu0
      %v2793 = vpop.f32.mrb[0].mxu0
      %v2794 = vadd.f32 0.0, %v2793
      %v2795 = vpop.f32.mrb[0].mxu0
      %2796 = vmatprep.mubr.bf16.mxu0 0
      %2797 = vmatmul.mubr.bf16.gmra.mrb[0].mxu0 %v2670
      %v2798 = vpop.f32.mrb[0].mxu0
      %v2799 = vadd.f32 0.0, %v2798
      %v2800 = vpop.f32.mrb[0].mxu0
      %v2801 = vpop.f32.mrb[0].mxu0
      %v2802 = vadd.f32 0.0, %v2801
      %v2803 = vpop.f32.mrb[0].mxu0
      %2804 = vmatprep.mubr.bf16.mxu0 0
      %2805 = vmatmul.mubr.bf16.gmra.mrb[0].mxu0 %v2673
      %v2806 = vpop.f32.mrb[0].mxu0
      %v2807 = vadd.f32 0.0, %v2806
      %v2808 = vpop.f32.mrb[0].mxu0
      %v2809 = vpop.f32.mrb[0].mxu0
      %v2810 = vadd.f32 0.0, %v2809
      %v2811 = vpop.f32.mrb[0].mxu0
      %2812 = vmatprep.mubr.bf16.mxu0 0
      %2813 = vmatmul.mubr.bf16.gmra.mrb[0].mxu0 %v2676
      %v2814 = vpop.f32.mrb[0].mxu0
      %v2815 = vadd.f32 0.0, %v2814
      %v2816 = vpop.f32.mrb[0].mxu0
      %v2817 = vpop.f32.mrb[0].mxu0
      %v2818 = vadd.f32 0.0, %v2817
      %v2819 = vpop.f32.mrb[0].mxu0
      %2820 = vmatprep.mubr.bf16.mxu0 0
      %2821 = vmatmul.mubr.bf16.gmra.mrb[0].mxu0 %v2679
      %v2822 = vpop.f32.mrb[0].mxu0
      %v2823 = vadd.f32 0.0, %v2822
      %v2824 = vpop.f32.mrb[0].mxu0
      %v2825 = vpop.f32.mrb[0].mxu0
      %v2826 = vadd.f32 0.0, %v2825
      %v2827 = vpop.f32.mrb[0].mxu0
      %2828 = vmatprep.mubr.bf16.mxu0 0
      %2829 = vmatmul.mubr.bf16.gmra.mrb[0].mxu0 %v2682
      %v2830 = vpop.f32.mrb[0].mxu0
      %v2831 = vadd.f32 0.0, %v2830
      %v2832 = vpop.f32.mrb[0].mxu0
      %v2833 = vpop.f32.mrb[0].mxu0
      %v2834 = vadd.f32 0.0, %v2833
      %v2835 = vpop.f32.mrb[0].mxu0
      %2836 = vmatprep.mubr.bf16.mxu0 0
      %2837 = vmatmul.mubr.bf16.gmra.mrb[0].mxu0 %v2685
      %v2838 = vpop.f32.mrb[0].mxu0
      %v2839 = vadd.f32 0.0, %v2838
      %v2840 = vpop.f32.mrb[0].mxu0
      %v2841 = vpop.f32.mrb[0].mxu0
      %v2842 = vadd.f32 0.0, %v2841
      %v2843 = vpop.f32.mrb[0].mxu0
      %2844 = vmatprep.mubr.bf16.mxu0 0
      %2845 = vmatmul.mubr.bf16.gmra.mrb[0].mxu0 %v2688
      %v2846 = vpop.f32.mrb[0].mxu0
      %v2847 = vadd.f32 0.0, %v2846
      %v2848 = vpop.f32.mrb[0].mxu0
      %v2849 = vpop.f32.mrb[0].mxu0
      %v2850 = vadd.f32 0.0, %v2849
      %v2851 = vpop.f32.mrb[0].mxu0
      %2852 = vmatprep.mubr.bf16.mxu0 0
      %2853 = vmatmul.mubr.bf16.gmra.mrb[0].mxu0 %v2691
      %v2854 = vpop.f32.mrb[0].mxu0
      %v2855 = vadd.f32 0.0, %v2854
      %v2856 = vpop.f32.mrb[0].mxu0
      %v2857 = vpop.f32.mrb[0].mxu0
      %v2858 = vadd.f32 0.0, %v2857
      %v2859 = vpop.f32.mrb[0].mxu0
      %2860 = vmatprep.mubr.bf16.mxu0 0
      %2861 = vmatmul.mubr.bf16.gmra.mrb[0].mxu0 %v2694
      %v2862 = vpop.f32.mrb[0].mxu0
      %v2863 = vadd.f32 0.0, %v2862
      %v2864 = vpop.f32.mrb[0].mxu0
      %v2865 = vpop.f32.mrb[0].mxu0
      %v2866 = vadd.f32 0.0, %v2865
      %v2867 = vpop.f32.mrb[0].mxu0
      %2868 = vmatprep.mubr.bf16.mxu0 0
      %2869 = vmatmul.mubr.bf16.gmra.mrb[0].mxu0 %v2697
      %v2870 = vpop.f32.mrb[0].mxu0
      %v2871 = vadd.f32 0.0, %v2870
      %v2872 = vpop.f32.mrb[0].mxu0
      %v2873 = vpop.f32.mrb[0].mxu0
      %v2874 = vadd.f32 0.0, %v2873
      %v2875 = vpop.f32.mrb[0].mxu0
      %2876 = vmatprep.mubr.bf16.mxu0 0
      %2877 = vmatmul.mubr.bf16.gmra.mrb[0].mxu0 %v2700
      %v2878 = vpop.f32.mrb[0].mxu0
      %v2879 = vadd.f32 0.0, %v2878
      %v2880 = vpop.f32.mrb[0].mxu0
      %v2881 = vpop.f32.mrb[0].mxu0
      %v2882 = vadd.f32 0.0, %v2881
      %v2883 = vpop.f32.mrb[0].mxu0
      %2884 = vmatprep.mubr.bf16.mxu0 0
      %2885 = vmatmul.mubr.bf16.gmra.mrb[0].mxu0 %v2703
      %v2886 = vpop.f32.mrb[0].mxu0
      %v2887 = vadd.f32 0.0, %v2886
      %v2888 = vpop.f32.mrb[0].mxu0
      %v2889 = vpop.f32.mrb[0].mxu0
      %v2890 = vadd.f32 0.0, %v2889
      %v2891 = vpop.f32.mrb[0].mxu0
      %2892 = vmatprep.mubr.bf16.mxu0 0
      %2893 = vmatmul.mubr.bf16.gmra.mrb[0].mxu0 %v2706
      %v2894 = vpop.f32.mrb[0].mxu0
      %v2895 = vadd.f32 0.0, %v2894
      %v2896 = vpop.f32.mrb[0].mxu0
      %v2897 = vpop.f32.mrb[0].mxu0
      %v2898 = vadd.f32 0.0, %v2897
      %v2899 = vpop.f32.mrb[0].mxu0
      %2900 = vmatprep.mubr.bf16.mxu0 0
      %2901 = vmatmul.mubr.bf16.gmra.mrb[0].mxu0 %v2709
      %v2902 = vpop.f32.mrb[0].mxu0
      %v2903 = vadd.f32 0.0, %v2902
      %v2904 = vpop.f32.mrb[0].mxu0
      %v2905 = vpop.f32.mrb[0].mxu0
      %v2906 = vadd.f32 0.0, %v2905
      %v2907 = vpop.f32.mrb[0].mxu0
      %2908 = vmatprep.mubr.bf16.mxu0 0
      %2909 = vmatmul.mubr.bf16.gmra.mrb[0].mxu0 %v2712
      %v2910 = vpop.f32.mrb[0].mxu0
      %v2911 = vadd.f32 0.0, %v2910
      %v2912 = vpop.f32.mrb[0].mxu0
      %v2913 = vpop.f32.mrb[0].mxu0
      %v2914 = vadd.f32 0.0, %v2913
      %v2915 = vpop.f32.mrb[0].mxu0
      %2916 = vmatprep.mubr.bf16.mxu0 0
      %2917 = vmatmul.mubr.bf16.gmra.mrb[0].mxu0 %v2715
      %v2918 = vpop.f32.mrb[0].mxu0
      %v2919 = vadd.f32 0.0, %v2918
      %v2920 = vpop.f32.mrb[0].mxu0
      %v2921 = vpop.f32.mrb[0].mxu0
      %v2922 = vadd.f32 0.0, %v2921
      %v2923 = vpop.f32.mrb[0].mxu0
      %2924 = vmatprep.mubr.bf16.mxu0 0
      %2925 = vmatmul.mubr.bf16.gmra.mrb[0].mxu0 %v2718
      %v2926 = vpop.f32.mrb[0].mxu0
      %v2927 = vadd.f32 0.0, %v2926
      %v2928 = vpop.f32.mrb[0].mxu0
      %v2929 = vpop.f32.mrb[0].mxu0
      %v2930 = vadd.f32 0.0, %v2929
      %v2931 = vpop.f32.mrb[0].mxu0
      %2932 = vmatprep.mubr.bf16.mxu0 0
      %2933 = vmatmul.mubr.bf16.gmra.mrb[0].mxu0 %v2721
      %v2934 = vpop.f32.mrb[0].mxu0
      %v2935 = vadd.f32 0.0, %v2934
      %v2936 = vpop.f32.mrb[0].mxu0
      %v2937 = vpop.f32.mrb[0].mxu0
      %v2938 = vadd.f32 0.0, %v2937
      %v2939 = vpop.f32.mrb[0].mxu0
      %2940 = vmatprep.mubr.bf16.mxu0 0
      %2941 = vmatmul.mubr.bf16.gmra.mrb[0].mxu0 %v2724
      %v2942 = vpop.f32.mrb[0].mxu0
      %v2943 = vadd.f32 0.0, %v2942
      %v2944 = vpop.f32.mrb[0].mxu0
      %v2945 = vpop.f32.mrb[0].mxu0
      %v2946 = vadd.f32 0.0, %v2945
      %v2947 = vpop.f32.mrb[0].mxu0
      %2948 = vmatprep.mubr.bf16.mxu0 0
      %2949 = vmatmul.mubr.bf16.gmra.mrb[0].mxu0 %v2727
      %v2950 = vpop.f32.mrb[0].mxu0
      %v2951 = vadd.f32 0.0, %v2950
      %v2952 = vpop.f32.mrb[0].mxu0
      %v2953 = vpop.f32.mrb[0].mxu0
      %v2954 = vadd.f32 0.0, %v2953
      %v2955 = vpop.f32.mrb[0].mxu0
      %2956 = vmatprep.mubr.bf16.mxu0 0
      %2957 = vmatmul.mubr.bf16.gmra.mrb[0].mxu0 %v2730
      %v2958 = vpop.f32.mrb[0].mxu0
      %v2959 = vadd.f32 0.0, %v2958
      %v2960 = vpop.f32.mrb[0].mxu0
      %v2961 = vpop.f32.mrb[0].mxu0
      %v2962 = vadd.f32 0.0, %v2961
      %v2963 = vpop.f32.mrb[0].mxu0
      %2964 = vmatprep.mubr.bf16.mxu0 0
      %2965 = vmatmul.mubr.bf16.gmra.mrb[0].mxu0 %v2733
      %v2966 = vpop.f32.mrb[0].mxu0
      %v2967 = vadd.f32 0.0, %v2966
      %v2968 = vpop.f32.mrb[0].mxu0
      %v2969 = vpop.f32.mrb[0].mxu0
      %v2970 = vadd.f32 0.0, %v2969
      %v2971 = vpop.f32.mrb[0].mxu0
      %2972 = vmatprep.mubr.bf16.mxu0 0
      %2973 = vmatmul.mubr.bf16.gmra.mrb[0].mxu0 %v2736
      %v2974 = vpop.f32.mrb[0].mxu0
      %v2975 = vadd.f32 0.0, %v2974
      %v2976 = vpop.f32.mrb[0].mxu0
      %v2977 = vpop.f32.mrb[0].mxu0
      %v2978 = vadd.f32 0.0, %v2977
      %v2979 = vpop.f32.mrb[0].mxu0
      %2980 = vmatprep.mubr.bf16.mxu0 0
      %2981 = vmatmul.mubr.bf16.gmra.mrb[0].mxu0 %v2739
      %v2982 = vpop.f32.mrb[0].mxu0
      %v2983 = vadd.f32 0.0, %v2982
      %v2984 = vpop.f32.mrb[0].mxu0
      %v2985 = vpop.f32.mrb[0].mxu0
      %v2986 = vadd.f32 0.0, %v2985
      %v2987 = vpop.f32.mrb[0].mxu0
      %2988 = vmatprep.mubr.bf16.mxu0 0
      %2989 = vmatmul.mubr.bf16.gmra.mrb[0].mxu0 %v2742
      %v2990 = vpop.f32.mrb[0].mxu0
      %v2991 = vadd.f32 0.0, %v2990
      %v2992 = vpop.f32.mrb[0].mxu0
      %v2993 = vpop.f32.mrb[0].mxu0
      %v2994 = vadd.f32 0.0, %v2993
      %v2995 = vpop.f32.mrb[0].mxu0
      %2996 = vmatprep.mubr.bf16.mxu0 0
      %2997 = vmatmul.mubr.bf16.gmra.mrb[0].mxu0 %v2745
      %v2998 = vpop.f32.mrb[0].mxu0
      %v2999 = vadd.f32 0.0, %v2998
      %v3000 = vpop.f32.mrb[0].mxu0
      %v3001 = vpop.f32.mrb[0].mxu0
      %v3002 = vadd.f32 0.0, %v3001
      %v3003 = vpop.f32.mrb[0].mxu0
      %3004 = vmatprep.mubr.bf16.mxu0 0
      %3005 = vmatmul.mubr.bf16.gmra.mrb[0].mxu0 %v2748
      %v3006 = vpop.f32.mrb[0].mxu0
      %v3007 = vadd.f32 0.0, %v3006
      %v3008 = vpop.f32.mrb[0].mxu0
      %v3009 = vpop.f32.mrb[0].mxu0
      %v3010 = vadd.f32 0.0, %v3009
      %v3011 = vpop.f32.mrb[0].mxu0
      %3012 = vmatprep.mubr.bf16.mxu0 0
      %3013 = vmatmul.mubr.bf16.gmra.mrb[0].mxu0 %v2751
      %v3014 = vpop.f32.mrb[0].mxu0
      %v3015 = vadd.f32 0.0, %v3014
      %v3016 = vpop.f32.mrb[0].mxu0
      %v3017 = vpop.f32.mrb[0].mxu0
      %v3018 = vadd.f32 0.0, %v3017
      %v3019 = vpop.f32.mrb[0].mxu0
      %3020 = vmatprep.mubr.bf16.mxu0 0
      %3021 = vmatmul.mubr.bf16.gmra.mrb[0].mxu0 %v2754
      %v3022 = vpop.f32.mrb[0].mxu0
      %v3023 = vadd.f32 0.0, %v3022
      %v3024 = vpop.f32.mrb[0].mxu0
      %v3025 = vpop.f32.mrb[0].mxu0
      %v3026 = vadd.f32 0.0, %v3025
      %v3027 = vpop.f32.mrb[0].mxu0
      %3028 = vdwg.mxu0
      %v3029 = vpack.c.b16 %v1364, %v1363
      %v3030 = vpack.c.b16 %v1366, %v1365
      %v3031 = vpack.c.b16 %v1368, %v1367
      %v3032 = vpack.c.b16 %v1370, %v1369
      %v3033 = vpack.c.b16 %v1372, %v1371
      %v3034 = vpack.c.b16 %v1374, %v1373
      %v3035 = vpack.c.b16 %v1376, %v1375
      %v3036 = vpack.c.b16 %v1378, %v1377
      %v3037 = vpack.c.b16 %v1380, %v1379
      %v3038 = vpack.c.b16 %v1382, %v1381
      %v3039 = vpack.c.b16 %v1384, %v1383
      %v3040 = vpack.c.b16 %v1386, %v1385
      %v3041 = vpack.c.b16 %v1388, %v1387
      %v3042 = vpack.c.b16 %v1390, %v1389
      %v3043 = vpack.c.b16 %v1392, %v1391
      %v3044 = vpack.c.b16 %v1394, %v1393
      %v3045 = vpack.c.b16 %v1396, %v1395
      %v3046 = vpack.c.b16 %v1398, %v1397
      %v3047 = vpack.c.b16 %v1400, %v1399
      %v3048 = vpack.c.b16 %v1402, %v1401
      %v3049 = vpack.c.b16 %v1404, %v1403
      %v3050 = vpack.c.b16 %v1406, %v1405
      %v3051 = vpack.c.b16 %v1408, %v1407
      %v3052 = vpack.c.b16 %v1410, %v1409
      %v3053 = vpack.c.b16 %v1412, %v1411
      %v3054 = vpack.c.b16 %v1414, %v1413
      %v3055 = vpack.c.b16 %v1416, %v1415
      %v3056 = vpack.c.b16 %v1418, %v1417
      %v3057 = vpack.c.b16 %v1420, %v1419
      %v3058 = vpack.c.b16 %v1422, %v1421
      %v3065 = vunpack.c.l.b16 %v1423
      %v3066 = vunpack.c.l.b16 %v1424
      %v3067 = vunpack.c.l.b16 %v1425
      %v3068 = vunpack.c.l.b16 %v1426
      %v3069 = vunpack.c.l.b16 %v1427
      %v3070 = vunpack.c.l.b16 %v1428
      %v3071 = vpack.c.b16 %v3066, %v3065
      %v3072 = vpack.c.b16 %v3068, %v3067
      %v3073 = vpack.c.b16 %v3070, %v3069
      %v3078 = vsel %vm2665, %v3029, 0
      %v3081 = vsel %vm2665, %v3030, 0
      %v3084 = vsel %vm2665, %v3031, 0
      %v3087 = vsel %vm2665, %v3032, 0
      %v3090 = vsel %vm2665, %v3033, 0
      %v3093 = vsel %vm2665, %v3034, 0
      %v3096 = vsel %vm2665, %v3035, 0
      %v3099 = vsel %vm2665, %v3036, 0
      %v3102 = vsel %vm2665, %v3037, 0
      %v3105 = vsel %vm2665, %v3038, 0
      %v3108 = vsel %vm2665, %v3039, 0
      %v3111 = vsel %vm2665, %v3040, 0
      %v3114 = vsel %vm2665, %v3041, 0
      %v3117 = vsel %vm2665, %v3042, 0
      %v3120 = vsel %vm2665, %v3043, 0
      %v3123 = vsel %vm2665, %v3044, 0
      %v3126 = vsel %vm2665, %v3045, 0
      %v3129 = vsel %vm2665, %v3046, 0
      %v3132 = vsel %vm2665, %v3047, 0
      %v3135 = vsel %vm2665, %v3048, 0
      %v3138 = vsel %vm2665, %v3049, 0
      %v3141 = vsel %vm2665, %v3050, 0
      %v3144 = vsel %vm2665, %v3051, 0
      %v3147 = vsel %vm2665, %v3052, 0
      %v3150 = vsel %vm2665, %v3053, 0
      %v3153 = vsel %vm2665, %v3054, 0
      %v3156 = vsel %vm2665, %v3055, 0
      %v3159 = vsel %vm2665, %v3056, 0
      %v3162 = vsel %vm2665, %v3057, 0
      %v3165 = vsel %vm2665, %v3058, 0
      %3167 = vmatprep.subr.bf16.mxu0 0
      %3168 = vmatpush1.bf16.msra.mxu0 %v3071
      %3169 = vmatprep.subr.bf16.mxu0 0
      %3170 = vmatpush1.bf16.msra.mxu0 %v3072
      %3171 = vmatprep.subr.bf16.mxu0 0
      %3172 = vmatpush1.bf16.msra.mxu0 %v3073
      %3173 = vmatprep.subr.bf16.mxu0 0
      %3174 = vmatpush1.bf16.msra.mxu0 0
      %3175 = vmatprep.subr.bf16.mxu0 0
      %3176 = vmatpush1.bf16.msra.mxu0 0
      %3177 = vmatprep.subr.bf16.mxu0 0
      %3178 = vmatpush1.bf16.msra.mxu0 0
      %3179 = vmatprep.subr.bf16.mxu0 0
      %3180 = vmatpush1.bf16.msra.mxu0 0
      %3181 = vmatprep.subr.bf16.mxu0 0
      %3182 = vmatpush1.bf16.msra.mxu0 0
      %3183 = vmatprep.subr.bf16.mxu0 0
      %3184 = vmatpush1.bf16.msra.mxu0 0
      %3185 = vmatprep.subr.bf16.mxu0 0
      %3186 = vmatpush1.bf16.msra.mxu0 0
      %3187 = vmatprep.subr.bf16.mxu0 0
      %3188 = vmatpush1.bf16.msra.mxu0 0
      %3189 = vmatprep.subr.bf16.mxu0 0
      %3190 = vmatpush1.bf16.msra.mxu0 0
      %3191 = vmatprep.subr.bf16.mxu0 0
      %3192 = vmatpush1.bf16.msra.mxu0 0
      %3193 = vmatprep.subr.bf16.mxu0 0
      %3194 = vmatpush1.bf16.msra.mxu0 0
      %3195 = vmatprep.subr.bf16.mxu0 0
      %3196 = vmatpush1.bf16.msra.mxu0 0
      %3197 = vmatprep.subr.bf16.mxu0 0
      %3198 = vmatpush1.bf16.msra.mxu0 0
      %3199 = vmatprep.mubr.bf16.mxu0 0
      %3200 = vmatmul.mubr.bf16.gmra.mrb[0].mxu0 %v3078
      %v3201 = vpop.f32.mrb[0].mxu0
      %v3202 = vadd.f32 %v2791, %v3201
      %v3203 = vpop.f32.mrb[0].mxu0
      %v3204 = vpop.f32.mrb[0].mxu0
      %v3205 = vadd.f32 %v2794, %v3204
      %v3206 = vpop.f32.mrb[0].mxu0
      %3207 = vmatprep.mubr.bf16.mxu0 0
      %3208 = vmatmul.mubr.bf16.gmra.mrb[0].mxu0 %v3081
      %v3209 = vpop.f32.mrb[0].mxu0
      %v3210 = vadd.f32 %v2799, %v3209
      %v3211 = vpop.f32.mrb[0].mxu0
      %v3212 = vpop.f32.mrb[0].mxu0
      %v3213 = vadd.f32 %v2802, %v3212
      %v3214 = vpop.f32.mrb[0].mxu0
      %3215 = vmatprep.mubr.bf16.mxu0 0
      %3216 = vmatmul.mubr.bf16.gmra.mrb[0].mxu0 %v3084
      %v3217 = vpop.f32.mrb[0].mxu0
      %v3218 = vadd.f32 %v2807, %v3217
      %v3219 = vpop.f32.mrb[0].mxu0
      %v3220 = vpop.f32.mrb[0].mxu0
      %v3221 = vadd.f32 %v2810, %v3220
      %v3222 = vpop.f32.mrb[0].mxu0
      %3223 = vmatprep.mubr.bf16.mxu0 0
      %3224 = vmatmul.mubr.bf16.gmra.mrb[0].mxu0 %v3087
      %v3225 = vpop.f32.mrb[0].mxu0
      %v3226 = vadd.f32 %v2815, %v3225
      %v3227 = vpop.f32.mrb[0].mxu0
      %v3228 = vpop.f32.mrb[0].mxu0
      %v3229 = vadd.f32 %v2818, %v3228
      %v3230 = vpop.f32.mrb[0].mxu0
      %3231 = vmatprep.mubr.bf16.mxu0 0
      %3232 = vmatmul.mubr.bf16.gmra.mrb[0].mxu0 %v3090
      %v3233 = vpop.f32.mrb[0].mxu0
      %v3234 = vadd.f32 %v2823, %v3233
      %v3235 = vpop.f32.mrb[0].mxu0
      %v3236 = vpop.f32.mrb[0].mxu0
      %v3237 = vadd.f32 %v2826, %v3236
      %v3238 = vpop.f32.mrb[0].mxu0
      %3239 = vmatprep.mubr.bf16.mxu0 0
      %3240 = vmatmul.mubr.bf16.gmra.mrb[0].mxu0 %v3093
      %v3241 = vpop.f32.mrb[0].mxu0
      %v3242 = vadd.f32 %v2831, %v3241
      %v3243 = vpop.f32.mrb[0].mxu0
      %v3244 = vpop.f32.mrb[0].mxu0
      %v3245 = vadd.f32 %v2834, %v3244
      %v3246 = vpop.f32.mrb[0].mxu0
      %3247 = vmatprep.mubr.bf16.mxu0 0
      %3248 = vmatmul.mubr.bf16.gmra.mrb[0].mxu0 %v3096
      %v3249 = vpop.f32.mrb[0].mxu0
      %v3250 = vadd.f32 %v2839, %v3249
      %v3251 = vpop.f32.mrb[0].mxu0
      %v3252 = vpop.f32.mrb[0].mxu0
      %v3253 = vadd.f32 %v2842, %v3252
      %v3254 = vpop.f32.mrb[0].mxu0
      %3255 = vmatprep.mubr.bf16.mxu0 0
      %3256 = vmatmul.mubr.bf16.gmra.mrb[0].mxu0 %v3099
      %v3257 = vpop.f32.mrb[0].mxu0
      %v3258 = vadd.f32 %v2847, %v3257
      %v3259 = vpop.f32.mrb[0].mxu0
      %v3260 = vpop.f32.mrb[0].mxu0
      %v3261 = vadd.f32 %v2850, %v3260
      %v3262 = vpop.f32.mrb[0].mxu0
      %3263 = vmatprep.mubr.bf16.mxu0 0
      %3264 = vmatmul.mubr.bf16.gmra.mrb[0].mxu0 %v3102
      %v3265 = vpop.f32.mrb[0].mxu0
      %v3266 = vadd.f32 %v2855, %v3265
      %v3267 = vpop.f32.mrb[0].mxu0
      %v3268 = vpop.f32.mrb[0].mxu0
      %v3269 = vadd.f32 %v2858, %v3268
      %v3270 = vpop.f32.mrb[0].mxu0
      %3271 = vmatprep.mubr.bf16.mxu0 0
      %3272 = vmatmul.mubr.bf16.gmra.mrb[0].mxu0 %v3105
      %v3273 = vpop.f32.mrb[0].mxu0
      %v3274 = vadd.f32 %v2863, %v3273
      %v3275 = vpop.f32.mrb[0].mxu0
      %v3276 = vpop.f32.mrb[0].mxu0
      %v3277 = vadd.f32 %v2866, %v3276
      %v3278 = vpop.f32.mrb[0].mxu0
      %3279 = vmatprep.mubr.bf16.mxu0 0
      %3280 = vmatmul.mubr.bf16.gmra.mrb[0].mxu0 %v3108
      %v3281 = vpop.f32.mrb[0].mxu0
      %v3282 = vadd.f32 %v2871, %v3281
      %v3283 = vpop.f32.mrb[0].mxu0
      %v3284 = vpop.f32.mrb[0].mxu0
      %v3285 = vadd.f32 %v2874, %v3284
      %v3286 = vpop.f32.mrb[0].mxu0
      %3287 = vmatprep.mubr.bf16.mxu0 0
      %3288 = vmatmul.mubr.bf16.gmra.mrb[0].mxu0 %v3111
      %v3289 = vpop.f32.mrb[0].mxu0
      %v3290 = vadd.f32 %v2879, %v3289
      %v3291 = vpop.f32.mrb[0].mxu0
      %v3292 = vpop.f32.mrb[0].mxu0
      %v3293 = vadd.f32 %v2882, %v3292
      %v3294 = vpop.f32.mrb[0].mxu0
      %3295 = vmatprep.mubr.bf16.mxu0 0
      %3296 = vmatmul.mubr.bf16.gmra.mrb[0].mxu0 %v3114
      %v3297 = vpop.f32.mrb[0].mxu0
      %v3298 = vadd.f32 %v2887, %v3297
      %v3299 = vpop.f32.mrb[0].mxu0
      %v3300 = vpop.f32.mrb[0].mxu0
      %v3301 = vadd.f32 %v2890, %v3300
      %v3302 = vpop.f32.mrb[0].mxu0
      %3303 = vmatprep.mubr.bf16.mxu0 0
      %3304 = vmatmul.mubr.bf16.gmra.mrb[0].mxu0 %v3117
      %v3305 = vpop.f32.mrb[0].mxu0
      %v3306 = vadd.f32 %v2895, %v3305
      %v3307 = vpop.f32.mrb[0].mxu0
      %v3308 = vpop.f32.mrb[0].mxu0
      %v3309 = vadd.f32 %v2898, %v3308
      %v3310 = vpop.f32.mrb[0].mxu0
      %3311 = vmatprep.mubr.bf16.mxu0 0
      %3312 = vmatmul.mubr.bf16.gmra.mrb[0].mxu0 %v3120
      %v3313 = vpop.f32.mrb[0].mxu0
      %v3314 = vadd.f32 %v2903, %v3313
      %v3315 = vpop.f32.mrb[0].mxu0
      %v3316 = vpop.f32.mrb[0].mxu0
      %v3317 = vadd.f32 %v2906, %v3316
      %v3318 = vpop.f32.mrb[0].mxu0
      %3319 = vmatprep.mubr.bf16.mxu0 0
      %3320 = vmatmul.mubr.bf16.gmra.mrb[0].mxu0 %v3123
      %v3321 = vpop.f32.mrb[0].mxu0
      %v3322 = vadd.f32 %v2911, %v3321
      %v3323 = vpop.f32.mrb[0].mxu0
      %v3324 = vpop.f32.mrb[0].mxu0
      %v3325 = vadd.f32 %v2914, %v3324
      %v3326 = vpop.f32.mrb[0].mxu0
      %3327 = vmatprep.mubr.bf16.mxu0 0
      %3328 = vmatmul.mubr.bf16.gmra.mrb[0].mxu0 %v3126
      %v3329 = vpop.f32.mrb[0].mxu0
      %v3330 = vadd.f32 %v2919, %v3329
      %v3331 = vpop.f32.mrb[0].mxu0
      %v3332 = vpop.f32.mrb[0].mxu0
      %v3333 = vadd.f32 %v2922, %v3332
      %v3334 = vpop.f32.mrb[0].mxu0
      %3335 = vmatprep.mubr.bf16.mxu0 0
      %3336 = vmatmul.mubr.bf16.gmra.mrb[0].mxu0 %v3129
      %v3337 = vpop.f32.mrb[0].mxu0
      %v3338 = vadd.f32 %v2927, %v3337
      %v3339 = vpop.f32.mrb[0].mxu0
      %v3340 = vpop.f32.mrb[0].mxu0
      %v3341 = vadd.f32 %v2930, %v3340
      %v3342 = vpop.f32.mrb[0].mxu0
      %3343 = vmatprep.mubr.bf16.mxu0 0
      %3344 = vmatmul.mubr.bf16.gmra.mrb[0].mxu0 %v3132
      %v3345 = vpop.f32.mrb[0].mxu0
      %v3346 = vadd.f32 %v2935, %v3345
      %v3347 = vpop.f32.mrb[0].mxu0
      %v3348 = vpop.f32.mrb[0].mxu0
      %v3349 = vadd.f32 %v2938, %v3348
      %v3350 = vpop.f32.mrb[0].mxu0
      %3351 = vmatprep.mubr.bf16.mxu0 0
      %3352 = vmatmul.mubr.bf16.gmra.mrb[0].mxu0 %v3135
      %v3353 = vpop.f32.mrb[0].mxu0
      %v3354 = vadd.f32 %v2943, %v3353
      %v3355 = vpop.f32.mrb[0].mxu0
      %v3356 = vpop.f32.mrb[0].mxu0
      %v3357 = vadd.f32 %v2946, %v3356
      %v3358 = vpop.f32.mrb[0].mxu0
      %3359 = vmatprep.mubr.bf16.mxu0 0
      %3360 = vmatmul.mubr.bf16.gmra.mrb[0].mxu0 %v3138
      %v3361 = vpop.f32.mrb[0].mxu0
      %v3362 = vadd.f32 %v2951, %v3361
      %v3363 = vpop.f32.mrb[0].mxu0
      %v3364 = vpop.f32.mrb[0].mxu0
      %v3365 = vadd.f32 %v2954, %v3364
      %v3366 = vpop.f32.mrb[0].mxu0
      %3367 = vmatprep.mubr.bf16.mxu0 0
      %3368 = vmatmul.mubr.bf16.gmra.mrb[0].mxu0 %v3141
      %v3369 = vpop.f32.mrb[0].mxu0
      %v3370 = vadd.f32 %v2959, %v3369
      %v3371 = vpop.f32.mrb[0].mxu0
      %v3372 = vpop.f32.mrb[0].mxu0
      %v3373 = vadd.f32 %v2962, %v3372
      %v3374 = vpop.f32.mrb[0].mxu0
      %3375 = vmatprep.mubr.bf16.mxu0 0
      %3376 = vmatmul.mubr.bf16.gmra.mrb[0].mxu0 %v3144
      %v3377 = vpop.f32.mrb[0].mxu0
      %v3378 = vadd.f32 %v2967, %v3377
      %v3379 = vpop.f32.mrb[0].mxu0
      %v3380 = vpop.f32.mrb[0].mxu0
      %v3381 = vadd.f32 %v2970, %v3380
      %v3382 = vpop.f32.mrb[0].mxu0
      %3383 = vmatprep.mubr.bf16.mxu0 0
      %3384 = vmatmul.mubr.bf16.gmra.mrb[0].mxu0 %v3147
      %v3385 = vpop.f32.mrb[0].mxu0
      %v3386 = vadd.f32 %v2975, %v3385
      %v3387 = vpop.f32.mrb[0].mxu0
      %v3388 = vpop.f32.mrb[0].mxu0
      %v3389 = vadd.f32 %v2978, %v3388
      %v3390 = vpop.f32.mrb[0].mxu0
      %3391 = vmatprep.mubr.bf16.mxu0 0
      %3392 = vmatmul.mubr.bf16.gmra.mrb[0].mxu0 %v3150
      %v3393 = vpop.f32.mrb[0].mxu0
      %v3394 = vadd.f32 %v2983, %v3393
      %v3395 = vpop.f32.mrb[0].mxu0
      %v3396 = vpop.f32.mrb[0].mxu0
      %v3397 = vadd.f32 %v2986, %v3396
      %v3398 = vpop.f32.mrb[0].mxu0
      %3399 = vmatprep.mubr.bf16.mxu0 0
      %3400 = vmatmul.mubr.bf16.gmra.mrb[0].mxu0 %v3153
      %v3401 = vpop.f32.mrb[0].mxu0
      %v3402 = vadd.f32 %v2991, %v3401
      %v3403 = vpop.f32.mrb[0].mxu0
      %v3404 = vpop.f32.mrb[0].mxu0
      %v3405 = vadd.f32 %v2994, %v3404
      %v3406 = vpop.f32.mrb[0].mxu0
      %3407 = vmatprep.mubr.bf16.mxu0 0
      %3408 = vmatmul.mubr.bf16.gmra.mrb[0].mxu0 %v3156
      %v3409 = vpop.f32.mrb[0].mxu0
      %v3410 = vadd.f32 %v2999, %v3409
      %v3411 = vpop.f32.mrb[0].mxu0
      %v3412 = vpop.f32.mrb[0].mxu0
      %v3413 = vadd.f32 %v3002, %v3412
      %v3414 = vpop.f32.mrb[0].mxu0
      %3415 = vmatprep.mubr.bf16.mxu0 0
      %3416 = vmatmul.mubr.bf16.gmra.mrb[0].mxu0 %v3159
      %v3417 = vpop.f32.mrb[0].mxu0
      %v3418 = vadd.f32 %v3007, %v3417
      %v3419 = vpop.f32.mrb[0].mxu0
      %v3420 = vpop.f32.mrb[0].mxu0
      %v3421 = vadd.f32 %v3010, %v3420
      %v3422 = vpop.f32.mrb[0].mxu0
      %3423 = vmatprep.mubr.bf16.mxu0 0
      %3424 = vmatmul.mubr.bf16.gmra.mrb[0].mxu0 %v3162
      %v3425 = vpop.f32.mrb[0].mxu0
      %v3426 = vadd.f32 %v3015, %v3425
      %v3427 = vpop.f32.mrb[0].mxu0
      %v3428 = vpop.f32.mrb[0].mxu0
      %v3429 = vadd.f32 %v3018, %v3428
      %v3430 = vpop.f32.mrb[0].mxu0
      %3431 = vmatprep.mubr.bf16.mxu0 0
      %3432 = vmatmul.mubr.bf16.gmra.mrb[0].mxu0 %v3165
      %v3433 = vpop.f32.mrb[0].mxu0
      %v3434 = vadd.f32 %v3023, %v3433
      %v3435 = vpop.f32.mrb[0].mxu0
      %v3436 = vpop.f32.mrb[0].mxu0
      %v3437 = vadd.f32 %v3026, %v3436
      %v3438 = vpop.f32.mrb[0].mxu0
      %3439 = vdwg.mxu0
      %s3440 = scalar_lea.vmem %s226, 32
      %v3441 = vld [vmem:[%s3440] sm:$0xf]
      %v3442 = vld [vmem:[%s3440 + $0x4] sm:$0xf]
      %v3443 = vld [vmem:[%s3440 + $0x8] sm:$0xf]
      %v3444 = vld [vmem:[%s3440 + $0x10] sm:$0xf]
      %v3445 = vld [vmem:[%s3440 + $0x14] sm:$0xf]
      %v3446 = vld [vmem:[%s3440 + $0x18] sm:$0xf]
      %v3447 = vld [vmem:[%s3440 + $0x20] sm:$0xf]
      %v3448 = vld [vmem:[%s3440 + $0x24] sm:$0xf]
      %v3449 = vld [vmem:[%s3440 + $0x28] sm:$0xf]
      %v3450 = vld [vmem:[%s3440 + $0x30] sm:$0xf]
      %v3451 = vld [vmem:[%s3440 + $0x34] sm:$0xf]
      %v3452 = vld [vmem:[%s3440 + $0x38] sm:$0xf]
      %v3453 = vld [vmem:[%s3440 + $0x40] sm:$0xf]
      %v3454 = vld [vmem:[%s3440 + $0x44] sm:$0xf]
      %v3455 = vld [vmem:[%s3440 + $0x48] sm:$0xf]
      %v3456 = vld [vmem:[%s3440 + $0x50] sm:$0xf]
      %v3457 = vld [vmem:[%s3440 + $0x54] sm:$0xf]
      %v3458 = vld [vmem:[%s3440 + $0x58] sm:$0xf]
      %v3459 = vld [vmem:[%s3440 + $0x60] sm:$0xf]
      %v3460 = vld [vmem:[%s3440 + $0x64] sm:$0xf]
      %v3461 = vld [vmem:[%s3440 + $0x68] sm:$0xf]
      %v3462 = vld [vmem:[%s3440 + $0x70] sm:$0xf]
      %v3463 = vld [vmem:[%s3440 + $0x74] sm:$0xf]
      %v3464 = vld [vmem:[%s3440 + $0x78] sm:$0xf]
      %v3465 = vld [vmem:[%s3440 + $0x80] sm:$0xf]
      %v3466 = vld [vmem:[%s3440 + $0x84] sm:$0xf]
      %v3467 = vld [vmem:[%s3440 + $0x88] sm:$0xf]
      %v3468 = vld [vmem:[%s3440 + $0x90] sm:$0xf]
      %v3469 = vld [vmem:[%s3440 + $0x94] sm:$0xf]
      %v3470 = vld [vmem:[%s3440 + $0x98] sm:$0xf]
      %v3471 = vld [vmem:[%s3440 + $0xa0] sm:$0xf]
      %v3472 = vld [vmem:[%s3440 + $0xa4] sm:$0xf]
      %v3473 = vld [vmem:[%s3440 + $0xa8] sm:$0xf]
      %v3474 = vld [vmem:[%s3440 + $0xb0] sm:$0xf]
      %v3475 = vld [vmem:[%s3440 + $0xb4] sm:$0xf]
      %v3476 = vld [vmem:[%s3440 + $0xb8] sm:$0xf]
      %v3477 = vld [vmem:[%s3440 + $0xc0] sm:$0xf]
      %v3478 = vld [vmem:[%s3440 + $0xc4] sm:$0xf]
      %v3479 = vld [vmem:[%s3440 + $0xc8] sm:$0xf]
      %v3480 = vld [vmem:[%s3440 + $0xd0] sm:$0xf]
      %v3481 = vld [vmem:[%s3440 + $0xd4] sm:$0xf]
      %v3482 = vld [vmem:[%s3440 + $0xd8] sm:$0xf]
      %v3483 = vld [vmem:[%s3440 + $0xe0] sm:$0xf]
      %v3484 = vld [vmem:[%s3440 + $0xe4] sm:$0xf]
      %v3485 = vld [vmem:[%s3440 + $0xe8] sm:$0xf]
      %v3486 = vld [vmem:[%s3440 + $0xf0] sm:$0xf]
      %v3487 = vld [vmem:[%s3440 + $0xf4] sm:$0xf]
      %v3488 = vld [vmem:[%s3440 + $0xf8] sm:$0xf]
      %v3489 = vld [vmem:[%s3440 + $0x100] sm:$0xf]
      %v3490 = vld [vmem:[%s3440 + $0x104] sm:$0xf]
      %v3491 = vld [vmem:[%s3440 + $0x108] sm:$0xf]
      %v3492 = vld [vmem:[%s3440 + $0x110] sm:$0xf]
      %v3493 = vld [vmem:[%s3440 + $0x114] sm:$0xf]
      %v3494 = vld [vmem:[%s3440 + $0x118] sm:$0xf]
      %v3495 = vld [vmem:[%s3440 + $0x120] sm:$0xf]
      %v3496 = vld [vmem:[%s3440 + $0x124] sm:$0xf]
      %v3497 = vld [vmem:[%s3440 + $0x128] sm:$0xf]
      %v3498 = vld [vmem:[%s3440 + $0x130] sm:$0xf]
      %v3499 = vld [vmem:[%s3440 + $0x134] sm:$0xf]
      %v3500 = vld [vmem:[%s3440 + $0x138] sm:$0xf]
      %v3501 = vld [vmem:[%s3440 + $0xc] sm:$0x1]
      %v3502 = vld [vmem:[%s3440 + $0x1c] sm:$0x1]
      %v3503 = vld [vmem:[%s3440 + $0x2c] sm:$0x1]
      %v3504 = vld [vmem:[%s3440 + $0x3c] sm:$0x1]
      %v3505 = vld [vmem:[%s3440 + $0x4c] sm:$0x1]
      %v3506 = vld [vmem:[%s3440 + $0x5c] sm:$0x1]
      %v3507 = vld [vmem:[%s3440 + $0x6c] sm:$0x1]
      %v3508 = vld [vmem:[%s3440 + $0x7c] sm:$0x1]
      %v3509 = vld [vmem:[%s3440 + $0x8c] sm:$0x1]
      %v3510 = vld [vmem:[%s3440 + $0x9c] sm:$0x1]
      %v3511 = vld [vmem:[%s3440 + $0xac] sm:$0x1]
      %v3512 = vld [vmem:[%s3440 + $0xbc] sm:$0x1]
      %v3513 = vld [vmem:[%s3440 + $0xcc] sm:$0x1]
      %v3514 = vld [vmem:[%s3440 + $0xdc] sm:$0x1]
      %v3515 = vld [vmem:[%s3440 + $0xec] sm:$0x1]
      %v3516 = vld [vmem:[%s3440 + $0xfc] sm:$0x1]
      %v3517 = vld [vmem:[%s3440 + $0x10c] sm:$0x1]
      %v3518 = vld [vmem:[%s3440 + $0x11c] sm:$0x1]
      %v3519 = vld [vmem:[%s3440 + $0x12c] sm:$0x1]
      %v3520 = vld [vmem:[%s3440 + $0x13c] sm:$0x1]
      %v3521 = vld [vmem:[%s3440] sm:$0xe]
      %v3522 = vld [vmem:[%s3440 + $0x10] sm:$0xe]
      %v3523 = vld [vmem:[%s3440 + $0x20] sm:$0xe]
      %v3524 = vld [vmem:[%s3440 + $0x30] sm:$0xe]
      %v3525 = vld [vmem:[%s3440 + $0x40] sm:$0xe]
      %v3526 = vld [vmem:[%s3440 + $0x50] sm:$0xe]
      %v3527 = vld [vmem:[%s3440 + $0x60] sm:$0xe]
      %v3528 = vld [vmem:[%s3440 + $0x70] sm:$0xe]
      %v3529 = vld [vmem:[%s3440 + $0x80] sm:$0xe]
      %v3530 = vld [vmem:[%s3440 + $0x90] sm:$0xe]
      %v3531 = vld [vmem:[%s3440 + $0xa0] sm:$0xe]
      %v3532 = vld [vmem:[%s3440 + $0xb0] sm:$0xe]
      %v3533 = vld [vmem:[%s3440 + $0xc0] sm:$0xe]
      %v3534 = vld [vmem:[%s3440 + $0xd0] sm:$0xe]
      %v3535 = vld [vmem:[%s3440 + $0xe0] sm:$0xe]
      %v3536 = vld [vmem:[%s3440 + $0xf0] sm:$0xe]
      %v3537 = vld [vmem:[%s3440 + $0x100] sm:$0xe]
      %v3538 = vld [vmem:[%s3440 + $0x110] sm:$0xe]
      %v3539 = vld [vmem:[%s3440 + $0x120] sm:$0xe]
      %v3540 = vld [vmem:[%s3440 + $0x130] sm:$0xe]
      %v3601 = vunpack.c.l.b16 %v3441
      %v3602 = vunpack.c.l.b16 %v3442
      %v3603 = vunpack.c.l.b16 %v3443
      %v3604 = vunpack.c.l.b16 %v3444
      %v3605 = vunpack.c.l.b16 %v3445
      %v3606 = vunpack.c.l.b16 %v3446
      %v3607 = vunpack.c.l.b16 %v3447
      %v3608 = vunpack.c.l.b16 %v3448
      %v3609 = vunpack.c.l.b16 %v3449
      %v3610 = vunpack.c.l.b16 %v3450
      %v3611 = vunpack.c.l.b16 %v3451
      %v3612 = vunpack.c.l.b16 %v3452
      %v3613 = vunpack.c.l.b16 %v3453
      %v3614 = vunpack.c.l.b16 %v3454
      %v3615 = vunpack.c.l.b16 %v3455
      %v3616 = vunpack.c.l.b16 %v3456
      %v3617 = vunpack.c.l.b16 %v3457
      %v3618 = vunpack.c.l.b16 %v3458
      %v3619 = vunpack.c.l.b16 %v3459
      %v3620 = vunpack.c.l.b16 %v3460
      %v3621 = vunpack.c.l.b16 %v3461
      %v3622 = vunpack.c.l.b16 %v3462
      %v3623 = vunpack.c.l.b16 %v3463
      %v3624 = vunpack.c.l.b16 %v3464
      %v3625 = vunpack.c.l.b16 %v3465
      %v3626 = vunpack.c.l.b16 %v3466
      %v3627 = vunpack.c.l.b16 %v3467
      %v3628 = vunpack.c.l.b16 %v3468
      %v3629 = vunpack.c.l.b16 %v3469
      %v3630 = vunpack.c.l.b16 %v3470
      %v3631 = vunpack.c.l.b16 %v3471
      %v3632 = vunpack.c.l.b16 %v3472
      %v3633 = vunpack.c.l.b16 %v3473
      %v3634 = vunpack.c.l.b16 %v3474
      %v3635 = vunpack.c.l.b16 %v3475
      %v3636 = vunpack.c.l.b16 %v3476
      %v3637 = vunpack.c.l.b16 %v3477
      %v3638 = vunpack.c.l.b16 %v3478
      %v3639 = vunpack.c.l.b16 %v3479
      %v3640 = vunpack.c.l.b16 %v3480
      %v3641 = vunpack.c.l.b16 %v3481
      %v3642 = vunpack.c.l.b16 %v3482
      %v3643 = vunpack.c.l.b16 %v3483
      %v3644 = vunpack.c.l.b16 %v3484
      %v3645 = vunpack.c.l.b16 %v3485
      %v3646 = vunpack.c.l.b16 %v3486
      %v3647 = vunpack.c.l.b16 %v3487
      %v3648 = vunpack.c.l.b16 %v3488
      %v3649 = vunpack.c.l.b16 %v3489
      %v3650 = vunpack.c.l.b16 %v3490
      %v3651 = vunpack.c.l.b16 %v3491
      %v3652 = vunpack.c.l.b16 %v3492
      %v3653 = vunpack.c.l.b16 %v3493
      %v3654 = vunpack.c.l.b16 %v3494
      %v3655 = vunpack.c.l.b16 %v3495
      %v3656 = vunpack.c.l.b16 %v3496
      %v3657 = vunpack.c.l.b16 %v3497
      %v3658 = vunpack.c.l.b16 %v3498
      %v3659 = vunpack.c.l.b16 %v3499
      %v3660 = vunpack.c.l.b16 %v3500
      %v3661 = vpack.c.b16 %v3602, %v3601
      %v3662 = vpack.c.b16 %v3603, %v3603
      %v3663 = vpack.c.b16 %v3605, %v3604
      %v3664 = vpack.c.b16 %v3606, %v3606
      %v3665 = vpack.c.b16 %v3608, %v3607
      %v3666 = vpack.c.b16 %v3609, %v3609
      %v3667 = vpack.c.b16 %v3611, %v3610
      %v3668 = vpack.c.b16 %v3612, %v3612
      %v3669 = vpack.c.b16 %v3614, %v3613
      %v3670 = vpack.c.b16 %v3615, %v3615
      %v3671 = vpack.c.b16 %v3617, %v3616
      %v3672 = vpack.c.b16 %v3618, %v3618
      %v3673 = vpack.c.b16 %v3620, %v3619
      %v3674 = vpack.c.b16 %v3621, %v3621
      %v3675 = vpack.c.b16 %v3623, %v3622
      %v3676 = vpack.c.b16 %v3624, %v3624
      %v3677 = vpack.c.b16 %v3626, %v3625
      %v3678 = vpack.c.b16 %v3627, %v3627
      %v3679 = vpack.c.b16 %v3629, %v3628
      %v3680 = vpack.c.b16 %v3630, %v3630
      %v3681 = vpack.c.b16 %v3632, %v3631
      %v3682 = vpack.c.b16 %v3633, %v3633
      %v3683 = vpack.c.b16 %v3635, %v3634
      %v3684 = vpack.c.b16 %v3636, %v3636
      %v3685 = vpack.c.b16 %v3638, %v3637
      %v3686 = vpack.c.b16 %v3639, %v3639
      %v3687 = vpack.c.b16 %v3641, %v3640
      %v3688 = vpack.c.b16 %v3642, %v3642
      %v3689 = vpack.c.b16 %v3644, %v3643
      %v3690 = vpack.c.b16 %v3645, %v3645
      %v3691 = vpack.c.b16 %v3647, %v3646
      %v3692 = vpack.c.b16 %v3648, %v3648
      %v3693 = vpack.c.b16 %v3650, %v3649
      %v3694 = vpack.c.b16 %v3651, %v3651
      %v3695 = vpack.c.b16 %v3653, %v3652
      %v3696 = vpack.c.b16 %v3654, %v3654
      %v3697 = vpack.c.b16 %v3656, %v3655
      %v3698 = vpack.c.b16 %v3657, %v3657
      %v3699 = vpack.c.b16 %v3659, %v3658
      %v3700 = vpack.c.b16 %v3660, %v3660
      %v3721 = vunpack.c.l.b16 %v3501
      %v3722 = vunpack.c.l.b16 %v3502
      %v3723 = vunpack.c.l.b16 %v3503
      %v3724 = vunpack.c.l.b16 %v3504
      %v3725 = vunpack.c.l.b16 %v3505
      %v3726 = vunpack.c.l.b16 %v3506
      %v3727 = vunpack.c.l.b16 %v3507
      %v3728 = vunpack.c.l.b16 %v3508
      %v3729 = vunpack.c.l.b16 %v3509
      %v3730 = vunpack.c.l.b16 %v3510
      %v3731 = vunpack.c.l.b16 %v3511
      %v3732 = vunpack.c.l.b16 %v3512
      %v3733 = vunpack.c.l.b16 %v3513
      %v3734 = vunpack.c.l.b16 %v3514
      %v3735 = vunpack.c.l.b16 %v3515
      %v3736 = vunpack.c.l.b16 %v3516
      %v3737 = vunpack.c.l.b16 %v3517
      %v3738 = vunpack.c.l.b16 %v3518
      %v3739 = vunpack.c.l.b16 %v3519
      %v3740 = vunpack.c.l.b16 %v3520
      %v3741 = vpack.c.b16 %v3721, %v3603
      %v3742 = vpack.c.b16 %v3722, %v3606
      %v3743 = vpack.c.b16 %v3723, %v3609
      %v3744 = vpack.c.b16 %v3724, %v3612
      %v3745 = vpack.c.b16 %v3725, %v3615
      %v3746 = vpack.c.b16 %v3726, %v3618
      %v3747 = vpack.c.b16 %v3727, %v3621
      %v3748 = vpack.c.b16 %v3728, %v3624
      %v3749 = vpack.c.b16 %v3729, %v3627
      %v3750 = vpack.c.b16 %v3730, %v3630
      %v3751 = vpack.c.b16 %v3731, %v3633
      %v3752 = vpack.c.b16 %v3732, %v3636
      %v3753 = vpack.c.b16 %v3733, %v3639
      %v3754 = vpack.c.b16 %v3734, %v3642
      %v3755 = vpack.c.b16 %v3735, %v3645
      %v3756 = vpack.c.b16 %v3736, %v3648
      %v3757 = vpack.c.b16 %v3737, %v3651
      %v3758 = vpack.c.b16 %v3738, %v3654
      %v3759 = vpack.c.b16 %v3739, %v3657
      %v3760 = vpack.c.b16 %v3740, %v3660
      %v3762 = vshrl.u32 %v3661, 16
      %v3764 = vshll.u32 %v3661, 16
      %v3766 = vrot.slane %v3764, 1
      %v3767 = vor.u32 %v3762, %v3766
      %v3769 = vshll.u32 %v3741, 16
      %v3771 = vrot.slane %v3769, 1
      %v3772 = vsel %vm559, %v3767, %v3771
      %v3773 = vshrl.u32 %v3741, 16
      %v3775 = vor.u32 %v3773, %v3771
      %v3777 = vshrl.u32 %v3663, 16
      %v3779 = vshll.u32 %v3663, 16
      %v3781 = vrot.slane %v3779, 1
      %v3782 = vor.u32 %v3777, %v3781
      %v3784 = vshll.u32 %v3742, 16
      %v3786 = vrot.slane %v3784, 1
      %v3787 = vsel %vm559, %v3782, %v3786
      %v3788 = vshrl.u32 %v3742, 16
      %v3790 = vor.u32 %v3788, %v3786
      %v3792 = vshrl.u32 %v3665, 16
      %v3794 = vshll.u32 %v3665, 16
      %v3796 = vrot.slane %v3794, 1
      %v3797 = vor.u32 %v3792, %v3796
      %v3799 = vshll.u32 %v3743, 16
      %v3801 = vrot.slane %v3799, 1
      %v3802 = vsel %vm559, %v3797, %v3801
      %v3803 = vshrl.u32 %v3743, 16
      %v3805 = vor.u32 %v3803, %v3801
      %v3807 = vshrl.u32 %v3667, 16
      %v3809 = vshll.u32 %v3667, 16
      %v3811 = vrot.slane %v3809, 1
      %v3812 = vor.u32 %v3807, %v3811
      %v3814 = vshll.u32 %v3744, 16
      %v3816 = vrot.slane %v3814, 1
      %v3817 = vsel %vm559, %v3812, %v3816
      %v3818 = vshrl.u32 %v3744, 16
      %v3820 = vor.u32 %v3818, %v3816
      %v3822 = vshrl.u32 %v3669, 16
      %v3824 = vshll.u32 %v3669, 16
      %v3826 = vrot.slane %v3824, 1
      %v3827 = vor.u32 %v3822, %v3826
      %v3829 = vshll.u32 %v3745, 16
      %v3831 = vrot.slane %v3829, 1
      %v3832 = vsel %vm559, %v3827, %v3831
      %v3833 = vshrl.u32 %v3745, 16
      %v3835 = vor.u32 %v3833, %v3831
      %v3837 = vshrl.u32 %v3671, 16
      %v3839 = vshll.u32 %v3671, 16
      %v3841 = vrot.slane %v3839, 1
      %v3842 = vor.u32 %v3837, %v3841
      %v3844 = vshll.u32 %v3746, 16
      %v3846 = vrot.slane %v3844, 1
      %v3847 = vsel %vm559, %v3842, %v3846
      %v3848 = vshrl.u32 %v3746, 16
      %v3850 = vor.u32 %v3848, %v3846
      %v3852 = vshrl.u32 %v3673, 16
      %v3854 = vshll.u32 %v3673, 16
      %v3856 = vrot.slane %v3854, 1
      %v3857 = vor.u32 %v3852, %v3856
      %v3859 = vshll.u32 %v3747, 16
      %v3861 = vrot.slane %v3859, 1
      %v3862 = vsel %vm559, %v3857, %v3861
      %v3863 = vshrl.u32 %v3747, 16
      %v3865 = vor.u32 %v3863, %v3861
      %v3867 = vshrl.u32 %v3675, 16
      %v3869 = vshll.u32 %v3675, 16
      %v3871 = vrot.slane %v3869, 1
      %v3872 = vor.u32 %v3867, %v3871
      %v3874 = vshll.u32 %v3748, 16
      %v3876 = vrot.slane %v3874, 1
      %v3877 = vsel %vm559, %v3872, %v3876
      %v3878 = vshrl.u32 %v3748, 16
      %v3880 = vor.u32 %v3878, %v3876
      %v3882 = vshrl.u32 %v3677, 16
      %v3884 = vshll.u32 %v3677, 16
      %v3886 = vrot.slane %v3884, 1
      %v3887 = vor.u32 %v3882, %v3886
      %v3889 = vshll.u32 %v3749, 16
      %v3891 = vrot.slane %v3889, 1
      %v3892 = vsel %vm559, %v3887, %v3891
      %v3893 = vshrl.u32 %v3749, 16
      %v3895 = vor.u32 %v3893, %v3891
      %v3897 = vshrl.u32 %v3679, 16
      %v3899 = vshll.u32 %v3679, 16
      %v3901 = vrot.slane %v3899, 1
      %v3902 = vor.u32 %v3897, %v3901
      %v3904 = vshll.u32 %v3750, 16
      %v3906 = vrot.slane %v3904, 1
      %v3907 = vsel %vm559, %v3902, %v3906
      %v3908 = vshrl.u32 %v3750, 16
      %v3910 = vor.u32 %v3908, %v3906
      %v3912 = vshrl.u32 %v3681, 16
      %v3914 = vshll.u32 %v3681, 16
      %v3916 = vrot.slane %v3914, 1
      %v3917 = vor.u32 %v3912, %v3916
      %v3919 = vshll.u32 %v3751, 16
      %v3921 = vrot.slane %v3919, 1
      %v3922 = vsel %vm559, %v3917, %v3921
      %v3923 = vshrl.u32 %v3751, 16
      %v3925 = vor.u32 %v3923, %v3921
      %v3927 = vshrl.u32 %v3683, 16
      %v3929 = vshll.u32 %v3683, 16
      %v3931 = vrot.slane %v3929, 1
      %v3932 = vor.u32 %v3927, %v3931
      %v3934 = vshll.u32 %v3752, 16
      %v3936 = vrot.slane %v3934, 1
      %v3937 = vsel %vm559, %v3932, %v3936
      %v3938 = vshrl.u32 %v3752, 16
      %v3940 = vor.u32 %v3938, %v3936
      %v3942 = vshrl.u32 %v3685, 16
      %v3944 = vshll.u32 %v3685, 16
      %v3946 = vrot.slane %v3944, 1
      %v3947 = vor.u32 %v3942, %v3946
      %v3949 = vshll.u32 %v3753, 16
      %v3951 = vrot.slane %v3949, 1
      %v3952 = vsel %vm559, %v3947, %v3951
      %v3953 = vshrl.u32 %v3753, 16
      %v3955 = vor.u32 %v3953, %v3951
      %v3957 = vshrl.u32 %v3687, 16
      %v3959 = vshll.u32 %v3687, 16
      %v3961 = vrot.slane %v3959, 1
      %v3962 = vor.u32 %v3957, %v3961
      %v3964 = vshll.u32 %v3754, 16
      %v3966 = vrot.slane %v3964, 1
      %v3967 = vsel %vm559, %v3962, %v3966
      %v3968 = vshrl.u32 %v3754, 16
      %v3970 = vor.u32 %v3968, %v3966
      %v3972 = vshrl.u32 %v3689, 16
      %v3974 = vshll.u32 %v3689, 16
      %v3976 = vrot.slane %v3974, 1
      %v3977 = vor.u32 %v3972, %v3976
      %v3979 = vshll.u32 %v3755, 16
      %v3981 = vrot.slane %v3979, 1
      %v3982 = vsel %vm559, %v3977, %v3981
      %v3983 = vshrl.u32 %v3755, 16
      %v3985 = vor.u32 %v3983, %v3981
      %v3987 = vshrl.u32 %v3691, 16
      %v3989 = vshll.u32 %v3691, 16
      %v3991 = vrot.slane %v3989, 1
      %v3992 = vor.u32 %v3987, %v3991
      %v3994 = vshll.u32 %v3756, 16
      %v3996 = vrot.slane %v3994, 1
      %v3997 = vsel %vm559, %v3992, %v3996
      %v3998 = vshrl.u32 %v3756, 16
      %v4000 = vor.u32 %v3998, %v3996
      %v4002 = vshrl.u32 %v3693, 16
      %v4004 = vshll.u32 %v3693, 16
      %v4006 = vrot.slane %v4004, 1
      %v4007 = vor.u32 %v4002, %v4006
      %v4009 = vshll.u32 %v3757, 16
      %v4011 = vrot.slane %v4009, 1
      %v4012 = vsel %vm559, %v4007, %v4011
      %v4013 = vshrl.u32 %v3757, 16
      %v4015 = vor.u32 %v4013, %v4011
      %v4017 = vshrl.u32 %v3695, 16
      %v4019 = vshll.u32 %v3695, 16
      %v4021 = vrot.slane %v4019, 1
      %v4022 = vor.u32 %v4017, %v4021
      %v4024 = vshll.u32 %v3758, 16
      %v4026 = vrot.slane %v4024, 1
      %v4027 = vsel %vm559, %v4022, %v4026
      %v4028 = vshrl.u32 %v3758, 16
      %v4030 = vor.u32 %v4028, %v4026
      %v4032 = vshrl.u32 %v3697, 16
      %v4034 = vshll.u32 %v3697, 16
      %v4036 = vrot.slane %v4034, 1
      %v4037 = vor.u32 %v4032, %v4036
      %v4039 = vshll.u32 %v3759, 16
      %v4041 = vrot.slane %v4039, 1
      %v4042 = vsel %vm559, %v4037, %v4041
      %v4043 = vshrl.u32 %v3759, 16
      %v4045 = vor.u32 %v4043, %v4041
      %v4047 = vshrl.u32 %v3699, 16
      %v4049 = vshll.u32 %v3699, 16
      %v4051 = vrot.slane %v4049, 1
      %v4052 = vor.u32 %v4047, %v4051
      %v4054 = vshll.u32 %v3760, 16
      %v4056 = vrot.slane %v4054, 1
      %v4057 = vsel %vm559, %v4052, %v4056
      %v4058 = vshrl.u32 %v3760, 16
      %v4060 = vor.u32 %v4058, %v4056
      %4061 = vrot.lane.b32.xlu0 %v3772, 16
      %v4062 = vpop.permute.xlu0 %4061
      %4063 = vrot.lane.b32.xlu0 %v3775, 16
      %v4064 = vpop.permute.xlu0 %4063
      %4065 = vrot.lane.b32.xlu0 %v3787, 16
      %v4066 = vpop.permute.xlu0 %4065
      %4067 = vrot.lane.b32.xlu0 %v3790, 16
      %v4068 = vpop.permute.xlu0 %4067
      %4069 = vrot.lane.b32.xlu0 %v3802, 16
      %v4070 = vpop.permute.xlu0 %4069
      %4071 = vrot.lane.b32.xlu0 %v3805, 16
      %v4072 = vpop.permute.xlu0 %4071
      %4073 = vrot.lane.b32.xlu0 %v3817, 16
      %v4074 = vpop.permute.xlu0 %4073
      %4075 = vrot.lane.b32.xlu0 %v3820, 16
      %v4076 = vpop.permute.xlu0 %4075
      %4077 = vrot.lane.b32.xlu0 %v3832, 16
      %v4078 = vpop.permute.xlu0 %4077
      %4079 = vrot.lane.b32.xlu0 %v3835, 16
      %v4080 = vpop.permute.xlu0 %4079
      %4081 = vrot.lane.b32.xlu0 %v3847, 16
      %v4082 = vpop.permute.xlu0 %4081
      %4083 = vrot.lane.b32.xlu0 %v3850, 16
      %v4084 = vpop.permute.xlu0 %4083
      %4085 = vrot.lane.b32.xlu0 %v3862, 16
      %v4086 = vpop.permute.xlu0 %4085
      %4087 = vrot.lane.b32.xlu0 %v3865, 16
      %v4088 = vpop.permute.xlu0 %4087
      %4089 = vrot.lane.b32.xlu0 %v3877, 16
      %v4090 = vpop.permute.xlu0 %4089
      %4091 = vrot.lane.b32.xlu0 %v3880, 16
      %v4092 = vpop.permute.xlu0 %4091
      %4093 = vrot.lane.b32.xlu0 %v3892, 16
      %v4094 = vpop.permute.xlu0 %4093
      %4095 = vrot.lane.b32.xlu0 %v3895, 16
      %v4096 = vpop.permute.xlu0 %4095
      %4097 = vrot.lane.b32.xlu0 %v3907, 16
      %v4098 = vpop.permute.xlu0 %4097
      %4099 = vrot.lane.b32.xlu0 %v3910, 16
      %v4100 = vpop.permute.xlu0 %4099
      %4101 = vrot.lane.b32.xlu0 %v3922, 16
      %v4102 = vpop.permute.xlu0 %4101
      %4103 = vrot.lane.b32.xlu0 %v3925, 16
      %v4104 = vpop.permute.xlu0 %4103
      %4105 = vrot.lane.b32.xlu0 %v3937, 16
      %v4106 = vpop.permute.xlu0 %4105
      %4107 = vrot.lane.b32.xlu0 %v3940, 16
      %v4108 = vpop.permute.xlu0 %4107
      %4109 = vrot.lane.b32.xlu0 %v3952, 16
      %v4110 = vpop.permute.xlu0 %4109
      %4111 = vrot.lane.b32.xlu0 %v3955, 16
      %v4112 = vpop.permute.xlu0 %4111
      %4113 = vrot.lane.b32.xlu0 %v3967, 16
      %v4114 = vpop.permute.xlu0 %4113
      %4115 = vrot.lane.b32.xlu0 %v3970, 16
      %v4116 = vpop.permute.xlu0 %4115
      %4117 = vrot.lane.b32.xlu0 %v3982, 16
      %v4118 = vpop.permute.xlu0 %4117
      %4119 = vrot.lane.b32.xlu0 %v3985, 16
      %v4120 = vpop.permute.xlu0 %4119
      %4121 = vrot.lane.b32.xlu0 %v3997, 16
      %v4122 = vpop.permute.xlu0 %4121
      %4123 = vrot.lane.b32.xlu0 %v4000, 16
      %v4124 = vpop.permute.xlu0 %4123
      %4125 = vrot.lane.b32.xlu0 %v4012, 16
      %v4126 = vpop.permute.xlu0 %4125
      %4127 = vrot.lane.b32.xlu0 %v4015, 16
      %v4128 = vpop.permute.xlu0 %4127
      %4129 = vrot.lane.b32.xlu0 %v4027, 16
      %v4130 = vpop.permute.xlu0 %4129
      %4131 = vrot.lane.b32.xlu0 %v4030, 16
      %v4132 = vpop.permute.xlu0 %4131
      %4133 = vrot.lane.b32.xlu0 %v4042, 16
      %v4134 = vpop.permute.xlu0 %4133
      %4135 = vrot.lane.b32.xlu0 %v4045, 16
      %v4136 = vpop.permute.xlu0 %4135
      %4137 = vrot.lane.b32.xlu0 %v4057, 16
      %v4138 = vpop.permute.xlu0 %4137
      %4139 = vrot.lane.b32.xlu0 %v4060, 16
      %v4140 = vpop.permute.xlu0 %4139
      %v4161 = vunpack.c.l.b16 %v3521
      %v4162 = vunpack.c.l.b16 %v3522
      %v4163 = vunpack.c.l.b16 %v3523
      %v4164 = vunpack.c.l.b16 %v3524
      %v4165 = vunpack.c.l.b16 %v3525
      %v4166 = vunpack.c.l.b16 %v3526
      %v4167 = vunpack.c.l.b16 %v3527
      %v4168 = vunpack.c.l.b16 %v3528
      %v4169 = vunpack.c.l.b16 %v3529
      %v4170 = vunpack.c.l.b16 %v3530
      %v4171 = vunpack.c.l.b16 %v3531
      %v4172 = vunpack.c.l.b16 %v3532
      %v4173 = vunpack.c.l.b16 %v3533
      %v4174 = vunpack.c.l.b16 %v3534
      %v4175 = vunpack.c.l.b16 %v3535
      %v4176 = vunpack.c.l.b16 %v3536
      %v4177 = vunpack.c.l.b16 %v3537
      %v4178 = vunpack.c.l.b16 %v3538
      %v4179 = vunpack.c.l.b16 %v3539
      %v4180 = vunpack.c.l.b16 %v3540
      %v4181 = vpack.c.b16 %v3602, %v4161
      %v4182 = vpack.c.b16 %v3605, %v4162
      %v4183 = vpack.c.b16 %v3608, %v4163
      %v4184 = vpack.c.b16 %v3611, %v4164
      %v4185 = vpack.c.b16 %v3614, %v4165
      %v4186 = vpack.c.b16 %v3617, %v4166
      %v4187 = vpack.c.b16 %v3620, %v4167
      %v4188 = vpack.c.b16 %v3623, %v4168
      %v4189 = vpack.c.b16 %v3626, %v4169
      %v4190 = vpack.c.b16 %v3629, %v4170
      %v4191 = vpack.c.b16 %v3632, %v4171
      %v4192 = vpack.c.b16 %v3635, %v4172
      %v4193 = vpack.c.b16 %v3638, %v4173
      %v4194 = vpack.c.b16 %v3641, %v4174
      %v4195 = vpack.c.b16 %v3644, %v4175
      %v4196 = vpack.c.b16 %v3647, %v4176
      %v4197 = vpack.c.b16 %v3650, %v4177
      %v4198 = vpack.c.b16 %v3653, %v4178
      %v4199 = vpack.c.b16 %v3656, %v4179
      %v4200 = vpack.c.b16 %v3659, %v4180
      %v4201 = vrot.slane %v4181, 1
      %v4202 = vrot.slane %v3741, 1
      %v4203 = vsel %vm1000, %v4201, %v4202
      %v4204 = vrot.slane %v4182, 1
      %v4205 = vrot.slane %v3742, 1
      %v4206 = vsel %vm1000, %v4204, %v4205
      %v4207 = vrot.slane %v4183, 1
      %v4208 = vrot.slane %v3743, 1
      %v4209 = vsel %vm1000, %v4207, %v4208
      %v4210 = vrot.slane %v4184, 1
      %v4211 = vrot.slane %v3744, 1
      %v4212 = vsel %vm1000, %v4210, %v4211
      %v4213 = vrot.slane %v4185, 1
      %v4214 = vrot.slane %v3745, 1
      %v4215 = vsel %vm1000, %v4213, %v4214
      %v4216 = vrot.slane %v4186, 1
      %v4217 = vrot.slane %v3746, 1
      %v4218 = vsel %vm1000, %v4216, %v4217
      %v4219 = vrot.slane %v4187, 1
      %v4220 = vrot.slane %v3747, 1
      %v4221 = vsel %vm1000, %v4219, %v4220
      %v4222 = vrot.slane %v4188, 1
      %v4223 = vrot.slane %v3748, 1
      %v4224 = vsel %vm1000, %v4222, %v4223
      %v4225 = vrot.slane %v4189, 1
      %v4226 = vrot.slane %v3749, 1
      %v4227 = vsel %vm1000, %v4225, %v4226
      %v4228 = vrot.slane %v4190, 1
      %v4229 = vrot.slane %v3750, 1
      %v4230 = vsel %vm1000, %v4228, %v4229
      %v4231 = vrot.slane %v4191, 1
      %v4232 = vrot.slane %v3751, 1
      %v4233 = vsel %vm1000, %v4231, %v4232
      %v4234 = vrot.slane %v4192, 1
      %v4235 = vrot.slane %v3752, 1
      %v4236 = vsel %vm1000, %v4234, %v4235
      %v4237 = vrot.slane %v4193, 1
      %v4238 = vrot.slane %v3753, 1
      %v4239 = vsel %vm1000, %v4237, %v4238
      %v4240 = vrot.slane %v4194, 1
      %v4241 = vrot.slane %v3754, 1
      %v4242 = vsel %vm1000, %v4240, %v4241
      %v4243 = vrot.slane %v4195, 1
      %v4244 = vrot.slane %v3755, 1
      %v4245 = vsel %vm1000, %v4243, %v4244
      %v4246 = vrot.slane %v4196, 1
      %v4247 = vrot.slane %v3756, 1
      %v4248 = vsel %vm1000, %v4246, %v4247
      %v4249 = vrot.slane %v4197, 1
      %v4250 = vrot.slane %v3757, 1
      %v4251 = vsel %vm1000, %v4249, %v4250
      %v4252 = vrot.slane %v4198, 1
      %v4253 = vrot.slane %v3758, 1
      %v4254 = vsel %vm1000, %v4252, %v4253
      %v4255 = vrot.slane %v4199, 1
      %v4256 = vrot.slane %v3759, 1
      %v4257 = vsel %vm1000, %v4255, %v4256
      %v4258 = vrot.slane %v4200, 1
      %v4259 = vrot.slane %v3760, 1
      %v4260 = vsel %vm1000, %v4258, %v4259
      %4261 = vrot.lane.b32.xlu0 %v4203, 32
      %v4262 = vpop.permute.xlu0 %4261
      %4263 = vrot.lane.b32.xlu0 %v4202, 32
      %v4264 = vpop.permute.xlu0 %4263
      %4265 = vrot.lane.b32.xlu0 %v4206, 32
      %v4266 = vpop.permute.xlu0 %4265
      %4267 = vrot.lane.b32.xlu0 %v4205, 32
      %v4268 = vpop.permute.xlu0 %4267
      %4269 = vrot.lane.b32.xlu0 %v4209, 32
      %v4270 = vpop.permute.xlu0 %4269
      %4271 = vrot.lane.b32.xlu0 %v4208, 32
      %v4272 = vpop.permute.xlu0 %4271
      %4273 = vrot.lane.b32.xlu0 %v4212, 32
      %v4274 = vpop.permute.xlu0 %4273
      %4275 = vrot.lane.b32.xlu0 %v4211, 32
      %v4276 = vpop.permute.xlu0 %4275
      %4277 = vrot.lane.b32.xlu0 %v4215, 32
      %v4278 = vpop.permute.xlu0 %4277
      %4279 = vrot.lane.b32.xlu0 %v4214, 32
      %v4280 = vpop.permute.xlu0 %4279
      %4281 = vrot.lane.b32.xlu0 %v4218, 32
      %v4282 = vpop.permute.xlu0 %4281
      %4283 = vrot.lane.b32.xlu0 %v4217, 32
      %v4284 = vpop.permute.xlu0 %4283
      %4285 = vrot.lane.b32.xlu0 %v4221, 32
      %v4286 = vpop.permute.xlu0 %4285
      %4287 = vrot.lane.b32.xlu0 %v4220, 32
      %v4288 = vpop.permute.xlu0 %4287
      %4289 = vrot.lane.b32.xlu0 %v4224, 32
      %v4290 = vpop.permute.xlu0 %4289
      %4291 = vrot.lane.b32.xlu0 %v4223, 32
      %v4292 = vpop.permute.xlu0 %4291
      %4293 = vrot.lane.b32.xlu0 %v4227, 32
      %v4294 = vpop.permute.xlu0 %4293
      %4295 = vrot.lane.b32.xlu0 %v4226, 32
      %v4296 = vpop.permute.xlu0 %4295
      %4297 = vrot.lane.b32.xlu0 %v4230, 32
      %v4298 = vpop.permute.xlu0 %4297
      %4299 = vrot.lane.b32.xlu0 %v4229, 32
      %v4300 = vpop.permute.xlu0 %4299
      %4301 = vrot.lane.b32.xlu0 %v4233, 32
      %v4302 = vpop.permute.xlu0 %4301
      %4303 = vrot.lane.b32.xlu0 %v4232, 32
      %v4304 = vpop.permute.xlu0 %4303
      %4305 = vrot.lane.b32.xlu0 %v4236, 32
      %v4306 = vpop.permute.xlu0 %4305
      %4307 = vrot.lane.b32.xlu0 %v4235, 32
      %v4308 = vpop.permute.xlu0 %4307
      %4309 = vrot.lane.b32.xlu0 %v4239, 32
      %v4310 = vpop.permute.xlu0 %4309
      %4311 = vrot.lane.b32.xlu0 %v4238, 32
      %v4312 = vpop.permute.xlu0 %4311
      %4313 = vrot.lane.b32.xlu0 %v4242, 32
      %v4314 = vpop.permute.xlu0 %4313
      %4315 = vrot.lane.b32.xlu0 %v4241, 32
      %v4316 = vpop.permute.xlu0 %4315
      %4317 = vrot.lane.b32.xlu0 %v4245, 32
      %v4318 = vpop.permute.xlu0 %4317
      %4319 = vrot.lane.b32.xlu0 %v4244, 32
      %v4320 = vpop.permute.xlu0 %4319
      %4321 = vrot.lane.b32.xlu0 %v4248, 32
      %v4322 = vpop.permute.xlu0 %4321
      %4323 = vrot.lane.b32.xlu0 %v4247, 32
      %v4324 = vpop.permute.xlu0 %4323
      %4325 = vrot.lane.b32.xlu0 %v4251, 32
      %v4326 = vpop.permute.xlu0 %4325
      %4327 = vrot.lane.b32.xlu0 %v4250, 32
      %v4328 = vpop.permute.xlu0 %4327
      %4329 = vrot.lane.b32.xlu0 %v4254, 32
      %v4330 = vpop.permute.xlu0 %4329
      %4331 = vrot.lane.b32.xlu0 %v4253, 32
      %v4332 = vpop.permute.xlu0 %4331
      %4333 = vrot.lane.b32.xlu0 %v4257, 32
      %v4334 = vpop.permute.xlu0 %4333
      %4335 = vrot.lane.b32.xlu0 %v4256, 32
      %v4336 = vpop.permute.xlu0 %4335
      %4337 = vrot.lane.b32.xlu0 %v4260, 32
      %v4338 = vpop.permute.xlu0 %4337
      %4339 = vrot.lane.b32.xlu0 %v4259, 32
      %v4340 = vpop.permute.xlu0 %4339
      %v4342 = vsel %vm1141, %v3661, %v4062
      %v4345 = vsel %vm1141, %v3662, %v4064
      %v4347 = vsel %vm1141, %v3663, %v4066
      %v4350 = vsel %vm1141, %v3664, %v4068
      %v4352 = vsel %vm1141, %v3665, %v4070
      %v4355 = vsel %vm1141, %v3666, %v4072
      %v4357 = vsel %vm1141, %v3667, %v4074
      %v4360 = vsel %vm1141, %v3668, %v4076
      %v4362 = vsel %vm1141, %v3669, %v4078
      %v4365 = vsel %vm1141, %v3670, %v4080
      %v4367 = vsel %vm1141, %v3671, %v4082
      %v4370 = vsel %vm1141, %v3672, %v4084
      %v4372 = vsel %vm1141, %v3673, %v4086
      %v4375 = vsel %vm1141, %v3674, %v4088
      %v4377 = vsel %vm1141, %v3675, %v4090
      %v4380 = vsel %vm1141, %v3676, %v4092
      %v4382 = vsel %vm1141, %v3677, %v4094
      %v4385 = vsel %vm1141, %v3678, %v4096
      %v4387 = vsel %vm1141, %v3679, %v4098
      %v4390 = vsel %vm1141, %v3680, %v4100
      %v4392 = vsel %vm1141, %v3681, %v4102
      %v4395 = vsel %vm1141, %v3682, %v4104
      %v4397 = vsel %vm1141, %v3683, %v4106
      %v4400 = vsel %vm1141, %v3684, %v4108
      %v4402 = vsel %vm1141, %v3685, %v4110
      %v4405 = vsel %vm1141, %v3686, %v4112
      %v4407 = vsel %vm1141, %v3687, %v4114
      %v4410 = vsel %vm1141, %v3688, %v4116
      %v4412 = vsel %vm1141, %v3689, %v4118
      %v4415 = vsel %vm1141, %v3690, %v4120
      %v4417 = vsel %vm1141, %v3691, %v4122
      %v4420 = vsel %vm1141, %v3692, %v4124
      %v4422 = vsel %vm1141, %v3693, %v4126
      %v4425 = vsel %vm1141, %v3694, %v4128
      %v4427 = vsel %vm1141, %v3695, %v4130
      %v4430 = vsel %vm1141, %v3696, %v4132
      %v4432 = vsel %vm1141, %v3697, %v4134
      %v4435 = vsel %vm1141, %v3698, %v4136
      %v4437 = vsel %vm1141, %v3699, %v4138
      %v4440 = vsel %vm1141, %v3700, %v4140
      %v4442 = vsel %vm1242, %v4342, %v4262
      %v4444 = vsel %vm1242, %v4345, %v4264
      %v4446 = vsel %vm1242, %v4347, %v4266
      %v4448 = vsel %vm1242, %v4350, %v4268
      %v4450 = vsel %vm1242, %v4352, %v4270
      %v4452 = vsel %vm1242, %v4355, %v4272
      %v4454 = vsel %vm1242, %v4357, %v4274
      %v4456 = vsel %vm1242, %v4360, %v4276
      %v4458 = vsel %vm1242, %v4362, %v4278
      %v4460 = vsel %vm1242, %v4365, %v4280
      %v4462 = vsel %vm1242, %v4367, %v4282
      %v4464 = vsel %vm1242, %v4370, %v4284
      %v4466 = vsel %vm1242, %v4372, %v4286
      %v4468 = vsel %vm1242, %v4375, %v4288
      %v4470 = vsel %vm1242, %v4377, %v4290
      %v4472 = vsel %vm1242, %v4380, %v4292
      %v4474 = vsel %vm1242, %v4382, %v4294
      %v4476 = vsel %vm1242, %v4385, %v4296
      %v4478 = vsel %vm1242, %v4387, %v4298
      %v4480 = vsel %vm1242, %v4390, %v4300
      %v4482 = vsel %vm1242, %v4392, %v4302
      %v4484 = vsel %vm1242, %v4395, %v4304
      %v4486 = vsel %vm1242, %v4397, %v4306
      %v4488 = vsel %vm1242, %v4400, %v4308
      %v4490 = vsel %vm1242, %v4402, %v4310
      %v4492 = vsel %vm1242, %v4405, %v4312
      %v4494 = vsel %vm1242, %v4407, %v4314
      %v4496 = vsel %vm1242, %v4410, %v4316
      %v4498 = vsel %vm1242, %v4412, %v4318
      %v4500 = vsel %vm1242, %v4415, %v4320
      %v4502 = vsel %vm1242, %v4417, %v4322
      %v4504 = vsel %vm1242, %v4420, %v4324
      %v4506 = vsel %vm1242, %v4422, %v4326
      %v4508 = vsel %vm1242, %v4425, %v4328
      %v4510 = vsel %vm1242, %v4427, %v4330
      %v4512 = vsel %vm1242, %v4430, %v4332
      %v4514 = vsel %vm1242, %v4432, %v4334
      %v4516 = vsel %vm1242, %v4435, %v4336
      %v4518 = vsel %vm1242, %v4437, %v4338
      %v4520 = vsel %vm1242, %v4440, %v4340
      %v4561 = vunpack.c.l.b16 %v4442
      %v4562 = vunpack.c.h.b16 %v4442
      %v4563 = vunpack.c.l.b16 %v4444
      %v4564 = vunpack.c.l.b16 %v4446
      %v4565 = vunpack.c.h.b16 %v4446
      %v4566 = vunpack.c.l.b16 %v4448
      %v4567 = vunpack.c.l.b16 %v4450
      %v4568 = vunpack.c.h.b16 %v4450
      %v4569 = vunpack.c.l.b16 %v4452
      %v4570 = vunpack.c.l.b16 %v4454
      %v4571 = vunpack.c.h.b16 %v4454
      %v4572 = vunpack.c.l.b16 %v4456
      %v4573 = vunpack.c.l.b16 %v4458
      %v4574 = vunpack.c.h.b16 %v4458
      %v4575 = vunpack.c.l.b16 %v4460
      %v4576 = vunpack.c.l.b16 %v4462
      %v4577 = vunpack.c.h.b16 %v4462
      %v4578 = vunpack.c.l.b16 %v4464
      %v4579 = vunpack.c.l.b16 %v4466
      %v4580 = vunpack.c.h.b16 %v4466
      %v4581 = vunpack.c.l.b16 %v4468
      %v4582 = vunpack.c.l.b16 %v4470
      %v4583 = vunpack.c.h.b16 %v4470
      %v4584 = vunpack.c.l.b16 %v4472
      %v4585 = vunpack.c.l.b16 %v4474
      %v4586 = vunpack.c.h.b16 %v4474
      %v4587 = vunpack.c.l.b16 %v4476
      %v4588 = vunpack.c.l.b16 %v4478
      %v4589 = vunpack.c.h.b16 %v4478
      %v4590 = vunpack.c.l.b16 %v4480
      %v4591 = vunpack.c.l.b16 %v4482
      %v4592 = vunpack.c.h.b16 %v4482
      %v4593 = vunpack.c.l.b16 %v4484
      %v4594 = vunpack.c.l.b16 %v4486
      %v4595 = vunpack.c.h.b16 %v4486
      %v4596 = vunpack.c.l.b16 %v4488
      %v4597 = vunpack.c.l.b16 %v4490
      %v4598 = vunpack.c.h.b16 %v4490
      %v4599 = vunpack.c.l.b16 %v4492
      %v4600 = vunpack.c.l.b16 %v4494
      %v4601 = vunpack.c.h.b16 %v4494
      %v4602 = vunpack.c.l.b16 %v4496
      %v4603 = vunpack.c.l.b16 %v4498
      %v4604 = vunpack.c.h.b16 %v4498
      %v4605 = vunpack.c.l.b16 %v4500
      %v4606 = vunpack.c.l.b16 %v4502
      %v4607 = vunpack.c.h.b16 %v4502
      %v4608 = vunpack.c.l.b16 %v4504
      %v4609 = vunpack.c.l.b16 %v4506
      %v4610 = vunpack.c.h.b16 %v4506
      %v4611 = vunpack.c.l.b16 %v4508
      %v4612 = vunpack.c.l.b16 %v4510
      %v4613 = vunpack.c.h.b16 %v4510
      %v4614 = vunpack.c.l.b16 %v4512
      %v4615 = vunpack.c.l.b16 %v4514
      %v4616 = vunpack.c.h.b16 %v4514
      %v4617 = vunpack.c.l.b16 %v4516
      %v4618 = vunpack.c.l.b16 %v4518
      %v4619 = vunpack.c.h.b16 %v4518
      %v4620 = vunpack.c.l.b16 %v4520
      %s4621 = scalar_lea.vmem %s2, 48
      %v4622 = vld [vmem:[%s4621] sm:$0xf]
      %v4623 = vld [vmem:[%s4621 + $0x4] sm:$0xf]
      %v4624 = vld [vmem:[%s4621 + $0x8] sm:$0xf]
      %v4625 = vld [vmem:[%s4621 + $0xc] sm:$0xf]
      %v4626 = vld [vmem:[%s4621 + $0x10] sm:$0xf]
      %v4627 = vld [vmem:[%s4621 + $0x14] sm:$0xf]
      %v4628 = vpack.c.b16 %v4562, %v4561
      %v4629 = vpack.c.b16 %v4564, %v4563
      %v4630 = vpack.c.b16 %v4566, %v4565
      %v4631 = vpack.c.b16 %v4568, %v4567
      %v4632 = vpack.c.b16 %v4570, %v4569
      %v4633 = vpack.c.b16 %v4572, %v4571
      %v4634 = vpack.c.b16 %v4574, %v4573
      %v4635 = vpack.c.b16 %v4576, %v4575
      %v4636 = vpack.c.b16 %v4578, %v4577
      %v4637 = vpack.c.b16 %v4580, %v4579
      %v4638 = vpack.c.b16 %v4582, %v4581
      %v4639 = vpack.c.b16 %v4584, %v4583
      %v4640 = vpack.c.b16 %v4586, %v4585
      %v4641 = vpack.c.b16 %v4588, %v4587
      %v4642 = vpack.c.b16 %v4590, %v4589
      %v4643 = vpack.c.b16 %v4592, %v4591
      %v4644 = vpack.c.b16 %v4594, %v4593
      %v4645 = vpack.c.b16 %v4596, %v4595
      %v4646 = vpack.c.b16 %v4598, %v4597
      %v4647 = vpack.c.b16 %v4600, %v4599
      %v4648 = vpack.c.b16 %v4602, %v4601
      %v4649 = vpack.c.b16 %v4604, %v4603
      %v4650 = vpack.c.b16 %v4606, %v4605
      %v4651 = vpack.c.b16 %v4608, %v4607
      %v4652 = vpack.c.b16 %v4610, %v4609
      %v4653 = vpack.c.b16 %v4612, %v4611
      %v4654 = vpack.c.b16 %v4614, %v4613
      %v4655 = vpack.c.b16 %v4616, %v4615
      %v4656 = vpack.c.b16 %v4618, %v4617
      %v4657 = vpack.c.b16 %v4620, %v4619
      %v4664 = vunpack.c.l.b16 %v4622
      %v4665 = vunpack.c.l.b16 %v4623
      %v4666 = vunpack.c.l.b16 %v4624
      %v4667 = vunpack.c.l.b16 %v4625
      %v4668 = vunpack.c.l.b16 %v4626
      %v4669 = vunpack.c.l.b16 %v4627
      %v4670 = vpack.c.b16 %v4665, %v4664
      %v4671 = vpack.c.b16 %v4667, %v4666
      %v4672 = vpack.c.b16 %v4669, %v4668
      %v4677 = vsel %vm2665, %v4628, 0
      %v4680 = vsel %vm2665, %v4629, 0
      %v4683 = vsel %vm2665, %v4630, 0
      %v4686 = vsel %vm2665, %v4631, 0
      %v4689 = vsel %vm2665, %v4632, 0
      %v4692 = vsel %vm2665, %v4633, 0
      %v4695 = vsel %vm2665, %v4634, 0
      %v4698 = vsel %vm2665, %v4635, 0
      %v4701 = vsel %vm2665, %v4636, 0
      %v4704 = vsel %vm2665, %v4637, 0
      %v4707 = vsel %vm2665, %v4638, 0
      %v4710 = vsel %vm2665, %v4639, 0
      %v4713 = vsel %vm2665, %v4640, 0
      %v4716 = vsel %vm2665, %v4641, 0
      %v4719 = vsel %vm2665, %v4642, 0
      %v4722 = vsel %vm2665, %v4643, 0
      %v4725 = vsel %vm2665, %v4644, 0
      %v4728 = vsel %vm2665, %v4645, 0
      %v4731 = vsel %vm2665, %v4646, 0
      %v4734 = vsel %vm2665, %v4647, 0
      %v4737 = vsel %vm2665, %v4648, 0
      %v4740 = vsel %vm2665, %v4649, 0
      %v4743 = vsel %vm2665, %v4650, 0
      %v4746 = vsel %vm2665, %v4651, 0
      %v4749 = vsel %vm2665, %v4652, 0
      %v4752 = vsel %vm2665, %v4653, 0
      %v4755 = vsel %vm2665, %v4654, 0
      %v4758 = vsel %vm2665, %v4655, 0
      %v4761 = vsel %vm2665, %v4656, 0
      %v4764 = vsel %vm2665, %v4657, 0
      %4766 = vmatprep.subr.bf16.mxu0 0
      %4767 = vmatpush1.bf16.msra.mxu0 %v4670
      %4768 = vmatprep.subr.bf16.mxu0 0
      %4769 = vmatpush1.bf16.msra.mxu0 %v4671
      %4770 = vmatprep.subr.bf16.mxu0 0
      %4771 = vmatpush1.bf16.msra.mxu0 %v4672
      %4772 = vmatprep.subr.bf16.mxu0 0
      %4773 = vmatpush1.bf16.msra.mxu0 0
      %4774 = vmatprep.subr.bf16.mxu0 0
      %4775 = vmatpush1.bf16.msra.mxu0 0
      %4776 = vmatprep.subr.bf16.mxu0 0
      %4777 = vmatpush1.bf16.msra.mxu0 0
      %4778 = vmatprep.subr.bf16.mxu0 0
      %4779 = vmatpush1.bf16.msra.mxu0 0
      %4780 = vmatprep.subr.bf16.mxu0 0
      %4781 = vmatpush1.bf16.msra.mxu0 0
      %4782 = vmatprep.subr.bf16.mxu0 0
      %4783 = vmatpush1.bf16.msra.mxu0 0
      %4784 = vmatprep.subr.bf16.mxu0 0
      %4785 = vmatpush1.bf16.msra.mxu0 0
      %4786 = vmatprep.subr.bf16.mxu0 0
      %4787 = vmatpush1.bf16.msra.mxu0 0
      %4788 = vmatprep.subr.bf16.mxu0 0
      %4789 = vmatpush1.bf16.msra.mxu0 0
      %4790 = vmatprep.subr.bf16.mxu0 0
      %4791 = vmatpush1.bf16.msra.mxu0 0
      %4792 = vmatprep.subr.bf16.mxu0 0
      %4793 = vmatpush1.bf16.msra.mxu0 0
      %4794 = vmatprep.subr.bf16.mxu0 0
      %4795 = vmatpush1.bf16.msra.mxu0 0
      %4796 = vmatprep.subr.bf16.mxu0 0
      %4797 = vmatpush1.bf16.msra.mxu0 0
      %4798 = vmatprep.mubr.bf16.mxu0 0
      %4799 = vmatmul.mubr.bf16.gmra.mrb[0].mxu0 %v4677
      %v4800 = vpop.f32.mrb[0].mxu0
      %v4801 = vadd.f32 0.0, %v4800
      %v4802 = vpop.f32.mrb[0].mxu0
      %v4803 = vpop.f32.mrb[0].mxu0
      %v4804 = vadd.f32 0.0, %v4803
      %v4805 = vpop.f32.mrb[0].mxu0
      %4806 = vmatprep.mubr.bf16.mxu0 0
      %4807 = vmatmul.mubr.bf16.gmra.mrb[0].mxu0 %v4680
      %v4808 = vpop.f32.mrb[0].mxu0
      %v4809 = vadd.f32 0.0, %v4808
      %v4810 = vpop.f32.mrb[0].mxu0
      %v4811 = vpop.f32.mrb[0].mxu0
      %v4812 = vadd.f32 0.0, %v4811
      %v4813 = vpop.f32.mrb[0].mxu0
      %4814 = vmatprep.mubr.bf16.mxu0 0
      %4815 = vmatmul.mubr.bf16.gmra.mrb[0].mxu0 %v4683
      %v4816 = vpop.f32.mrb[0].mxu0
      %v4817 = vadd.f32 0.0, %v4816
      %v4818 = vpop.f32.mrb[0].mxu0
      %v4819 = vpop.f32.mrb[0].mxu0
      %v4820 = vadd.f32 0.0, %v4819
      %v4821 = vpop.f32.mrb[0].mxu0
      %4822 = vmatprep.mubr.bf16.mxu0 0
      %4823 = vmatmul.mubr.bf16.gmra.mrb[0].mxu0 %v4686
      %v4824 = vpop.f32.mrb[0].mxu0
      %v4825 = vadd.f32 0.0, %v4824
      %v4826 = vpop.f32.mrb[0].mxu0
      %v4827 = vpop.f32.mrb[0].mxu0
      %v4828 = vadd.f32 0.0, %v4827
      %v4829 = vpop.f32.mrb[0].mxu0
      %4830 = vmatprep.mubr.bf16.mxu0 0
      %4831 = vmatmul.mubr.bf16.gmra.mrb[0].mxu0 %v4689
      %v4832 = vpop.f32.mrb[0].mxu0
      %v4833 = vadd.f32 0.0, %v4832
      %v4834 = vpop.f32.mrb[0].mxu0
      %v4835 = vpop.f32.mrb[0].mxu0
      %v4836 = vadd.f32 0.0, %v4835
      %v4837 = vpop.f32.mrb[0].mxu0
      %4838 = vmatprep.mubr.bf16.mxu0 0
      %4839 = vmatmul.mubr.bf16.gmra.mrb[0].mxu0 %v4692
      %v4840 = vpop.f32.mrb[0].mxu0
      %v4841 = vadd.f32 0.0, %v4840
      %v4842 = vpop.f32.mrb[0].mxu0
      %v4843 = vpop.f32.mrb[0].mxu0
      %v4844 = vadd.f32 0.0, %v4843
      %v4845 = vpop.f32.mrb[0].mxu0
      %4846 = vmatprep.mubr.bf16.mxu0 0
      %4847 = vmatmul.mubr.bf16.gmra.mrb[0].mxu0 %v4695
      %v4848 = vpop.f32.mrb[0].mxu0
      %v4849 = vadd.f32 0.0, %v4848
      %v4850 = vpop.f32.mrb[0].mxu0
      %v4851 = vpop.f32.mrb[0].mxu0
      %v4852 = vadd.f32 0.0, %v4851
      %v4853 = vpop.f32.mrb[0].mxu0
      %4854 = vmatprep.mubr.bf16.mxu0 0
      %4855 = vmatmul.mubr.bf16.gmra.mrb[0].mxu0 %v4698
      %v4856 = vpop.f32.mrb[0].mxu0
      %v4857 = vadd.f32 0.0, %v4856
      %v4858 = vpop.f32.mrb[0].mxu0
      %v4859 = vpop.f32.mrb[0].mxu0
      %v4860 = vadd.f32 0.0, %v4859
      %v4861 = vpop.f32.mrb[0].mxu0
      %4862 = vmatprep.mubr.bf16.mxu0 0
      %4863 = vmatmul.mubr.bf16.gmra.mrb[0].mxu0 %v4701
      %v4864 = vpop.f32.mrb[0].mxu0
      %v4865 = vadd.f32 0.0, %v4864
      %v4866 = vpop.f32.mrb[0].mxu0
      %v4867 = vpop.f32.mrb[0].mxu0
      %v4868 = vadd.f32 0.0, %v4867
      %v4869 = vpop.f32.mrb[0].mxu0
      %4870 = vmatprep.mubr.bf16.mxu0 0
      %4871 = vmatmul.mubr.bf16.gmra.mrb[0].mxu0 %v4704
      %v4872 = vpop.f32.mrb[0].mxu0
      %v4873 = vadd.f32 0.0, %v4872
      %v4874 = vpop.f32.mrb[0].mxu0
      %v4875 = vpop.f32.mrb[0].mxu0
      %v4876 = vadd.f32 0.0, %v4875
      %v4877 = vpop.f32.mrb[0].mxu0
      %4878 = vmatprep.mubr.bf16.mxu0 0
      %4879 = vmatmul.mubr.bf16.gmra.mrb[0].mxu0 %v4707
      %v4880 = vpop.f32.mrb[0].mxu0
      %v4881 = vadd.f32 0.0, %v4880
      %v4882 = vpop.f32.mrb[0].mxu0
      %v4883 = vpop.f32.mrb[0].mxu0
      %v4884 = vadd.f32 0.0, %v4883
      %v4885 = vpop.f32.mrb[0].mxu0
      %4886 = vmatprep.mubr.bf16.mxu0 0
      %4887 = vmatmul.mubr.bf16.gmra.mrb[0].mxu0 %v4710
      %v4888 = vpop.f32.mrb[0].mxu0
      %v4889 = vadd.f32 0.0, %v4888
      %v4890 = vpop.f32.mrb[0].mxu0
      %v4891 = vpop.f32.mrb[0].mxu0
      %v4892 = vadd.f32 0.0, %v4891
      %v4893 = vpop.f32.mrb[0].mxu0
      %4894 = vmatprep.mubr.bf16.mxu0 0
      %4895 = vmatmul.mubr.bf16.gmra.mrb[0].mxu0 %v4713
      %v4896 = vpop.f32.mrb[0].mxu0
      %v4897 = vadd.f32 0.0, %v4896
      %v4898 = vpop.f32.mrb[0].mxu0
      %v4899 = vpop.f32.mrb[0].mxu0
      %v4900 = vadd.f32 0.0, %v4899
      %v4901 = vpop.f32.mrb[0].mxu0
      %4902 = vmatprep.mubr.bf16.mxu0 0
      %4903 = vmatmul.mubr.bf16.gmra.mrb[0].mxu0 %v4716
      %v4904 = vpop.f32.mrb[0].mxu0
      %v4905 = vadd.f32 0.0, %v4904
      %v4906 = vpop.f32.mrb[0].mxu0
      %v4907 = vpop.f32.mrb[0].mxu0
      %v4908 = vadd.f32 0.0, %v4907
      %v4909 = vpop.f32.mrb[0].mxu0
      %4910 = vmatprep.mubr.bf16.mxu0 0
      %4911 = vmatmul.mubr.bf16.gmra.mrb[0].mxu0 %v4719
      %v4912 = vpop.f32.mrb[0].mxu0
      %v4913 = vadd.f32 0.0, %v4912
      %v4914 = vpop.f32.mrb[0].mxu0
      %v4915 = vpop.f32.mrb[0].mxu0
      %v4916 = vadd.f32 0.0, %v4915
      %v4917 = vpop.f32.mrb[0].mxu0
      %4918 = vmatprep.mubr.bf16.mxu0 0
      %4919 = vmatmul.mubr.bf16.gmra.mrb[0].mxu0 %v4722
      %v4920 = vpop.f32.mrb[0].mxu0
      %v4921 = vadd.f32 0.0, %v4920
      %v4922 = vpop.f32.mrb[0].mxu0
      %v4923 = vpop.f32.mrb[0].mxu0
      %v4924 = vadd.f32 0.0, %v4923
      %v4925 = vpop.f32.mrb[0].mxu0
      %4926 = vmatprep.mubr.bf16.mxu0 0
      %4927 = vmatmul.mubr.bf16.gmra.mrb[0].mxu0 %v4725
      %v4928 = vpop.f32.mrb[0].mxu0
      %v4929 = vadd.f32 0.0, %v4928
      %v4930 = vpop.f32.mrb[0].mxu0
      %v4931 = vpop.f32.mrb[0].mxu0
      %v4932 = vadd.f32 0.0, %v4931
      %v4933 = vpop.f32.mrb[0].mxu0
      %4934 = vmatprep.mubr.bf16.mxu0 0
      %4935 = vmatmul.mubr.bf16.gmra.mrb[0].mxu0 %v4728
      %v4936 = vpop.f32.mrb[0].mxu0
      %v4937 = vadd.f32 0.0, %v4936
      %v4938 = vpop.f32.mrb[0].mxu0
      %v4939 = vpop.f32.mrb[0].mxu0
      %v4940 = vadd.f32 0.0, %v4939
      %v4941 = vpop.f32.mrb[0].mxu0
      %4942 = vmatprep.mubr.bf16.mxu0 0
      %4943 = vmatmul.mubr.bf16.gmra.mrb[0].mxu0 %v4731
      %v4944 = vpop.f32.mrb[0].mxu0
      %v4945 = vadd.f32 0.0, %v4944
      %v4946 = vpop.f32.mrb[0].mxu0
      %v4947 = vpop.f32.mrb[0].mxu0
      %v4948 = vadd.f32 0.0, %v4947
      %v4949 = vpop.f32.mrb[0].mxu0
      %4950 = vmatprep.mubr.bf16.mxu0 0
      %4951 = vmatmul.mubr.bf16.gmra.mrb[0].mxu0 %v4734
      %v4952 = vpop.f32.mrb[0].mxu0
      %v4953 = vadd.f32 0.0, %v4952
      %v4954 = vpop.f32.mrb[0].mxu0
      %v4955 = vpop.f32.mrb[0].mxu0
      %v4956 = vadd.f32 0.0, %v4955
      %v4957 = vpop.f32.mrb[0].mxu0
      %4958 = vmatprep.mubr.bf16.mxu0 0
      %4959 = vmatmul.mubr.bf16.gmra.mrb[0].mxu0 %v4737
      %v4960 = vpop.f32.mrb[0].mxu0
      %v4961 = vadd.f32 0.0, %v4960
      %v4962 = vpop.f32.mrb[0].mxu0
      %v4963 = vpop.f32.mrb[0].mxu0
      %v4964 = vadd.f32 0.0, %v4963
      %v4965 = vpop.f32.mrb[0].mxu0
      %4966 = vmatprep.mubr.bf16.mxu0 0
      %4967 = vmatmul.mubr.bf16.gmra.mrb[0].mxu0 %v4740
      %v4968 = vpop.f32.mrb[0].mxu0
      %v4969 = vadd.f32 0.0, %v4968
      %v4970 = vpop.f32.mrb[0].mxu0
      %v4971 = vpop.f32.mrb[0].mxu0
      %v4972 = vadd.f32 0.0, %v4971
      %v4973 = vpop.f32.mrb[0].mxu0
      %4974 = vmatprep.mubr.bf16.mxu0 0
      %4975 = vmatmul.mubr.bf16.gmra.mrb[0].mxu0 %v4743
      %v4976 = vpop.f32.mrb[0].mxu0
      %v4977 = vadd.f32 0.0, %v4976
      %v4978 = vpop.f32.mrb[0].mxu0
      %v4979 = vpop.f32.mrb[0].mxu0
      %v4980 = vadd.f32 0.0, %v4979
      %v4981 = vpop.f32.mrb[0].mxu0
      %4982 = vmatprep.mubr.bf16.mxu0 0
      %4983 = vmatmul.mubr.bf16.gmra.mrb[0].mxu0 %v4746
      %v4984 = vpop.f32.mrb[0].mxu0
      %v4985 = vadd.f32 0.0, %v4984
      %v4986 = vpop.f32.mrb[0].mxu0
      %v4987 = vpop.f32.mrb[0].mxu0
      %v4988 = vadd.f32 0.0, %v4987
      %v4989 = vpop.f32.mrb[0].mxu0
      %4990 = vmatprep.mubr.bf16.mxu0 0
      %4991 = vmatmul.mubr.bf16.gmra.mrb[0].mxu0 %v4749
      %v4992 = vpop.f32.mrb[0].mxu0
      %v4993 = vadd.f32 0.0, %v4992
      %v4994 = vpop.f32.mrb[0].mxu0
      %v4995 = vpop.f32.mrb[0].mxu0
      %v4996 = vadd.f32 0.0, %v4995
      %v4997 = vpop.f32.mrb[0].mxu0
      %4998 = vmatprep.mubr.bf16.mxu0 0
      %4999 = vmatmul.mubr.bf16.gmra.mrb[0].mxu0 %v4752
      %v5000 = vpop.f32.mrb[0].mxu0
      %v5001 = vadd.f32 0.0, %v5000
      %v5002 = vpop.f32.mrb[0].mxu0
      %v5003 = vpop.f32.mrb[0].mxu0
      %v5004 = vadd.f32 0.0, %v5003
      %v5005 = vpop.f32.mrb[0].mxu0
      %5006 = vmatprep.mubr.bf16.mxu0 0
      %5007 = vmatmul.mubr.bf16.gmra.mrb[0].mxu0 %v4755
      %v5008 = vpop.f32.mrb[0].mxu0
      %v5009 = vadd.f32 0.0, %v5008
      %v5010 = vpop.f32.mrb[0].mxu0
      %v5011 = vpop.f32.mrb[0].mxu0
      %v5012 = vadd.f32 0.0, %v5011
      %v5013 = vpop.f32.mrb[0].mxu0
      %5014 = vmatprep.mubr.bf16.mxu0 0
      %5015 = vmatmul.mubr.bf16.gmra.mrb[0].mxu0 %v4758
      %v5016 = vpop.f32.mrb[0].mxu0
      %v5017 = vadd.f32 0.0, %v5016
      %v5018 = vpop.f32.mrb[0].mxu0
      %v5019 = vpop.f32.mrb[0].mxu0
      %v5020 = vadd.f32 0.0, %v5019
      %v5021 = vpop.f32.mrb[0].mxu0
      %5022 = vmatprep.mubr.bf16.mxu0 0
      %5023 = vmatmul.mubr.bf16.gmra.mrb[0].mxu0 %v4761
      %v5024 = vpop.f32.mrb[0].mxu0
      %v5025 = vadd.f32 0.0, %v5024
      %v5026 = vpop.f32.mrb[0].mxu0
      %v5027 = vpop.f32.mrb[0].mxu0
      %v5028 = vadd.f32 0.0, %v5027
      %v5029 = vpop.f32.mrb[0].mxu0
      %5030 = vmatprep.mubr.bf16.mxu0 0
      %5031 = vmatmul.mubr.bf16.gmra.mrb[0].mxu0 %v4764
      %v5032 = vpop.f32.mrb[0].mxu0
      %v5033 = vadd.f32 0.0, %v5032
      %v5034 = vpop.f32.mrb[0].mxu0
      %v5035 = vpop.f32.mrb[0].mxu0
      %v5036 = vadd.f32 0.0, %v5035
      %v5037 = vpop.f32.mrb[0].mxu0
      %5038 = vdwg.mxu0
      %v5039 = vadd.f32 %v3202, %v4801
      %v5040 = vadd.f32 %v3205, %v4804
      %v5041 = vadd.f32 %v3210, %v4809
      %v5042 = vadd.f32 %v3213, %v4812
      %v5043 = vadd.f32 %v3218, %v4817
      %v5044 = vadd.f32 %v3221, %v4820
      %v5045 = vadd.f32 %v3226, %v4825
      %v5046 = vadd.f32 %v3229, %v4828
      %v5047 = vadd.f32 %v3234, %v4833
      %v5048 = vadd.f32 %v3237, %v4836
      %v5049 = vadd.f32 %v3242, %v4841
      %v5050 = vadd.f32 %v3245, %v4844
      %v5051 = vadd.f32 %v3250, %v4849
      %v5052 = vadd.f32 %v3253, %v4852
      %v5053 = vadd.f32 %v3258, %v4857
      %v5054 = vadd.f32 %v3261, %v4860
      %v5055 = vadd.f32 %v3266, %v4865
      %v5056 = vadd.f32 %v3269, %v4868
      %v5057 = vadd.f32 %v3274, %v4873
      %v5058 = vadd.f32 %v3277, %v4876
      %v5059 = vadd.f32 %v3282, %v4881
      %v5060 = vadd.f32 %v3285, %v4884
      %v5061 = vadd.f32 %v3290, %v4889
      %v5062 = vadd.f32 %v3293, %v4892
      %v5063 = vadd.f32 %v3298, %v4897
      %v5064 = vadd.f32 %v3301, %v4900
      %v5065 = vadd.f32 %v3306, %v4905
      %v5066 = vadd.f32 %v3309, %v4908
      %v5067 = vadd.f32 %v3314, %v4913
      %v5068 = vadd.f32 %v3317, %v4916
      %v5069 = vadd.f32 %v3322, %v4921
      %v5070 = vadd.f32 %v3325, %v4924
      %v5071 = vadd.f32 %v3330, %v4929
      %v5072 = vadd.f32 %v3333, %v4932
      %v5073 = vadd.f32 %v3338, %v4937
      %v5074 = vadd.f32 %v3341, %v4940
      %v5075 = vadd.f32 %v3346, %v4945
      %v5076 = vadd.f32 %v3349, %v4948
      %v5077 = vadd.f32 %v3354, %v4953
      %v5078 = vadd.f32 %v3357, %v4956
      %v5079 = vadd.f32 %v3362, %v4961
      %v5080 = vadd.f32 %v3365, %v4964
      %v5081 = vadd.f32 %v3370, %v4969
      %v5082 = vadd.f32 %v3373, %v4972
      %v5083 = vadd.f32 %v3378, %v4977
      %v5084 = vadd.f32 %v3381, %v4980
      %v5085 = vadd.f32 %v3386, %v4985
      %v5086 = vadd.f32 %v3389, %v4988
      %v5087 = vadd.f32 %v3394, %v4993
      %v5088 = vadd.f32 %v3397, %v4996
      %v5089 = vadd.f32 %v3402, %v5001
      %v5090 = vadd.f32 %v3405, %v5004
      %v5091 = vadd.f32 %v3410, %v5009
      %v5092 = vadd.f32 %v3413, %v5012
      %v5093 = vadd.f32 %v3418, %v5017
      %v5094 = vadd.f32 %v3421, %v5020
      %v5095 = vadd.f32 %v3426, %v5025
      %v5096 = vadd.f32 %v3429, %v5028
      %v5097 = vadd.f32 %v3434, %v5033
      %v5098 = vadd.f32 %v3437, %v5036
      %v5099 = vld [vmem:[%s3] sm:$0x1]
      %v5101 = vlaneseq
      %v5102 = vshrl.u32 %v5101, 7
      %v5103 = vsub.s32 0, %v5102
      %v5104 = vrot.slane %v5099, %v5103
      %v5106 = vadd.f32 %v5039, %v5104
      %v5107 = vadd.f32 %v5040, %v5104
      %v5108 = vadd.f32 %v5041, %v5104
      %v5109 = vadd.f32 %v5042, %v5104
      %v5110 = vadd.f32 %v5043, %v5104
      %v5111 = vadd.f32 %v5044, %v5104
      %v5112 = vadd.f32 %v5045, %v5104
      %v5113 = vadd.f32 %v5046, %v5104
      %v5114 = vadd.f32 %v5047, %v5104
      %v5115 = vadd.f32 %v5048, %v5104
      %v5116 = vadd.f32 %v5049, %v5104
      %v5117 = vadd.f32 %v5050, %v5104
      %v5118 = vadd.f32 %v5051, %v5104
      %v5119 = vadd.f32 %v5052, %v5104
      %v5120 = vadd.f32 %v5053, %v5104
      %v5121 = vadd.f32 %v5054, %v5104
      %v5122 = vadd.f32 %v5055, %v5104
      %v5123 = vadd.f32 %v5056, %v5104
      %v5124 = vadd.f32 %v5057, %v5104
      %v5125 = vadd.f32 %v5058, %v5104
      %v5126 = vadd.f32 %v5059, %v5104
      %v5127 = vadd.f32 %v5060, %v5104
      %v5128 = vadd.f32 %v5061, %v5104
      %v5129 = vadd.f32 %v5062, %v5104
      %v5130 = vadd.f32 %v5063, %v5104
      %v5131 = vadd.f32 %v5064, %v5104
      %v5132 = vadd.f32 %v5065, %v5104
      %v5133 = vadd.f32 %v5066, %v5104
      %v5134 = vadd.f32 %v5067, %v5104
      %v5135 = vadd.f32 %v5068, %v5104
      %v5136 = vadd.f32 %v5069, %v5104
      %v5137 = vadd.f32 %v5070, %v5104
      %v5138 = vadd.f32 %v5071, %v5104
      %v5139 = vadd.f32 %v5072, %v5104
      %v5140 = vadd.f32 %v5073, %v5104
      %v5141 = vadd.f32 %v5074, %v5104
      %v5142 = vadd.f32 %v5075, %v5104
      %v5143 = vadd.f32 %v5076, %v5104
      %v5144 = vadd.f32 %v5077, %v5104
      %v5145 = vadd.f32 %v5078, %v5104
      %v5146 = vadd.f32 %v5079, %v5104
      %v5147 = vadd.f32 %v5080, %v5104
      %v5148 = vadd.f32 %v5081, %v5104
      %v5149 = vadd.f32 %v5082, %v5104
      %v5150 = vadd.f32 %v5083, %v5104
      %v5151 = vadd.f32 %v5084, %v5104
      %v5152 = vadd.f32 %v5085, %v5104
      %v5153 = vadd.f32 %v5086, %v5104
      %v5154 = vadd.f32 %v5087, %v5104
      %v5155 = vadd.f32 %v5088, %v5104
      %v5156 = vadd.f32 %v5089, %v5104
      %v5157 = vadd.f32 %v5090, %v5104
      %v5158 = vadd.f32 %v5091, %v5104
      %v5159 = vadd.f32 %v5092, %v5104
      %v5160 = vadd.f32 %v5093, %v5104
      %v5161 = vadd.f32 %v5094, %v5104
      %v5162 = vadd.f32 %v5095, %v5104
      %v5163 = vadd.f32 %v5096, %v5104
      %v5164 = vadd.f32 %v5097, %v5104
      %v5165 = vadd.f32 %v5098, %v5104
      %vm5166 = vcmask 195584
      %5167 = vst.msk [vmem:[%s236] sm:$0xff] %vm5166, %v5106
      %5168 = vst.msk [vmem:[%s236 + $0x8] sm:$0xff] %vm5166, %v5107
      %5169 = vst.msk [vmem:[%s236 + $0x10] sm:$0xff] %vm5166, %v5108
      %5170 = vst.msk [vmem:[%s236 + $0x18] sm:$0xff] %vm5166, %v5109
      %5171 = vst.msk [vmem:[%s236 + $0x20] sm:$0xff] %vm5166, %v5110
      %5172 = vst.msk [vmem:[%s236 + $0x28] sm:$0xff] %vm5166, %v5111
      %5173 = vst.msk [vmem:[%s236 + $0x30] sm:$0xff] %vm5166, %v5112
      %5174 = vst.msk [vmem:[%s236 + $0x38] sm:$0xff] %vm5166, %v5113
      %5175 = vst.msk [vmem:[%s236 + $0x40] sm:$0xff] %vm5166, %v5114
      %5176 = vst.msk [vmem:[%s236 + $0x48] sm:$0xff] %vm5166, %v5115
      %5177 = vst.msk [vmem:[%s236 + $0x50] sm:$0xff] %vm5166, %v5116
      %5178 = vst.msk [vmem:[%s236 + $0x58] sm:$0xff] %vm5166, %v5117
      %5179 = vst.msk [vmem:[%s236 + $0x60] sm:$0xff] %vm5166, %v5118
      %5180 = vst.msk [vmem:[%s236 + $0x68] sm:$0xff] %vm5166, %v5119
      %5181 = vst.msk [vmem:[%s236 + $0x70] sm:$0xff] %vm5166, %v5120
      %5182 = vst.msk [vmem:[%s236 + $0x78] sm:$0xff] %vm5166, %v5121
      %5183 = vst.msk [vmem:[%s236 + $0x80] sm:$0xff] %vm5166, %v5122
      %5184 = vst.msk [vmem:[%s236 + $0x88] sm:$0xff] %vm5166, %v5123
      %5185 = vst.msk [vmem:[%s236 + $0x90] sm:$0xff] %vm5166, %v5124
      %5186 = vst.msk [vmem:[%s236 + $0x98] sm:$0xff] %vm5166, %v5125
      %5187 = vst.msk [vmem:[%s236 + $0xa0] sm:$0xff] %vm5166, %v5126
      %5188 = vst.msk [vmem:[%s236 + $0xa8] sm:$0xff] %vm5166, %v5127
      %5189 = vst.msk [vmem:[%s236 + $0xb0] sm:$0xff] %vm5166, %v5128
      %5190 = vst.msk [vmem:[%s236 + $0xb8] sm:$0xff] %vm5166, %v5129
      %5191 = vst.msk [vmem:[%s236 + $0xc0] sm:$0xff] %vm5166, %v5130
      %5192 = vst.msk [vmem:[%s236 + $0xc8] sm:$0xff] %vm5166, %v5131
      %5193 = vst.msk [vmem:[%s236 + $0xd0] sm:$0xff] %vm5166, %v5132
      %5194 = vst.msk [vmem:[%s236 + $0xd8] sm:$0xff] %vm5166, %v5133
      %5195 = vst.msk [vmem:[%s236 + $0xe0] sm:$0xff] %vm5166, %v5134
      %5196 = vst.msk [vmem:[%s236 + $0xe8] sm:$0xff] %vm5166, %v5135
      %5197 = vst.msk [vmem:[%s236 + $0xf0] sm:$0xff] %vm5166, %v5136
      %5198 = vst.msk [vmem:[%s236 + $0xf8] sm:$0xff] %vm5166, %v5137
      %5199 = vst.msk [vmem:[%s236 + $0x100] sm:$0xff] %vm5166, %v5138
      %5200 = vst.msk [vmem:[%s236 + $0x108] sm:$0xff] %vm5166, %v5139
      %5201 = vst.msk [vmem:[%s236 + $0x110] sm:$0xff] %vm5166, %v5140
      %5202 = vst.msk [vmem:[%s236 + $0x118] sm:$0xff] %vm5166, %v5141
      %5203 = vst.msk [vmem:[%s236 + $0x120] sm:$0xff] %vm5166, %v5142
      %5204 = vst.msk [vmem:[%s236 + $0x128] sm:$0xff] %vm5166, %v5143
      %5205 = vst.msk [vmem:[%s236 + $0x130] sm:$0xff] %vm5166, %v5144
      %5206 = vst.msk [vmem:[%s236 + $0x138] sm:$0xff] %vm5166, %v5145
      %5207 = vst.msk [vmem:[%s236 + $0x140] sm:$0xff] %vm5166, %v5146
      %5208 = vst.msk [vmem:[%s236 + $0x148] sm:$0xff] %vm5166, %v5147
      %5209 = vst.msk [vmem:[%s236 + $0x150] sm:$0xff] %vm5166, %v5148
      %5210 = vst.msk [vmem:[%s236 + $0x158] sm:$0xff] %vm5166, %v5149
      %5211 = vst.msk [vmem:[%s236 + $0x160] sm:$0xff] %vm5166, %v5150
      %5212 = vst.msk [vmem:[%s236 + $0x168] sm:$0xff] %vm5166, %v5151
      %5213 = vst.msk [vmem:[%s236 + $0x170] sm:$0xff] %vm5166, %v5152
      %5214 = vst.msk [vmem:[%s236 + $0x178] sm:$0xff] %vm5166, %v5153
      %5215 = vst.msk [vmem:[%s236 + $0x180] sm:$0xff] %vm5166, %v5154
      %5216 = vst.msk [vmem:[%s236 + $0x188] sm:$0xff] %vm5166, %v5155
      %5217 = vst.msk [vmem:[%s236 + $0x190] sm:$0xff] %vm5166, %v5156
      %5218 = vst.msk [vmem:[%s236 + $0x198] sm:$0xff] %vm5166, %v5157
      %5219 = vst.msk [vmem:[%s236 + $0x1a0] sm:$0xff] %vm5166, %v5158
      %5220 = vst.msk [vmem:[%s236 + $0x1a8] sm:$0xff] %vm5166, %v5159
      %5221 = vst.msk [vmem:[%s236 + $0x1b0] sm:$0xff] %vm5166, %v5160
      %5222 = vst.msk [vmem:[%s236 + $0x1b8] sm:$0xff] %vm5166, %v5161
      %5223 = vst.msk [vmem:[%s236 + $0x1c0] sm:$0xff] %vm5166, %v5162
      %5224 = vst.msk [vmem:[%s236 + $0x1c8] sm:$0xff] %vm5166, %v5163
      %5225 = vst.msk [vmem:[%s236 + $0x1d0] sm:$0xff] %vm5166, %v5164
      %5226 = vst.msk [vmem:[%s236 + $0x1d8] sm:$0xff] %vm5166, %v5165
      %s5227 = smul.u32 20, %s21
      %p5228 = scmp.lt.s32.totalorder %s20, 1
      %s5229 = scalar_select %p5228, %s20, 1
      %p5230 = scmp.lt.s32.totalorder %s5227, 39
      %s5231 = scalar_select %p5230, %s5227, 39
      %s5232 = smul.addr %s5231, 3
      %s5233 = smul.addr %s5229, 120
      %s5234 = sadd.s32 %s5232, %s5233
      %s5235 = smul.addr %s5234, 8
      %s5236 = scalar_lea.vmem %s4, %s5235
      // Predicated region
      $region37: #{tpu_custom_call.1} parent=35 // pred_check
        %p5237 = pneg %p139
      $region38: #{tpu_custom_call.1} parent=35 // pred_check_branch
        %5239 = sbr.rel (%p5237) target = $region40
      $region39: #{tpu_custom_call.1} parent=35 // pred_region
        %s5240 = smul.u32 20, %s21
      $region40: #{tpu_custom_call.1} parent=35 // pred_fallthru
        _
    $region36: #{tpu_custom_call.1} parent=5 // pred_fallthru
      _
    %p5241 = scmp.le.s32.totalorder 2, %s11
    // Predicated region
    $region41: #{tpu_custom_call.1} parent=5 // pred_check
      %p5242 = pneg %p5241
    $region42: #{tpu_custom_call.1} parent=5 // pred_check_branch
      %5244 = sbr.rel (%p5242) target = $region44
    $region43: #{tpu_custom_call.1} parent=5 // pred_region
      %s5245 = ssub.s32 %s11, 2
      // Predicated region
      $region45: #{tpu_custom_call.1} parent=43 // pred_check
        %p5246 = pneg %p145
      $region46: #{tpu_custom_call.1} parent=43 // pred_check_branch
        %5248 = sbr.rel (%p5246) target = $region48
      $region47: #{tpu_custom_call.1} parent=43 // pred_region
        %s5249 = smul.u32 20, %s23
        %p5250 = scmp.lt.s32.totalorder %s22, 1
        %s5251 = scalar_select %p5250, %s22, 1
        %p5252 = scmp.lt.s32.totalorder %s5249, 39
        %s5253 = scalar_select %p5252, %s5249, 39
        %s5254 = smul.addr %s5253, 3
        %s5255 = smul.addr %s5251, 120
        %s5256 = sadd.s32 %s5254, %s5255
        %s5257 = smul.addr %s5256, 8
        %s5258 = scalar_lea.vmem %s4, %s5257
      $region48: #{tpu_custom_call.1} parent=43 // pred_fallthru
        _
    $region44: #{tpu_custom_call.1} parent=5 // pred_fallthru
      _
  $region6: #{tpu_custom_call.1} parent=0 // loop_footer
    %s15 = sadd.s32 1, %s11
  $region7: #{tpu_custom_call.1} parent=0 // loop_footer_branch
    %10 = sbr.rel target = $region3
  $region8: #{tpu_custom_call.1} parent=0 // loop_exit
    _

</llo_original>
